<compile_context>
chip_gen: v5e
topology: v5e:2x2
jax: 0.10.0
libtpu: 0.0.40
codegen_flags: <defaults>
</compile_context>

<pallas_src>
import jax
import jax.numpy as jnp
from jax.experimental import pallas as pl
from jax.experimental.pallas import tpu as pltpu


NEG_SLOPE = 0.01          # F.leaky_relu default negative_slope
MAX_LANE_COLS = 16384     # cap on pixels-per-step (lane tile * images per step)


def _leaky_relu(x):
    # Valid for 0 < slope < 1; a single vmax instead of cmp+select.
    return jnp.maximum(x, NEG_SLOPE * x)


def projection_kernel(x_ref, w1_ref, b1_ref, w2_ref, b2_ref, w3_ref, b3_ref, o_ref):
    # x_ref: (nb, C, T)   w1/w2: (C, C)   w3: (P, C)   b1/b2: (C, 1)   b3: (P, 1)
    # o_ref: (nb, P, T)   T = pixel tile on the lane axis, nb = images per step.
    dt = x_ref.dtype
    prec = (jax.lax.Precision.HIGHEST if dt == jnp.float32
            else jax.lax.Precision.DEFAULT)

    w1, b1 = w1_ref[...], b1_ref[...]
    w2, b2 = w2_ref[...], b2_ref[...]
    w3, b3 = w3_ref[...], b3_ref[...]

    nb = x_ref.shape[0]                       # static -> unrolled
    for b in range(nb):
        x = x_ref[b]                          # (C, T)
        h = jnp.dot(w1, x, preferred_element_type=jnp.float32, precision=prec)
        h = _leaky_relu(h + b1)
        h = jnp.dot(w2, h.astype(dt), preferred_element_type=jnp.float32, precision=prec)
        h = _leaky_relu(h + b2)
        h = jnp.dot(w3, h.astype(dt), preferred_element_type=jnp.float32, precision=prec)
        o_ref[b] = (h + b3).astype(o_ref.dtype)


def _tpu_caps():
    """Best-effort (VMEM bytes, #TensorCores-per-chip); conservative fallback."""
    vmem_bytes = 64 * 1024 * 1024   # v7x physical = smallest of the fleet
    num_cores = 1
    try:
        vmem_bytes = int(pltpu.get_tpu_info().vmem_capacity_bytes)
    except Exception:
        pass
    try:
        if "v7" in jax.devices()[0].device_kind.lower():
            num_cores = 2
    except Exception:
        pass
    return vmem_bytes, num_cores


def _largest_divisor_leq(n, cap):
    cap = max(1, min(n, cap))
    for d in range(cap, 0, -1):
        if n % d == 0:
            return d
    return 1


def _choose_tiling(N, HW, C, P, dtype, vmem_limit_bytes, num_cores, nb_cap=8):
    """Pick (images_per_step, pixel_tile) sized from VMEM, generation-aware."""
    ebytes = jnp.dtype(dtype).itemsize
    # Double-buffered in+out tiles + f32 intermediates, per pixel column per image.
    bytes_per_col = 2 * (C + P) * ebytes + (2 * C + P) * 4
    budget = int(vmem_limit_bytes * 0.40)
    max_cols = max(128, budget // max(1, bytes_per_col))
    max_cols = min(max_cols, MAX_LANE_COLS)

    if HW > max_cols:
        # Large images: one image per step, big lane-aligned pixel tile.
        nb = 1
        tile_hw = min(HW, max(128, (max_cols // 128) * 128))
    else:
        # Small images: whole image(s) per step; pack several per step.
        tile_hw = HW
        nb = _largest_divisor_leq(N, min(nb_cap, max(1, max_cols // max(1, HW))))
        if num_cores > 1:
            # Keep >= 2 steps per core when possible so both v7x cores pipeline.
            min_steps = 2 * num_cores
            while nb > 1 and (N // nb) * pl.cdiv(HW, tile_hw) < min_steps:
                nb = _largest_divisor_leq(N, nb - 1)
            if (N // nb) * pl.cdiv(HW, tile_hw) < num_cores and HW > 128:
                tile_hw = max(128, ((HW + 2 * 128 - 1) // (2 * 128)) * 128)
    return nb, tile_hw


def projection_v1(x_nchw, params, *, tile_hw=None, images_per_step=None):
    """Apply ProjectionV1 to an NCHW input with one fused Pallas kernel."""
    w1, b1, w2, b2, w3, b3 = params
    N, C, H, W = x_nchw.shape
    P = w3.shape[0]
    HW = H * W

    x_flat = x_nchw.reshape(N, C, HW)   # metadata-only reshape

    vmem_bytes, num_cores = _tpu_caps()
    # Raise the scoped-VMEM limit with the tile size; leave headroom for the
    # compiler (v7x: 48 MiB of 64; v5e/v6e: 96 MiB of 128).
    vmem_limit = max(32 * 1024 * 1024, (vmem_bytes * 3) // 4)

    nb_auto, tile_auto = _choose_tiling(N, HW, C, P, x_nchw.dtype,
                                        vmem_limit, num_cores)
    nb = images_per_step if images_per_step is not None else nb_auto
    thw = tile_hw if tile_hw is not None else tile_auto
    nb = _largest_divisor_leq(N, nb)

    grid = (N // nb, pl.cdiv(HW, thw))

    out_flat = pl.pallas_call(
        projection_kernel,
        out_shape=jax.ShapeDtypeStruct((N, P, HW), x_nchw.dtype),
        grid_spec=pltpu.PrefetchScalarGridSpec(
            num_scalar_prefetch=0,
            grid=grid,
            in_specs=[
                # input: nb images, channels on sublanes, pixels lane-dense.
                pl.BlockSpec((nb, C, thw), lambda n, j: (n, 0, j)),
                pl.BlockSpec((C, C), lambda n, j: (0, 0)),   # w1 (out, in)
                pl.BlockSpec((C, 1), lambda n, j: (0, 0)),   # b1
                pl.BlockSpec((C, C), lambda n, j: (0, 0)),   # w2
                pl.BlockSpec((C, 1), lambda n, j: (0, 0)),   # b2
                pl.BlockSpec((P, C), lambda n, j: (0, 0)),   # w3
                pl.BlockSpec((P, 1), lambda n, j: (0, 0)),   # b3
            ],
            out_specs=pl.BlockSpec((nb, P, thw), lambda n, j: (n, 0, j)),
        ),
        compiler_params=pltpu.CompilerParams(
            dimension_semantics=("parallel", "parallel"),
            vmem_limit_bytes=int(vmem_limit),
        ),
    )(x_flat, w1, b1, w2, b2, w3, b3)

    return out_flat.reshape(N, P, H, W)   # metadata-only reshape back


def init_params(key, base_channels, proj_dim, dtype=jnp.float32):
    """Weights in PyTorch conv (out, in) layout; biases as (out, 1) columns."""
    k1, k2, k3, k4, k5, k6 = jax.random.split(key, 6)
    s = 1.0 / jnp.sqrt(base_channels)
    w1 = jax.random.uniform(k1, (base_channels, base_channels), dtype, -s, s)
    b1 = jax.random.uniform(k2, (base_channels, 1), dtype, -s, s)
    w2 = jax.random.uniform(k3, (base_channels, base_channels), dtype, -s, s)
    b2 = jax.random.uniform(k4, (base_channels, 1), dtype, -s, s)
    w3 = jax.random.uniform(k5, (proj_dim, base_channels), dtype, -s, s)
    b3 = jax.random.uniform(k6, (proj_dim, 1), dtype, -s, s)
    return (w1, b1, w2, b2, w3, b3)


def reference(x_nchw, params):
    """Plain-JAX reference of the PyTorch forward (NCHW in / NCHW out)."""
    w1, b1, w2, b2, w3, b3 = params

    def conv1x1(h, w, b):
        y = jnp.einsum("oi,nihw->nohw", w, h,
                       precision=jax.lax.Precision.HIGHEST)
        return y + b.reshape(1, -1, 1, 1)

    h = _leaky_relu(conv1x1(x_nchw, w1, b1))
    h = _leaky_relu(conv1x1(h, w2, b2))
    return conv1x1(h, w3, b3)


if __name__ == "__main__":
    key = jax.random.PRNGKey(0)
    kx, kp = jax.random.split(key)

    N, C, H, W = 2, 32, 16, 16   # base_channels=32
    proj_dim = 16

    x = jax.random.normal(kx, (N, C, H, W), dtype=jnp.float32)
    params = init_params(kp, C, proj_dim)

    out = projection_v1(x, params)
    out = jax.block_until_ready(out)

    ref = reference(x, params)
    assert out.shape == (N, proj_dim, H, W)
    assert jnp.allclose(out, ref, atol=1e-4, rtol=1e-4), "mismatch vs reference"

    print("KERNEL_OK")
</pallas_src>

<mosaic_0001>
module attributes {stable_mosaic.version = 11 : i64} {
  func.func @projection_kernel(%arg0: i32, %arg1: i32, %arg2: memref<2x32x256xf32, #tpu.memory_space<vmem>>, %arg3: memref<32x32xf32, #tpu.memory_space<vmem>>, %arg4: memref<32x1xf32, #tpu.memory_space<vmem>>, %arg5: memref<32x32xf32, #tpu.memory_space<vmem>>, %arg6: memref<32x1xf32, #tpu.memory_space<vmem>>, %arg7: memref<16x32xf32, #tpu.memory_space<vmem>>, %arg8: memref<16x1xf32, #tpu.memory_space<vmem>>, %arg9: memref<2x16x256xf32, #tpu.memory_space<vmem>>) attributes {dimension_semantics = [#tpu.dimension_semantics<parallel>, #tpu.dimension_semantics<parallel>], iteration_bounds = array<i64: 1, 1>, scalar_prefetch = 0 : i64, scratch_operands = 0 : i64, tpu.core_type = #tpu.core_type<tc>, window_params = [{transform_indices = @transform_0, window_bounds = array<i64: 2, 32, 256>}, {pipeline_mode = #tpu.pipeline_mode<synchronous>, transform_indices = @transform_1, window_bounds = array<i64: 32, 32>}, {pipeline_mode = #tpu.pipeline_mode<synchronous>, transform_indices = @transform_2, window_bounds = array<i64: 32, 1>}, {pipeline_mode = #tpu.pipeline_mode<synchronous>, transform_indices = @transform_3, window_bounds = array<i64: 32, 32>}, {pipeline_mode = #tpu.pipeline_mode<synchronous>, transform_indices = @transform_4, window_bounds = array<i64: 32, 1>}, {pipeline_mode = #tpu.pipeline_mode<synchronous>, transform_indices = @transform_5, window_bounds = array<i64: 16, 32>}, {pipeline_mode = #tpu.pipeline_mode<synchronous>, transform_indices = @transform_6, window_bounds = array<i64: 16, 1>}, {transform_indices = @transform_7, window_bounds = array<i64: 2, 16, 256>}]} {
    %c0 = arith.constant 0 : index
    %c0_0 = arith.constant 0 : index
    %0 = vector.load %arg3[%c0, %c0_0] : memref<32x32xf32, #tpu.memory_space<vmem>>, vector<32x32xf32>
    %c0_1 = arith.constant 0 : index
    %c0_2 = arith.constant 0 : index
    %1 = vector.load %arg4[%c0_1, %c0_2] : memref<32x1xf32, #tpu.memory_space<vmem>>, vector<32x1xf32>
    %c0_3 = arith.constant 0 : index
    %c0_4 = arith.constant 0 : index
    %2 = vector.load %arg5[%c0_3, %c0_4] : memref<32x32xf32, #tpu.memory_space<vmem>>, vector<32x32xf32>
    %c0_5 = arith.constant 0 : index
    %c0_6 = arith.constant 0 : index
    %3 = vector.load %arg6[%c0_5, %c0_6] : memref<32x1xf32, #tpu.memory_space<vmem>>, vector<32x1xf32>
    %c0_7 = arith.constant 0 : index
    %c0_8 = arith.constant 0 : index
    %4 = vector.load %arg7[%c0_7, %c0_8] : memref<16x32xf32, #tpu.memory_space<vmem>>, vector<16x32xf32>
    %c0_9 = arith.constant 0 : index
    %c0_10 = arith.constant 0 : index
    %5 = vector.load %arg8[%c0_9, %c0_10] : memref<16x1xf32, #tpu.memory_space<vmem>>, vector<16x1xf32>
    %c0_11 = arith.constant 0 : index
    %c0_12 = arith.constant 0 : index
    %c0_13 = arith.constant 0 : index
    %6 = vector.load %arg2[%c0_11, %c0_12, %c0_13] : memref<2x32x256xf32, #tpu.memory_space<vmem>>, vector<1x32x256xf32>
    %7 = vector.shape_cast %6 : vector<1x32x256xf32> to vector<32x256xf32>
    %cst = arith.constant dense<0.000000e+00> : vector<32x256xf32>
    %8 = tpu.matmul %0, %7, %cst {dimension_numbers = #tpu.dot_dimension_numbers<[1], [0], [0], [1], [0, 0, 1, 1], [], []>, precision = #tpu.contract_precision<fp32>} : vector<32x32xf32>, vector<32x256xf32>, vector<32x256xf32> -> vector<32x256xf32>
    %9 = vector.broadcast %1 : vector<32x1xf32> to vector<32x256xf32>
    %10 = arith.addf %8, %9 : vector<32x256xf32>
    %cst_14 = arith.constant 0.00999999977 : f32
    %11 = vector.broadcast %cst_14 : f32 to vector<32x256xf32>
    %12 = arith.mulf %11, %10 : vector<32x256xf32>
    %13 = arith.maximumf %10, %12 : vector<32x256xf32>
    %cst_15 = arith.constant dense<0.000000e+00> : vector<32x256xf32>
    %14 = tpu.matmul %2, %13, %cst_15 {dimension_numbers = #tpu.dot_dimension_numbers<[1], [0], [0], [1], [0, 0, 1, 1], [], []>, precision = #tpu.contract_precision<fp32>} : vector<32x32xf32>, vector<32x256xf32>, vector<32x256xf32> -> vector<32x256xf32>
    %15 = vector.broadcast %3 : vector<32x1xf32> to vector<32x256xf32>
    %16 = arith.addf %14, %15 : vector<32x256xf32>
    %cst_16 = arith.constant 0.00999999977 : f32
    %17 = vector.broadcast %cst_16 : f32 to vector<32x256xf32>
    %18 = arith.mulf %17, %16 : vector<32x256xf32>
    %19 = arith.maximumf %16, %18 : vector<32x256xf32>
    %cst_17 = arith.constant dense<0.000000e+00> : vector<16x256xf32>
    %20 = tpu.matmul %4, %19, %cst_17 {dimension_numbers = #tpu.dot_dimension_numbers<[1], [0], [0], [1], [0, 0, 1, 1], [], []>, precision = #tpu.contract_precision<fp32>} : vector<16x32xf32>, vector<32x256xf32>, vector<16x256xf32> -> vector<16x256xf32>
    %21 = vector.broadcast %5 : vector<16x1xf32> to vector<16x256xf32>
    %22 = arith.addf %20, %21 : vector<16x256xf32>
    %c0_18 = arith.constant 0 : index
    %c0_19 = arith.constant 0 : index
    %c0_20 = arith.constant 0 : index
    %23 = vector.load %arg9[%c0_18, %c0_19, %c0_20] : memref<2x16x256xf32, #tpu.memory_space<vmem>>, vector<1x16x256xf32>
    %24 = vector.shape_cast %23 : vector<1x16x256xf32> to vector<16x256xf32>
    %25 = vector.shape_cast %22 : vector<16x256xf32> to vector<1x16x256xf32>
    tpu.vector_store %arg9[%c0_18, %c0_19, %c0_20], %25 {strides = array<i32>} : memref<2x16x256xf32, #tpu.memory_space<vmem>>, vector<1x16x256xf32>,
    %c1 = arith.constant 1 : index
    %c0_21 = arith.constant 0 : index
    %c0_22 = arith.constant 0 : index
    %26 = vector.load %arg2[%c1, %c0_21, %c0_22] : memref<2x32x256xf32, #tpu.memory_space<vmem>>, vector<1x32x256xf32>
    %27 = vector.shape_cast %26 : vector<1x32x256xf32> to vector<32x256xf32>
    %cst_23 = arith.constant dense<0.000000e+00> : vector<32x256xf32>
    %28 = tpu.matmul %0, %27, %cst_23 {dimension_numbers = #tpu.dot_dimension_numbers<[1], [0], [0], [1], [0, 0, 1, 1], [], []>, precision = #tpu.contract_precision<fp32>} : vector<32x32xf32>, vector<32x256xf32>, vector<32x256xf32> -> vector<32x256xf32>
    %29 = vector.broadcast %1 : vector<32x1xf32> to vector<32x256xf32>
    %30 = arith.addf %28, %29 : vector<32x256xf32>
    %cst_24 = arith.constant 0.00999999977 : f32
    %31 = vector.broadcast %cst_24 : f32 to vector<32x256xf32>
    %32 = arith.mulf %31, %30 : vector<32x256xf32>
    %33 = arith.maximumf %30, %32 : vector<32x256xf32>
    %cst_25 = arith.constant dense<0.000000e+00> : vector<32x256xf32>
    %34 = tpu.matmul %2, %33, %cst_25 {dimension_numbers = #tpu.dot_dimension_numbers<[1], [0], [0], [1], [0, 0, 1, 1], [], []>, precision = #tpu.contract_precision<fp32>} : vector<32x32xf32>, vector<32x256xf32>, vector<32x256xf32> -> vector<32x256xf32>
    %35 = vector.broadcast %3 : vector<32x1xf32> to vector<32x256xf32>
    %36 = arith.addf %34, %35 : vector<32x256xf32>
    %cst_26 = arith.constant 0.00999999977 : f32
    %37 = vector.broadcast %cst_26 : f32 to vector<32x256xf32>
    %38 = arith.mulf %37, %36 : vector<32x256xf32>
    %39 = arith.maximumf %36, %38 : vector<32x256xf32>
    %cst_27 = arith.constant dense<0.000000e+00> : vector<16x256xf32>
    %40 = tpu.matmul %4, %39, %cst_27 {dimension_numbers = #tpu.dot_dimension_numbers<[1], [0], [0], [1], [0, 0, 1, 1], [], []>, precision = #tpu.contract_precision<fp32>} : vector<16x32xf32>, vector<32x256xf32>, vector<16x256xf32> -> vector<16x256xf32>
    %41 = vector.broadcast %5 : vector<16x1xf32> to vector<16x256xf32>
    %42 = arith.addf %40, %41 : vector<16x256xf32>
    %c1_28 = arith.constant 1 : index
    %c0_29 = arith.constant 0 : index
    %c0_30 = arith.constant 0 : index
    %43 = vector.load %arg9[%c1_28, %c0_29, %c0_30] : memref<2x16x256xf32, #tpu.memory_space<vmem>>, vector<1x16x256xf32>
    %44 = vector.shape_cast %43 : vector<1x16x256xf32> to vector<16x256xf32>
    %45 = vector.shape_cast %42 : vector<16x256xf32> to vector<1x16x256xf32>
    tpu.vector_store %arg9[%c1_28, %c0_29, %c0_30], %45 {strides = array<i32>} : memref<2x16x256xf32, #tpu.memory_space<vmem>>, vector<1x16x256xf32>,
    return
  }
  func.func @transform_0(%arg0: i32, %arg1: i32) -> (i32, i32, i32) {
    %c0_i32 = arith.constant 0 : i32
    %c0_i32_0 = arith.constant 0 : i32
    return %arg0, %c0_i32, %arg1 : i32, i32, i32
  }
  func.func @transform_1(%arg0: i32, %arg1: i32) -> (i32, i32) {
    %c0_i32 = arith.constant 0 : i32
    %c0_i32_0 = arith.constant 0 : i32
    %c0_i32_1 = arith.constant 0 : i32
    return %c0_i32, %c0_i32_0 : i32, i32
  }
  func.func @transform_2(%arg0: i32, %arg1: i32) -> (i32, i32) {
    %c0_i32 = arith.constant 0 : i32
    %c0_i32_0 = arith.constant 0 : i32
    %c0_i32_1 = arith.constant 0 : i32
    return %c0_i32, %c0_i32_0 : i32, i32
  }
  func.func @transform_3(%arg0: i32, %arg1: i32) -> (i32, i32) {
    %c0_i32 = arith.constant 0 : i32
    %c0_i32_0 = arith.constant 0 : i32
    %c0_i32_1 = arith.constant 0 : i32
    return %c0_i32, %c0_i32_0 : i32, i32
  }
  func.func @transform_4(%arg0: i32, %arg1: i32) -> (i32, i32) {
    %c0_i32 = arith.constant 0 : i32
    %c0_i32_0 = arith.constant 0 : i32
    %c0_i32_1 = arith.constant 0 : i32
    return %c0_i32, %c0_i32_0 : i32, i32
  }
  func.func @transform_5(%arg0: i32, %arg1: i32) -> (i32, i32) {
    %c0_i32 = arith.constant 0 : i32
    %c0_i32_0 = arith.constant 0 : i32
    %c0_i32_1 = arith.constant 0 : i32
    return %c0_i32, %c0_i32_0 : i32, i32
  }
  func.func @transform_6(%arg0: i32, %arg1: i32) -> (i32, i32) {
    %c0_i32 = arith.constant 0 : i32
    %c0_i32_0 = arith.constant 0 : i32
    %c0_i32_1 = arith.constant 0 : i32
    return %c0_i32, %c0_i32_0 : i32, i32
  }
  func.func @transform_7(%arg0: i32, %arg1: i32) -> (i32, i32, i32) {
    %c0_i32 = arith.constant 0 : i32
    %c0_i32_0 = arith.constant 0 : i32
    return %arg0, %c0_i32, %arg1 : i32, i32, i32
  }
}

</mosaic_0001>

<llo_original>
// kernel: tpu_custom_call.1
$region0: #{tpu_custom_call.1}
  #allocation0 [shape = 'u32[]', space=smem, size = 0x4, offset = 0x4, fixed_abs, tag = 'smem constant byte address 0x4 - core index']
  #allocation1 [shape = 'u32[72,128]{1,0:T(1,128)}', space=vmem, size = 0x9000, scoped, tag = 'internal scratch']
  %s0 = inlined_call_operand.hbm [shape: f32[2,32,256], index: 0, kind: input, shape index: {}]
  %s1 = inlined_call_operand.vmem [shape: f32[32,32], index: 1, kind: input, shape index: {}]
  %s2 = inlined_call_operand.vmem [shape: f32[32,1], index: 2, kind: input, shape index: {}]
  %s3 = inlined_call_operand.vmem [shape: f32[32,32], index: 3, kind: input, shape index: {}]
  %s4 = inlined_call_operand.vmem [shape: f32[32,1], index: 4, kind: input, shape index: {}]
  %s5 = inlined_call_operand.vmem [shape: f32[16,32], index: 5, kind: input, shape index: {}]
  %s6 = inlined_call_operand.vmem [shape: f32[16,1], index: 6, kind: input, shape index: {}]
  %s7 = inlined_call_operand.hbm [shape: f32[2,16,256], index: 7, kind: output, shape index: {}]
  %s8 = sld [smem:[#allocation0]]
  $region42: #{tpu_custom_call.1} parent=0
    _
  %s10 = ssub.s32 1, %s8
  %s11 = scalar_select 0, %s10, %s8
  $region1: #{tpu_custom_call.1} parent=0
    #allocation2 [shape = 'u8[65536]{0}', space=vmem, size = 0x10000, scoped, tag = 'input window, operand 0, single buffered']
    #allocation3 [shape = 's32[1]{0}', space=sflag, size = 0x4, scoped, tag = 'scoped memory for tpu_custom_call.1']
    #allocation4 [shape = 's32[1]{0}', space=sflag, size = 0x4, scoped, tag = 'scoped memory for tpu_custom_call.1']
    #allocation5 [shape = 'u8[32768]{0}', space=vmem, size = 0x8000, scoped, tag = 'output window, operand 0, single buffered']
    %12 = vsyncpa [#allocation3], 0
    %13 = vsyncpa [#allocation4], 0
    // Predicated region
    $region2: #{tpu_custom_call.1} parent=1 // pred_check
      _
    $region3: #{tpu_custom_call.1} parent=1 // pred_check_branch
      %15 = sbr.rel (0) target = $region5
    $region4: #{tpu_custom_call.1} parent=1 // pred_region
      %17 = vsyncadd [#allocation3], 0
      %s18 = sshll.u32 %s0, 4
      %s19 = int_to_ptr.hbm [resolvable:$true] %s18
      %s20 = sshll.u32 [#allocation2], 4
      %s21 = int_to_ptr.vmem [resolvable:$true] %s20
      %26 = dma.hbm_to_vmem [thread:$0]  %s19, 2048, %s21, [#allocation3], 256, 256, 16
    $region5: #{tpu_custom_call.1} parent=1 // pred_fallthru
      _
    // Predicated region
    $region6: #{tpu_custom_call.1} parent=1 // pred_check
      _
    $region7: #{tpu_custom_call.1} parent=1 // pred_check_branch
      %28 = sbr.rel (0) target = $region9
    $region8: #{tpu_custom_call.1} parent=1 // pred_region
      _
    $region9: #{tpu_custom_call.1} parent=1 // pred_fallthru
      _
    // Predicated region
    $region10: #{tpu_custom_call.1} parent=1 // pred_check
      _
    $region11: #{tpu_custom_call.1} parent=1 // pred_check_branch
      %30 = sbr.rel (0) target = $region13
    $region12: #{tpu_custom_call.1} parent=1 // pred_region
      _
    $region13: #{tpu_custom_call.1} parent=1 // pred_fallthru
      _
    // Predicated region
    $region14: #{tpu_custom_call.1} parent=1 // pred_check
      _
    $region15: #{tpu_custom_call.1} parent=1 // pred_check_branch
      %32 = sbr.rel (0) target = $region17
    $region16: #{tpu_custom_call.1} parent=1 // pred_region
      _
    $region17: #{tpu_custom_call.1} parent=1 // pred_fallthru
      _
    // Predicated region
    $region18: #{tpu_custom_call.1} parent=1 // pred_check
      _
    $region19: #{tpu_custom_call.1} parent=1 // pred_check_branch
      %34 = sbr.rel (0) target = $region21
    $region20: #{tpu_custom_call.1} parent=1 // pred_region
      _
    $region21: #{tpu_custom_call.1} parent=1 // pred_fallthru
      _
    // Predicated region
    $region22: #{tpu_custom_call.1} parent=1 // pred_check
      _
    $region23: #{tpu_custom_call.1} parent=1 // pred_check_branch
      %36 = sbr.rel (0) target = $region25
    $region24: #{tpu_custom_call.1} parent=1 // pred_region
      _
    $region25: #{tpu_custom_call.1} parent=1 // pred_fallthru
      _
    // Predicated region
    $region26: #{tpu_custom_call.1} parent=1 // pred_check
      _
    $region27: #{tpu_custom_call.1} parent=1 // pred_check_branch
      %38 = sbr.rel (0) target = $region29
    $region28: #{tpu_custom_call.1} parent=1 // pred_region
      _
    $region29: #{tpu_custom_call.1} parent=1 // pred_fallthru
      _
    // Predicated region
    $region30: #{tpu_custom_call.1} parent=1 // pred_check
      _
    $region31: #{tpu_custom_call.1} parent=1 // pred_check_branch
      %40 = sbr.rel (0) target = $region33
    $region32: #{tpu_custom_call.1} parent=1 // pred_region
      %42 = dma.done [#allocation3], 2048
    $region33: #{tpu_custom_call.1} parent=1 // pred_fallthru
      _
    %v43 = vld [vmem:[%s1] sm:$0xff]
    %v44 = vld [vmem:[%s1 + $0x8] sm:$0xff]
    %v45 = vld [vmem:[%s1 + $0x10] sm:$0xff]
    %v46 = vld [vmem:[%s1 + $0x18] sm:$0xff]
    %v47 = vld [vmem:[%s2] sm:$0xff]
    %v48 = vld [vmem:[%s2 + $0x8] sm:$0xff]
    %v49 = vld [vmem:[%s2 + $0x10] sm:$0xff]
    %v50 = vld [vmem:[%s2 + $0x18] sm:$0xff]
    %v51 = vld [vmem:[%s3] sm:$0xff]
    %v52 = vld [vmem:[%s3 + $0x8] sm:$0xff]
    %v53 = vld [vmem:[%s3 + $0x10] sm:$0xff]
    %v54 = vld [vmem:[%s3 + $0x18] sm:$0xff]
    %v55 = vld [vmem:[%s4] sm:$0xff]
    %v56 = vld [vmem:[%s4 + $0x8] sm:$0xff]
    %v57 = vld [vmem:[%s4 + $0x10] sm:$0xff]
    %v58 = vld [vmem:[%s4 + $0x18] sm:$0xff]
    %v59 = vld [vmem:[%s5] sm:$0xff]
    %v60 = vld [vmem:[%s5 + $0x8] sm:$0xff]
    %v61 = vld [vmem:[%s6] sm:$0xff]
    %v62 = vld [vmem:[%s6 + $0x8] sm:$0xff]
    %v63 = vld [vmem:[#allocation2] sm:$0xff]
    %v64 = vld [vmem:[#allocation2 + $0x8] sm:$0xff]
    %v65 = vld [vmem:[#allocation2 + $0x10] sm:$0xff]
    %v66 = vld [vmem:[#allocation2 + $0x18] sm:$0xff]
    %v67 = vld [vmem:[#allocation2 + $0x20] sm:$0xff]
    %v68 = vld [vmem:[#allocation2 + $0x28] sm:$0xff]
    %v69 = vld [vmem:[#allocation2 + $0x30] sm:$0xff]
    %v70 = vld [vmem:[#allocation2 + $0x38] sm:$0xff]
    %72 = vset.pattern.permute.xlu0 0
    %73 = vperm.xlu0 %72, %v47
    %v74 = vpop.permute.xlu0 %73
    %77 = vset.pattern.permute.xlu0 0
    %78 = vperm.xlu0 %77, %v48
    %v79 = vpop.permute.xlu0 %78
    %82 = vset.pattern.permute.xlu0 0
    %83 = vperm.xlu0 %82, %v49
    %v84 = vpop.permute.xlu0 %83
    %87 = vset.pattern.permute.xlu0 0
    %88 = vperm.xlu0 %87, %v50
    %v89 = vpop.permute.xlu0 %88
    %vm91 = vcmask 261120
    %v93 = vsel %vm91, %v43, 0
    %v96 = vsel %vm91, %v44, 0
    %v99 = vsel %vm91, %v45, 0
    %v102 = vsel %vm91, %v46, 0
    %104 = vmatpush.msra.mxu0 0.0
    %105 = vmatpush.msra.mxu0 0.0
    %106 = vmatpush.msra.mxu0 0.0
    %107 = vmatpush.msra.mxu0 0.0
    %108 = vmatpush.msra.mxu0 0.0
    %109 = vmatpush.msra.mxu0 0.0
    %110 = vmatpush.msra.mxu0 0.0
    %111 = vmatpush.msra.mxu0 0.0
    %112 = vmatpush.msra.mxu0 0.0
    %113 = vmatpush.msra.mxu0 0.0
    %114 = vmatpush.msra.mxu0 0.0
    %115 = vmatpush.msra.mxu0 0.0
    %v116 = vand.u32 %v69, 4294901760
    %117 = vmatpush.msra.mxu0 %v116
    %v118 = vand.u32 %v67, 4294901760
    %119 = vmatpush.msra.mxu0 %v118
    %v120 = vand.u32 %v65, 4294901760
    %121 = vmatpush.msra.mxu0 %v120
    %v122 = vand.u32 %v63, 4294901760
    %123 = vmatpush.msra.mxu0 %v122
    %v124 = vand.u32 %v93, 4294901760
    %v125 = vsub.f32 %v93, %v124
    %v126 = vand.u32 %v125, 4294901760
    %v127 = vsub.f32 %v125, %v126
    %v128 = vand.u32 %v127, 4294901760
    %129 = vmatmul.f32.gmra.mxu0 %v128
    %v130 = vpop.f32.mrf.mxu0
    %v131 = vadd.f32 %v74, %v130
    %v132 = vand.u32 %v96, 4294901760
    %v133 = vsub.f32 %v96, %v132
    %v134 = vand.u32 %v133, 4294901760
    %v135 = vsub.f32 %v133, %v134
    %v136 = vand.u32 %v135, 4294901760
    %137 = vmatmul.f32.gmra.mxu0 %v136
    %v138 = vpop.f32.mrf.mxu0
    %v139 = vadd.f32 %v79, %v138
    %v140 = vand.u32 %v99, 4294901760
    %v141 = vsub.f32 %v99, %v140
    %v142 = vand.u32 %v141, 4294901760
    %v143 = vsub.f32 %v141, %v142
    %v144 = vand.u32 %v143, 4294901760
    %145 = vmatmul.f32.gmra.mxu0 %v144
    %v146 = vpop.f32.mrf.mxu0
    %v147 = vadd.f32 %v84, %v146
    %v148 = vand.u32 %v102, 4294901760
    %v149 = vsub.f32 %v102, %v148
    %v150 = vand.u32 %v149, 4294901760
    %v151 = vsub.f32 %v149, %v150
    %v152 = vand.u32 %v151, 4294901760
    %153 = vmatmul.f32.gmra.mxu0 %v152
    %v154 = vpop.f32.mrf.mxu0
    %v155 = vadd.f32 %v89, %v154
    %156 = vdwg.mxu0
    %157 = vmatpush.msra.mxu0 0.0
    %158 = vmatpush.msra.mxu0 0.0
    %159 = vmatpush.msra.mxu0 0.0
    %160 = vmatpush.msra.mxu0 0.0
    %161 = vmatpush.msra.mxu0 0.0
    %162 = vmatpush.msra.mxu0 0.0
    %163 = vmatpush.msra.mxu0 0.0
    %164 = vmatpush.msra.mxu0 0.0
    %165 = vmatpush.msra.mxu0 0.0
    %166 = vmatpush.msra.mxu0 0.0
    %167 = vmatpush.msra.mxu0 0.0
    %168 = vmatpush.msra.mxu0 0.0
    %v169 = vand.u32 %v69, 4294901760
    %v170 = vsub.f32 %v69, %v169
    %v171 = vand.u32 %v170, 4294901760
    %v172 = vsub.f32 %v170, %v171
    %v173 = vand.u32 %v172, 4294901760
    %174 = vmatpush.msra.mxu0 %v173
    %v175 = vand.u32 %v67, 4294901760
    %v176 = vsub.f32 %v67, %v175
    %v177 = vand.u32 %v176, 4294901760
    %v178 = vsub.f32 %v176, %v177
    %v179 = vand.u32 %v178, 4294901760
    %180 = vmatpush.msra.mxu0 %v179
    %v181 = vand.u32 %v65, 4294901760
    %v182 = vsub.f32 %v65, %v181
    %v183 = vand.u32 %v182, 4294901760
    %v184 = vsub.f32 %v182, %v183
    %v185 = vand.u32 %v184, 4294901760
    %186 = vmatpush.msra.mxu0 %v185
    %v187 = vand.u32 %v63, 4294901760
    %v188 = vsub.f32 %v63, %v187
    %v189 = vand.u32 %v188, 4294901760
    %v190 = vsub.f32 %v188, %v189
    %v191 = vand.u32 %v190, 4294901760
    %192 = vmatpush.msra.mxu0 %v191
    %v193 = vand.u32 %v93, 4294901760
    %194 = vmatmul.f32.gmra.mxu0 %v193
    %v195 = vpop.f32.mrf.mxu0
    %v196 = vadd.f32 %v131, %v195
    %v197 = vand.u32 %v96, 4294901760
    %198 = vmatmul.f32.gmra.mxu0 %v197
    %v199 = vpop.f32.mrf.mxu0
    %v200 = vadd.f32 %v139, %v199
    %v201 = vand.u32 %v99, 4294901760
    %202 = vmatmul.f32.gmra.mxu0 %v201
    %v203 = vpop.f32.mrf.mxu0
    %v204 = vadd.f32 %v147, %v203
    %v205 = vand.u32 %v102, 4294901760
    %206 = vmatmul.f32.gmra.mxu0 %v205
    %v207 = vpop.f32.mrf.mxu0
    %v208 = vadd.f32 %v155, %v207
    %209 = vdwg.mxu0
    %210 = vmatpush.msra.mxu0 0.0
    %211 = vmatpush.msra.mxu0 0.0
    %212 = vmatpush.msra.mxu0 0.0
    %213 = vmatpush.msra.mxu0 0.0
    %214 = vmatpush.msra.mxu0 0.0
    %215 = vmatpush.msra.mxu0 0.0
    %216 = vmatpush.msra.mxu0 0.0
    %217 = vmatpush.msra.mxu0 0.0
    %218 = vmatpush.msra.mxu0 0.0
    %219 = vmatpush.msra.mxu0 0.0
    %220 = vmatpush.msra.mxu0 0.0
    %221 = vmatpush.msra.mxu0 0.0
    %v222 = vand.u32 %v69, 4294901760
    %v223 = vsub.f32 %v69, %v222
    %224 = vmatpush.msra.mxu0 %v223
    %v225 = vand.u32 %v67, 4294901760
    %v226 = vsub.f32 %v67, %v225
    %227 = vmatpush.msra.mxu0 %v226
    %v228 = vand.u32 %v65, 4294901760
    %v229 = vsub.f32 %v65, %v228
    %230 = vmatpush.msra.mxu0 %v229
    %v231 = vand.u32 %v63, 4294901760
    %v232 = vsub.f32 %v63, %v231
    %233 = vmatpush.msra.mxu0 %v232
    %v234 = vand.u32 %v93, 4294901760
    %v235 = vsub.f32 %v93, %v234
    %236 = vmatmul.f32.gmra.mxu0 %v235
    %v237 = vpop.f32.mrf.mxu0
    %v238 = vadd.f32 %v196, %v237
    %v239 = vand.u32 %v96, 4294901760
    %v240 = vsub.f32 %v96, %v239
    %241 = vmatmul.f32.gmra.mxu0 %v240
    %v242 = vpop.f32.mrf.mxu0
    %v243 = vadd.f32 %v200, %v242
    %v244 = vand.u32 %v99, 4294901760
    %v245 = vsub.f32 %v99, %v244
    %246 = vmatmul.f32.gmra.mxu0 %v245
    %v247 = vpop.f32.mrf.mxu0
    %v248 = vadd.f32 %v204, %v247
    %v249 = vand.u32 %v102, 4294901760
    %v250 = vsub.f32 %v102, %v249
    %251 = vmatmul.f32.gmra.mxu0 %v250
    %v252 = vpop.f32.mrf.mxu0
    %v253 = vadd.f32 %v208, %v252
    %254 = vdwg.mxu0
    %255 = vmatpush.msra.mxu0 0.0
    %256 = vmatpush.msra.mxu0 0.0
    %257 = vmatpush.msra.mxu0 0.0
    %258 = vmatpush.msra.mxu0 0.0
    %259 = vmatpush.msra.mxu0 0.0
    %260 = vmatpush.msra.mxu0 0.0
    %261 = vmatpush.msra.mxu0 0.0
    %262 = vmatpush.msra.mxu0 0.0
    %263 = vmatpush.msra.mxu0 0.0
    %264 = vmatpush.msra.mxu0 0.0
    %265 = vmatpush.msra.mxu0 0.0
    %266 = vmatpush.msra.mxu0 0.0
    %v267 = vand.u32 %v69, 4294901760
    %268 = vmatpush.msra.mxu0 %v267
    %v269 = vand.u32 %v67, 4294901760
    %270 = vmatpush.msra.mxu0 %v269
    %v271 = vand.u32 %v65, 4294901760
    %272 = vmatpush.msra.mxu0 %v271
    %v273 = vand.u32 %v63, 4294901760
    %274 = vmatpush.msra.mxu0 %v273
    %v275 = vand.u32 %v93, 4294901760
    %v276 = vsub.f32 %v93, %v275
    %v277 = vand.u32 %v276, 4294901760
    %278 = vmatmul.f32.gmra.mxu0 %v277
    %v279 = vpop.f32.mrf.mxu0
    %v280 = vadd.f32 %v238, %v279
    %v281 = vand.u32 %v96, 4294901760
    %v282 = vsub.f32 %v96, %v281
    %v283 = vand.u32 %v282, 4294901760
    %284 = vmatmul.f32.gmra.mxu0 %v283
    %v285 = vpop.f32.mrf.mxu0
    %v286 = vadd.f32 %v243, %v285
    %v287 = vand.u32 %v99, 4294901760
    %v288 = vsub.f32 %v99, %v287
    %v289 = vand.u32 %v288, 4294901760
    %290 = vmatmul.f32.gmra.mxu0 %v289
    %v291 = vpop.f32.mrf.mxu0
    %v292 = vadd.f32 %v248, %v291
    %v293 = vand.u32 %v102, 4294901760
    %v294 = vsub.f32 %v102, %v293
    %v295 = vand.u32 %v294, 4294901760
    %296 = vmatmul.f32.gmra.mxu0 %v295
    %v297 = vpop.f32.mrf.mxu0
    %v298 = vadd.f32 %v253, %v297
    %299 = vdwg.mxu0
    %300 = vmatpush.msra.mxu0 0.0
    %301 = vmatpush.msra.mxu0 0.0
    %302 = vmatpush.msra.mxu0 0.0
    %303 = vmatpush.msra.mxu0 0.0
    %304 = vmatpush.msra.mxu0 0.0
    %305 = vmatpush.msra.mxu0 0.0
    %306 = vmatpush.msra.mxu0 0.0
    %307 = vmatpush.msra.mxu0 0.0
    %308 = vmatpush.msra.mxu0 0.0
    %309 = vmatpush.msra.mxu0 0.0
    %310 = vmatpush.msra.mxu0 0.0
    %311 = vmatpush.msra.mxu0 0.0
    %v312 = vand.u32 %v69, 4294901760
    %v313 = vsub.f32 %v69, %v312
    %v314 = vand.u32 %v313, 4294901760
    %315 = vmatpush.msra.mxu0 %v314
    %v316 = vand.u32 %v67, 4294901760
    %v317 = vsub.f32 %v67, %v316
    %v318 = vand.u32 %v317, 4294901760
    %319 = vmatpush.msra.mxu0 %v318
    %v320 = vand.u32 %v65, 4294901760
    %v321 = vsub.f32 %v65, %v320
    %v322 = vand.u32 %v321, 4294901760
    %323 = vmatpush.msra.mxu0 %v322
    %v324 = vand.u32 %v63, 4294901760
    %v325 = vsub.f32 %v63, %v324
    %v326 = vand.u32 %v325, 4294901760
    %327 = vmatpush.msra.mxu0 %v326
    %v328 = vand.u32 %v93, 4294901760
    %329 = vmatmul.f32.gmra.mxu0 %v328
    %v330 = vpop.f32.mrf.mxu0
    %v331 = vadd.f32 %v280, %v330
    %v332 = vand.u32 %v96, 4294901760
    %333 = vmatmul.f32.gmra.mxu0 %v332
    %v334 = vpop.f32.mrf.mxu0
    %v335 = vadd.f32 %v286, %v334
    %v336 = vand.u32 %v99, 4294901760
    %337 = vmatmul.f32.gmra.mxu0 %v336
    %v338 = vpop.f32.mrf.mxu0
    %v339 = vadd.f32 %v292, %v338
    %v340 = vand.u32 %v102, 4294901760
    %341 = vmatmul.f32.gmra.mxu0 %v340
    %v342 = vpop.f32.mrf.mxu0
    %v343 = vadd.f32 %v298, %v342
    %344 = vdwg.mxu0
    %345 = vmatpush.msra.mxu0 0.0
    %346 = vmatpush.msra.mxu0 0.0
    %347 = vmatpush.msra.mxu0 0.0
    %348 = vmatpush.msra.mxu0 0.0
    %349 = vmatpush.msra.mxu0 0.0
    %350 = vmatpush.msra.mxu0 0.0
    %351 = vmatpush.msra.mxu0 0.0
    %352 = vmatpush.msra.mxu0 0.0
    %353 = vmatpush.msra.mxu0 0.0
    %354 = vmatpush.msra.mxu0 0.0
    %355 = vmatpush.msra.mxu0 0.0
    %356 = vmatpush.msra.mxu0 0.0
    %v357 = vand.u32 %v69, 4294901760
    %358 = vmatpush.msra.mxu0 %v357
    %v359 = vand.u32 %v67, 4294901760
    %360 = vmatpush.msra.mxu0 %v359
    %v361 = vand.u32 %v65, 4294901760
    %362 = vmatpush.msra.mxu0 %v361
    %v363 = vand.u32 %v63, 4294901760
    %364 = vmatpush.msra.mxu0 %v363
    %v365 = vand.u32 %v93, 4294901760
    %366 = vmatmul.f32.gmra.mxu0 %v365
    %v367 = vpop.f32.mrf.mxu0
    %v368 = vadd.f32 %v331, %v367
    %v369 = vand.u32 %v96, 4294901760
    %370 = vmatmul.f32.gmra.mxu0 %v369
    %v371 = vpop.f32.mrf.mxu0
    %v372 = vadd.f32 %v335, %v371
    %v373 = vand.u32 %v99, 4294901760
    %374 = vmatmul.f32.gmra.mxu0 %v373
    %v375 = vpop.f32.mrf.mxu0
    %v376 = vadd.f32 %v339, %v375
    %v377 = vand.u32 %v102, 4294901760
    %378 = vmatmul.f32.gmra.mxu0 %v377
    %v379 = vpop.f32.mrf.mxu0
    %v380 = vadd.f32 %v343, %v379
    %381 = vdwg.mxu0
    %382 = vmatpush.msra.mxu0 0.0
    %383 = vmatpush.msra.mxu0 0.0
    %384 = vmatpush.msra.mxu0 0.0
    %385 = vmatpush.msra.mxu0 0.0
    %386 = vmatpush.msra.mxu0 0.0
    %387 = vmatpush.msra.mxu0 0.0
    %388 = vmatpush.msra.mxu0 0.0
    %389 = vmatpush.msra.mxu0 0.0
    %390 = vmatpush.msra.mxu0 0.0
    %391 = vmatpush.msra.mxu0 0.0
    %392 = vmatpush.msra.mxu0 0.0
    %393 = vmatpush.msra.mxu0 0.0
    %v394 = vand.u32 %v70, 4294901760
    %395 = vmatpush.msra.mxu0 %v394
    %v396 = vand.u32 %v68, 4294901760
    %397 = vmatpush.msra.mxu0 %v396
    %v398 = vand.u32 %v66, 4294901760
    %399 = vmatpush.msra.mxu0 %v398
    %v400 = vand.u32 %v64, 4294901760
    %401 = vmatpush.msra.mxu0 %v400
    %v402 = vand.u32 %v93, 4294901760
    %v403 = vsub.f32 %v93, %v402
    %v404 = vand.u32 %v403, 4294901760
    %v405 = vsub.f32 %v403, %v404
    %v406 = vand.u32 %v405, 4294901760
    %407 = vmatmul.f32.gmra.mxu0 %v406
    %v408 = vpop.f32.mrf.mxu0
    %v409 = vadd.f32 %v74, %v408
    %v410 = vand.u32 %v96, 4294901760
    %v411 = vsub.f32 %v96, %v410
    %v412 = vand.u32 %v411, 4294901760
    %v413 = vsub.f32 %v411, %v412
    %v414 = vand.u32 %v413, 4294901760
    %415 = vmatmul.f32.gmra.mxu0 %v414
    %v416 = vpop.f32.mrf.mxu0
    %v417 = vadd.f32 %v79, %v416
    %v418 = vand.u32 %v99, 4294901760
    %v419 = vsub.f32 %v99, %v418
    %v420 = vand.u32 %v419, 4294901760
    %v421 = vsub.f32 %v419, %v420
    %v422 = vand.u32 %v421, 4294901760
    %423 = vmatmul.f32.gmra.mxu0 %v422
    %v424 = vpop.f32.mrf.mxu0
    %v425 = vadd.f32 %v84, %v424
    %v426 = vand.u32 %v102, 4294901760
    %v427 = vsub.f32 %v102, %v426
    %v428 = vand.u32 %v427, 4294901760
    %v429 = vsub.f32 %v427, %v428
    %v430 = vand.u32 %v429, 4294901760
    %431 = vmatmul.f32.gmra.mxu0 %v430
    %v432 = vpop.f32.mrf.mxu0
    %v433 = vadd.f32 %v89, %v432
    %434 = vdwg.mxu0
    %435 = vmatpush.msra.mxu0 0.0
    %436 = vmatpush.msra.mxu0 0.0
    %437 = vmatpush.msra.mxu0 0.0
    %438 = vmatpush.msra.mxu0 0.0
    %439 = vmatpush.msra.mxu0 0.0
    %440 = vmatpush.msra.mxu0 0.0
    %441 = vmatpush.msra.mxu0 0.0
    %442 = vmatpush.msra.mxu0 0.0
    %443 = vmatpush.msra.mxu0 0.0
    %444 = vmatpush.msra.mxu0 0.0
    %445 = vmatpush.msra.mxu0 0.0
    %446 = vmatpush.msra.mxu0 0.0
    %v447 = vand.u32 %v70, 4294901760
    %v448 = vsub.f32 %v70, %v447
    %v449 = vand.u32 %v448, 4294901760
    %v450 = vsub.f32 %v448, %v449
    %v451 = vand.u32 %v450, 4294901760
    %452 = vmatpush.msra.mxu0 %v451
    %v453 = vand.u32 %v68, 4294901760
    %v454 = vsub.f32 %v68, %v453
    %v455 = vand.u32 %v454, 4294901760
    %v456 = vsub.f32 %v454, %v455
    %v457 = vand.u32 %v456, 4294901760
    %458 = vmatpush.msra.mxu0 %v457
    %v459 = vand.u32 %v66, 4294901760
    %v460 = vsub.f32 %v66, %v459
    %v461 = vand.u32 %v460, 4294901760
    %v462 = vsub.f32 %v460, %v461
    %v463 = vand.u32 %v462, 4294901760
    %464 = vmatpush.msra.mxu0 %v463
    %v465 = vand.u32 %v64, 4294901760
    %v466 = vsub.f32 %v64, %v465
    %v467 = vand.u32 %v466, 4294901760
    %v468 = vsub.f32 %v466, %v467
    %v469 = vand.u32 %v468, 4294901760
    %470 = vmatpush.msra.mxu0 %v469
    %v471 = vand.u32 %v93, 4294901760
    %472 = vmatmul.f32.gmra.mxu0 %v471
    %v473 = vpop.f32.mrf.mxu0
    %v474 = vadd.f32 %v409, %v473
    %v475 = vand.u32 %v96, 4294901760
    %476 = vmatmul.f32.gmra.mxu0 %v475
    %v477 = vpop.f32.mrf.mxu0
    %v478 = vadd.f32 %v417, %v477
    %v479 = vand.u32 %v99, 4294901760
    %480 = vmatmul.f32.gmra.mxu0 %v479
    %v481 = vpop.f32.mrf.mxu0
    %v482 = vadd.f32 %v425, %v481
    %v483 = vand.u32 %v102, 4294901760
    %484 = vmatmul.f32.gmra.mxu0 %v483
    %v485 = vpop.f32.mrf.mxu0
    %v486 = vadd.f32 %v433, %v485
    %487 = vdwg.mxu0
    %488 = vmatpush.msra.mxu0 0.0
    %489 = vmatpush.msra.mxu0 0.0
    %490 = vmatpush.msra.mxu0 0.0
    %491 = vmatpush.msra.mxu0 0.0
    %492 = vmatpush.msra.mxu0 0.0
    %493 = vmatpush.msra.mxu0 0.0
    %494 = vmatpush.msra.mxu0 0.0
    %495 = vmatpush.msra.mxu0 0.0
    %496 = vmatpush.msra.mxu0 0.0
    %497 = vmatpush.msra.mxu0 0.0
    %498 = vmatpush.msra.mxu0 0.0
    %499 = vmatpush.msra.mxu0 0.0
    %v500 = vand.u32 %v70, 4294901760
    %v501 = vsub.f32 %v70, %v500
    %502 = vmatpush.msra.mxu0 %v501
    %v503 = vand.u32 %v68, 4294901760
    %v504 = vsub.f32 %v68, %v503
    %505 = vmatpush.msra.mxu0 %v504
    %v506 = vand.u32 %v66, 4294901760
    %v507 = vsub.f32 %v66, %v506
    %508 = vmatpush.msra.mxu0 %v507
    %v509 = vand.u32 %v64, 4294901760
    %v510 = vsub.f32 %v64, %v509
    %511 = vmatpush.msra.mxu0 %v510
    %v512 = vand.u32 %v93, 4294901760
    %v513 = vsub.f32 %v93, %v512
    %514 = vmatmul.f32.gmra.mxu0 %v513
    %v515 = vpop.f32.mrf.mxu0
    %v516 = vadd.f32 %v474, %v515
    %v517 = vand.u32 %v96, 4294901760
    %v518 = vsub.f32 %v96, %v517
    %519 = vmatmul.f32.gmra.mxu0 %v518
    %v520 = vpop.f32.mrf.mxu0
    %v521 = vadd.f32 %v478, %v520
    %v522 = vand.u32 %v99, 4294901760
    %v523 = vsub.f32 %v99, %v522
    %524 = vmatmul.f32.gmra.mxu0 %v523
    %v525 = vpop.f32.mrf.mxu0
    %v526 = vadd.f32 %v482, %v525
    %v527 = vand.u32 %v102, 4294901760
    %v528 = vsub.f32 %v102, %v527
    %529 = vmatmul.f32.gmra.mxu0 %v528
    %v530 = vpop.f32.mrf.mxu0
    %v531 = vadd.f32 %v486, %v530
    %532 = vdwg.mxu0
    %533 = vmatpush.msra.mxu0 0.0
    %534 = vmatpush.msra.mxu0 0.0
    %535 = vmatpush.msra.mxu0 0.0
    %536 = vmatpush.msra.mxu0 0.0
    %537 = vmatpush.msra.mxu0 0.0
    %538 = vmatpush.msra.mxu0 0.0
    %539 = vmatpush.msra.mxu0 0.0
    %540 = vmatpush.msra.mxu0 0.0
    %541 = vmatpush.msra.mxu0 0.0
    %542 = vmatpush.msra.mxu0 0.0
    %543 = vmatpush.msra.mxu0 0.0
    %544 = vmatpush.msra.mxu0 0.0
    %v545 = vand.u32 %v70, 4294901760
    %546 = vmatpush.msra.mxu0 %v545
    %v547 = vand.u32 %v68, 4294901760
    %548 = vmatpush.msra.mxu0 %v547
    %v549 = vand.u32 %v66, 4294901760
    %550 = vmatpush.msra.mxu0 %v549
    %v551 = vand.u32 %v64, 4294901760
    %552 = vmatpush.msra.mxu0 %v551
    %v553 = vand.u32 %v93, 4294901760
    %v554 = vsub.f32 %v93, %v553
    %v555 = vand.u32 %v554, 4294901760
    %556 = vmatmul.f32.gmra.mxu0 %v555
    %v557 = vpop.f32.mrf.mxu0
    %v558 = vadd.f32 %v516, %v557
    %v559 = vand.u32 %v96, 4294901760
    %v560 = vsub.f32 %v96, %v559
    %v561 = vand.u32 %v560, 4294901760
    %562 = vmatmul.f32.gmra.mxu0 %v561
    %v563 = vpop.f32.mrf.mxu0
    %v564 = vadd.f32 %v521, %v563
    %v565 = vand.u32 %v99, 4294901760
    %v566 = vsub.f32 %v99, %v565
    %v567 = vand.u32 %v566, 4294901760
    %568 = vmatmul.f32.gmra.mxu0 %v567
    %v569 = vpop.f32.mrf.mxu0
    %v570 = vadd.f32 %v526, %v569
    %v571 = vand.u32 %v102, 4294901760
    %v572 = vsub.f32 %v102, %v571
    %v573 = vand.u32 %v572, 4294901760
    %574 = vmatmul.f32.gmra.mxu0 %v573
    %v575 = vpop.f32.mrf.mxu0
    %v576 = vadd.f32 %v531, %v575
    %577 = vdwg.mxu0
    %578 = vmatpush.msra.mxu0 0.0
    %579 = vmatpush.msra.mxu0 0.0
    %580 = vmatpush.msra.mxu0 0.0
    %581 = vmatpush.msra.mxu0 0.0
    %582 = vmatpush.msra.mxu0 0.0
    %583 = vmatpush.msra.mxu0 0.0
    %584 = vmatpush.msra.mxu0 0.0
    %585 = vmatpush.msra.mxu0 0.0
    %586 = vmatpush.msra.mxu0 0.0
    %587 = vmatpush.msra.mxu0 0.0
    %588 = vmatpush.msra.mxu0 0.0
    %589 = vmatpush.msra.mxu0 0.0
    %v590 = vand.u32 %v70, 4294901760
    %v591 = vsub.f32 %v70, %v590
    %v592 = vand.u32 %v591, 4294901760
    %593 = vmatpush.msra.mxu0 %v592
    %v594 = vand.u32 %v68, 4294901760
    %v595 = vsub.f32 %v68, %v594
    %v596 = vand.u32 %v595, 4294901760
    %597 = vmatpush.msra.mxu0 %v596
    %v598 = vand.u32 %v66, 4294901760
    %v599 = vsub.f32 %v66, %v598
    %v600 = vand.u32 %v599, 4294901760
    %601 = vmatpush.msra.mxu0 %v600
    %v602 = vand.u32 %v64, 4294901760
    %v603 = vsub.f32 %v64, %v602
    %v604 = vand.u32 %v603, 4294901760
    %605 = vmatpush.msra.mxu0 %v604
    %v606 = vand.u32 %v93, 4294901760
    %607 = vmatmul.f32.gmra.mxu0 %v606
    %v608 = vpop.f32.mrf.mxu0
    %v609 = vadd.f32 %v558, %v608
    %v610 = vand.u32 %v96, 4294901760
    %611 = vmatmul.f32.gmra.mxu0 %v610
    %v612 = vpop.f32.mrf.mxu0
    %v613 = vadd.f32 %v564, %v612
    %v614 = vand.u32 %v99, 4294901760
    %615 = vmatmul.f32.gmra.mxu0 %v614
    %v616 = vpop.f32.mrf.mxu0
    %v617 = vadd.f32 %v570, %v616
    %v618 = vand.u32 %v102, 4294901760
    %619 = vmatmul.f32.gmra.mxu0 %v618
    %v620 = vpop.f32.mrf.mxu0
    %v621 = vadd.f32 %v576, %v620
    %622 = vdwg.mxu0
    %623 = vmatpush.msra.mxu0 0.0
    %624 = vmatpush.msra.mxu0 0.0
    %625 = vmatpush.msra.mxu0 0.0
    %626 = vmatpush.msra.mxu0 0.0
    %627 = vmatpush.msra.mxu0 0.0
    %628 = vmatpush.msra.mxu0 0.0
    %629 = vmatpush.msra.mxu0 0.0
    %630 = vmatpush.msra.mxu0 0.0
    %631 = vmatpush.msra.mxu0 0.0
    %632 = vmatpush.msra.mxu0 0.0
    %633 = vmatpush.msra.mxu0 0.0
    %634 = vmatpush.msra.mxu0 0.0
    %v635 = vand.u32 %v70, 4294901760
    %636 = vmatpush.msra.mxu0 %v635
    %v637 = vand.u32 %v68, 4294901760
    %638 = vmatpush.msra.mxu0 %v637
    %v639 = vand.u32 %v66, 4294901760
    %640 = vmatpush.msra.mxu0 %v639
    %v641 = vand.u32 %v64, 4294901760
    %642 = vmatpush.msra.mxu0 %v641
    %v643 = vand.u32 %v93, 4294901760
    %644 = vmatmul.f32.gmra.mxu0 %v643
    %v645 = vpop.f32.mrf.mxu0
    %v646 = vadd.f32 %v609, %v645
    %v647 = vand.u32 %v96, 4294901760
    %648 = vmatmul.f32.gmra.mxu0 %v647
    %v649 = vpop.f32.mrf.mxu0
    %v650 = vadd.f32 %v613, %v649
    %v651 = vand.u32 %v99, 4294901760
    %652 = vmatmul.f32.gmra.mxu0 %v651
    %v653 = vpop.f32.mrf.mxu0
    %v654 = vadd.f32 %v617, %v653
    %v655 = vand.u32 %v102, 4294901760
    %656 = vmatmul.f32.gmra.mxu0 %v655
    %v657 = vpop.f32.mrf.mxu0
    %v658 = vadd.f32 %v621, %v657
    %659 = vdwg.mxu0
    %v660 = vmul.f32 %v368, 0.01
    %v661 = vmul.f32 %v646, 0.01
    %v662 = vmul.f32 %v372, 0.01
    %v663 = vmul.f32 %v650, 0.01
    %v664 = vmul.f32 %v376, 0.01
    %v665 = vmul.f32 %v654, 0.01
    %v666 = vmul.f32 %v380, 0.01
    %v667 = vmul.f32 %v658, 0.01
    %v668 = vmax.f32 %v368, %v660
    %v669 = vmax.f32 %v646, %v661
    %v670 = vmax.f32 %v372, %v662
    %v671 = vmax.f32 %v650, %v663
    %v672 = vmax.f32 %v376, %v664
    %v673 = vmax.f32 %v654, %v665
    %v674 = vmax.f32 %v380, %v666
    %v675 = vmax.f32 %v658, %v667
    %677 = vset.pattern.permute.xlu0 0
    %678 = vperm.xlu0 %677, %v55
    %v679 = vpop.permute.xlu0 %678
    %682 = vset.pattern.permute.xlu0 0
    %683 = vperm.xlu0 %682, %v56
    %v684 = vpop.permute.xlu0 %683
    %687 = vset.pattern.permute.xlu0 0
    %688 = vperm.xlu0 %687, %v57
    %v689 = vpop.permute.xlu0 %688
    %692 = vset.pattern.permute.xlu0 0
    %693 = vperm.xlu0 %692, %v58
    %v694 = vpop.permute.xlu0 %693
    %v697 = vsel %vm91, %v51, 0
    %v700 = vsel %vm91, %v52, 0
    %v703 = vsel %vm91, %v53, 0
    %v706 = vsel %vm91, %v54, 0
    %708 = vmatpush.msra.mxu0 0.0
    %709 = vmatpush.msra.mxu0 0.0
    %710 = vmatpush.msra.mxu0 0.0
    %711 = vmatpush.msra.mxu0 0.0
    %712 = vmatpush.msra.mxu0 0.0
    %713 = vmatpush.msra.mxu0 0.0
    %714 = vmatpush.msra.mxu0 0.0
    %715 = vmatpush.msra.mxu0 0.0
    %716 = vmatpush.msra.mxu0 0.0
    %717 = vmatpush.msra.mxu0 0.0
    %718 = vmatpush.msra.mxu0 0.0
    %719 = vmatpush.msra.mxu0 0.0
    %v720 = vand.u32 %v674, 4294901760
    %721 = vmatpush.msra.mxu0 %v720
    %v722 = vand.u32 %v672, 4294901760
    %723 = vmatpush.msra.mxu0 %v722
    %v724 = vand.u32 %v670, 4294901760
    %725 = vmatpush.msra.mxu0 %v724
    %v726 = vand.u32 %v668, 4294901760
    %727 = vmatpush.msra.mxu0 %v726
    %v728 = vand.u32 %v697, 4294901760
    %v729 = vsub.f32 %v697, %v728
    %v730 = vand.u32 %v729, 4294901760
    %v731 = vsub.f32 %v729, %v730
    %v732 = vand.u32 %v731, 4294901760
    %733 = vmatmul.f32.gmra.mxu0 %v732
    %v734 = vpop.f32.mrf.mxu0
    %v735 = vadd.f32 %v679, %v734
    %v736 = vand.u32 %v700, 4294901760
    %v737 = vsub.f32 %v700, %v736
    %v738 = vand.u32 %v737, 4294901760
    %v739 = vsub.f32 %v737, %v738
    %v740 = vand.u32 %v739, 4294901760
    %741 = vmatmul.f32.gmra.mxu0 %v740
    %v742 = vpop.f32.mrf.mxu0
    %v743 = vadd.f32 %v684, %v742
    %v744 = vand.u32 %v703, 4294901760
    %v745 = vsub.f32 %v703, %v744
    %v746 = vand.u32 %v745, 4294901760
    %v747 = vsub.f32 %v745, %v746
    %v748 = vand.u32 %v747, 4294901760
    %749 = vmatmul.f32.gmra.mxu0 %v748
    %v750 = vpop.f32.mrf.mxu0
    %v751 = vadd.f32 %v689, %v750
    %v752 = vand.u32 %v706, 4294901760
    %v753 = vsub.f32 %v706, %v752
    %v754 = vand.u32 %v753, 4294901760
    %v755 = vsub.f32 %v753, %v754
    %v756 = vand.u32 %v755, 4294901760
    %757 = vmatmul.f32.gmra.mxu0 %v756
    %v758 = vpop.f32.mrf.mxu0
    %v759 = vadd.f32 %v694, %v758
    %760 = vdwg.mxu0
    %761 = vmatpush.msra.mxu0 0.0
    %762 = vmatpush.msra.mxu0 0.0
    %763 = vmatpush.msra.mxu0 0.0
    %764 = vmatpush.msra.mxu0 0.0
    %765 = vmatpush.msra.mxu0 0.0
    %766 = vmatpush.msra.mxu0 0.0
    %767 = vmatpush.msra.mxu0 0.0
    %768 = vmatpush.msra.mxu0 0.0
    %769 = vmatpush.msra.mxu0 0.0
    %770 = vmatpush.msra.mxu0 0.0
    %771 = vmatpush.msra.mxu0 0.0
    %772 = vmatpush.msra.mxu0 0.0
    %v773 = vand.u32 %v674, 4294901760
    %v774 = vsub.f32 %v674, %v773
    %v775 = vand.u32 %v774, 4294901760
    %v776 = vsub.f32 %v774, %v775
    %v777 = vand.u32 %v776, 4294901760
    %778 = vmatpush.msra.mxu0 %v777
    %v779 = vand.u32 %v672, 4294901760
    %v780 = vsub.f32 %v672, %v779
    %v781 = vand.u32 %v780, 4294901760
    %v782 = vsub.f32 %v780, %v781
    %v783 = vand.u32 %v782, 4294901760
    %784 = vmatpush.msra.mxu0 %v783
    %v785 = vand.u32 %v670, 4294901760
    %v786 = vsub.f32 %v670, %v785
    %v787 = vand.u32 %v786, 4294901760
    %v788 = vsub.f32 %v786, %v787
    %v789 = vand.u32 %v788, 4294901760
    %790 = vmatpush.msra.mxu0 %v789
    %v791 = vand.u32 %v668, 4294901760
    %v792 = vsub.f32 %v668, %v791
    %v793 = vand.u32 %v792, 4294901760
    %v794 = vsub.f32 %v792, %v793
    %v795 = vand.u32 %v794, 4294901760
    %796 = vmatpush.msra.mxu0 %v795
    %v797 = vand.u32 %v697, 4294901760
    %798 = vmatmul.f32.gmra.mxu0 %v797
    %v799 = vpop.f32.mrf.mxu0
    %v800 = vadd.f32 %v735, %v799
    %v801 = vand.u32 %v700, 4294901760
    %802 = vmatmul.f32.gmra.mxu0 %v801
    %v803 = vpop.f32.mrf.mxu0
    %v804 = vadd.f32 %v743, %v803
    %v805 = vand.u32 %v703, 4294901760
    %806 = vmatmul.f32.gmra.mxu0 %v805
    %v807 = vpop.f32.mrf.mxu0
    %v808 = vadd.f32 %v751, %v807
    %v809 = vand.u32 %v706, 4294901760
    %810 = vmatmul.f32.gmra.mxu0 %v809
    %v811 = vpop.f32.mrf.mxu0
    %v812 = vadd.f32 %v759, %v811
    %813 = vdwg.mxu0
    %814 = vmatpush.msra.mxu0 0.0
    %815 = vmatpush.msra.mxu0 0.0
    %816 = vmatpush.msra.mxu0 0.0
    %817 = vmatpush.msra.mxu0 0.0
    %818 = vmatpush.msra.mxu0 0.0
    %819 = vmatpush.msra.mxu0 0.0
    %820 = vmatpush.msra.mxu0 0.0
    %821 = vmatpush.msra.mxu0 0.0
    %822 = vmatpush.msra.mxu0 0.0
    %823 = vmatpush.msra.mxu0 0.0
    %824 = vmatpush.msra.mxu0 0.0
    %825 = vmatpush.msra.mxu0 0.0
    %v826 = vand.u32 %v674, 4294901760
    %v827 = vsub.f32 %v674, %v826
    %828 = vmatpush.msra.mxu0 %v827
    %v829 = vand.u32 %v672, 4294901760
    %v830 = vsub.f32 %v672, %v829
    %831 = vmatpush.msra.mxu0 %v830
    %v832 = vand.u32 %v670, 4294901760
    %v833 = vsub.f32 %v670, %v832
    %834 = vmatpush.msra.mxu0 %v833
    %v835 = vand.u32 %v668, 4294901760
    %v836 = vsub.f32 %v668, %v835
    %837 = vmatpush.msra.mxu0 %v836
    %v838 = vand.u32 %v697, 4294901760
    %v839 = vsub.f32 %v697, %v838
    %840 = vmatmul.f32.gmra.mxu0 %v839
    %v841 = vpop.f32.mrf.mxu0
    %v842 = vadd.f32 %v800, %v841
    %v843 = vand.u32 %v700, 4294901760
    %v844 = vsub.f32 %v700, %v843
    %845 = vmatmul.f32.gmra.mxu0 %v844
    %v846 = vpop.f32.mrf.mxu0
    %v847 = vadd.f32 %v804, %v846
    %v848 = vand.u32 %v703, 4294901760
    %v849 = vsub.f32 %v703, %v848
    %850 = vmatmul.f32.gmra.mxu0 %v849
    %v851 = vpop.f32.mrf.mxu0
    %v852 = vadd.f32 %v808, %v851
    %v853 = vand.u32 %v706, 4294901760
    %v854 = vsub.f32 %v706, %v853
    %855 = vmatmul.f32.gmra.mxu0 %v854
    %v856 = vpop.f32.mrf.mxu0
    %v857 = vadd.f32 %v812, %v856
    %858 = vdwg.mxu0
    %859 = vmatpush.msra.mxu0 0.0
    %860 = vmatpush.msra.mxu0 0.0
    %861 = vmatpush.msra.mxu0 0.0
    %862 = vmatpush.msra.mxu0 0.0
    %863 = vmatpush.msra.mxu0 0.0
    %864 = vmatpush.msra.mxu0 0.0
    %865 = vmatpush.msra.mxu0 0.0
    %866 = vmatpush.msra.mxu0 0.0
    %867 = vmatpush.msra.mxu0 0.0
    %868 = vmatpush.msra.mxu0 0.0
    %869 = vmatpush.msra.mxu0 0.0
    %870 = vmatpush.msra.mxu0 0.0
    %v871 = vand.u32 %v674, 4294901760
    %872 = vmatpush.msra.mxu0 %v871
    %v873 = vand.u32 %v672, 4294901760
    %874 = vmatpush.msra.mxu0 %v873
    %v875 = vand.u32 %v670, 4294901760
    %876 = vmatpush.msra.mxu0 %v875
    %v877 = vand.u32 %v668, 4294901760
    %878 = vmatpush.msra.mxu0 %v877
    %v879 = vand.u32 %v697, 4294901760
    %v880 = vsub.f32 %v697, %v879
    %v881 = vand.u32 %v880, 4294901760
    %882 = vmatmul.f32.gmra.mxu0 %v881
    %v883 = vpop.f32.mrf.mxu0
    %v884 = vadd.f32 %v842, %v883
    %v885 = vand.u32 %v700, 4294901760
    %v886 = vsub.f32 %v700, %v885
    %v887 = vand.u32 %v886, 4294901760
    %888 = vmatmul.f32.gmra.mxu0 %v887
    %v889 = vpop.f32.mrf.mxu0
    %v890 = vadd.f32 %v847, %v889
    %v891 = vand.u32 %v703, 4294901760
    %v892 = vsub.f32 %v703, %v891
    %v893 = vand.u32 %v892, 4294901760
    %894 = vmatmul.f32.gmra.mxu0 %v893
    %v895 = vpop.f32.mrf.mxu0
    %v896 = vadd.f32 %v852, %v895
    %v897 = vand.u32 %v706, 4294901760
    %v898 = vsub.f32 %v706, %v897
    %v899 = vand.u32 %v898, 4294901760
    %900 = vmatmul.f32.gmra.mxu0 %v899
    %v901 = vpop.f32.mrf.mxu0
    %v902 = vadd.f32 %v857, %v901
    %903 = vdwg.mxu0
    %904 = vmatpush.msra.mxu0 0.0
    %905 = vmatpush.msra.mxu0 0.0
    %906 = vmatpush.msra.mxu0 0.0
    %907 = vmatpush.msra.mxu0 0.0
    %908 = vmatpush.msra.mxu0 0.0
    %909 = vmatpush.msra.mxu0 0.0
    %910 = vmatpush.msra.mxu0 0.0
    %911 = vmatpush.msra.mxu0 0.0
    %912 = vmatpush.msra.mxu0 0.0
    %913 = vmatpush.msra.mxu0 0.0
    %914 = vmatpush.msra.mxu0 0.0
    %915 = vmatpush.msra.mxu0 0.0
    %v916 = vand.u32 %v674, 4294901760
    %v917 = vsub.f32 %v674, %v916
    %v918 = vand.u32 %v917, 4294901760
    %919 = vmatpush.msra.mxu0 %v918
    %v920 = vand.u32 %v672, 4294901760
    %v921 = vsub.f32 %v672, %v920
    %v922 = vand.u32 %v921, 4294901760
    %923 = vmatpush.msra.mxu0 %v922
    %v924 = vand.u32 %v670, 4294901760
    %v925 = vsub.f32 %v670, %v924
    %v926 = vand.u32 %v925, 4294901760
    %927 = vmatpush.msra.mxu0 %v926
    %v928 = vand.u32 %v668, 4294901760
    %v929 = vsub.f32 %v668, %v928
    %v930 = vand.u32 %v929, 4294901760
    %931 = vmatpush.msra.mxu0 %v930
    %v932 = vand.u32 %v697, 4294901760
    %933 = vmatmul.f32.gmra.mxu0 %v932
    %v934 = vpop.f32.mrf.mxu0
    %v935 = vadd.f32 %v884, %v934
    %v936 = vand.u32 %v700, 4294901760
    %937 = vmatmul.f32.gmra.mxu0 %v936
    %v938 = vpop.f32.mrf.mxu0
    %v939 = vadd.f32 %v890, %v938
    %v940 = vand.u32 %v703, 4294901760
    %941 = vmatmul.f32.gmra.mxu0 %v940
    %v942 = vpop.f32.mrf.mxu0
    %v943 = vadd.f32 %v896, %v942
    %v944 = vand.u32 %v706, 4294901760
    %945 = vmatmul.f32.gmra.mxu0 %v944
    %v946 = vpop.f32.mrf.mxu0
    %v947 = vadd.f32 %v902, %v946
    %948 = vdwg.mxu0
    %949 = vmatpush.msra.mxu0 0.0
    %950 = vmatpush.msra.mxu0 0.0
    %951 = vmatpush.msra.mxu0 0.0
    %952 = vmatpush.msra.mxu0 0.0
    %953 = vmatpush.msra.mxu0 0.0
    %954 = vmatpush.msra.mxu0 0.0
    %955 = vmatpush.msra.mxu0 0.0
    %956 = vmatpush.msra.mxu0 0.0
    %957 = vmatpush.msra.mxu0 0.0
    %958 = vmatpush.msra.mxu0 0.0
    %959 = vmatpush.msra.mxu0 0.0
    %960 = vmatpush.msra.mxu0 0.0
    %v961 = vand.u32 %v674, 4294901760
    %962 = vmatpush.msra.mxu0 %v961
    %v963 = vand.u32 %v672, 4294901760
    %964 = vmatpush.msra.mxu0 %v963
    %v965 = vand.u32 %v670, 4294901760
    %966 = vmatpush.msra.mxu0 %v965
    %v967 = vand.u32 %v668, 4294901760
    %968 = vmatpush.msra.mxu0 %v967
    %v969 = vand.u32 %v697, 4294901760
    %970 = vmatmul.f32.gmra.mxu0 %v969
    %v971 = vpop.f32.mrf.mxu0
    %v972 = vadd.f32 %v935, %v971
    %v973 = vand.u32 %v700, 4294901760
    %974 = vmatmul.f32.gmra.mxu0 %v973
    %v975 = vpop.f32.mrf.mxu0
    %v976 = vadd.f32 %v939, %v975
    %v977 = vand.u32 %v703, 4294901760
    %978 = vmatmul.f32.gmra.mxu0 %v977
    %v979 = vpop.f32.mrf.mxu0
    %v980 = vadd.f32 %v943, %v979
    %v981 = vand.u32 %v706, 4294901760
    %982 = vmatmul.f32.gmra.mxu0 %v981
    %v983 = vpop.f32.mrf.mxu0
    %v984 = vadd.f32 %v947, %v983
    %985 = vdwg.mxu0
    %986 = vmatpush.msra.mxu0 0.0
    %987 = vmatpush.msra.mxu0 0.0
    %988 = vmatpush.msra.mxu0 0.0
    %989 = vmatpush.msra.mxu0 0.0
    %990 = vmatpush.msra.mxu0 0.0
    %991 = vmatpush.msra.mxu0 0.0
    %992 = vmatpush.msra.mxu0 0.0
    %993 = vmatpush.msra.mxu0 0.0
    %994 = vmatpush.msra.mxu0 0.0
    %995 = vmatpush.msra.mxu0 0.0
    %996 = vmatpush.msra.mxu0 0.0
    %997 = vmatpush.msra.mxu0 0.0
    %v998 = vand.u32 %v675, 4294901760
    %999 = vmatpush.msra.mxu0 %v998
    %v1000 = vand.u32 %v673, 4294901760
    %1001 = vmatpush.msra.mxu0 %v1000
    %v1002 = vand.u32 %v671, 4294901760
    %1003 = vmatpush.msra.mxu0 %v1002
    %v1004 = vand.u32 %v669, 4294901760
    %1005 = vmatpush.msra.mxu0 %v1004
    %v1006 = vand.u32 %v697, 4294901760
    %v1007 = vsub.f32 %v697, %v1006
    %v1008 = vand.u32 %v1007, 4294901760
    %v1009 = vsub.f32 %v1007, %v1008
    %v1010 = vand.u32 %v1009, 4294901760
    %1011 = vmatmul.f32.gmra.mxu0 %v1010
    %v1012 = vpop.f32.mrf.mxu0
    %v1013 = vadd.f32 %v679, %v1012
    %v1014 = vand.u32 %v700, 4294901760
    %v1015 = vsub.f32 %v700, %v1014
    %v1016 = vand.u32 %v1015, 4294901760
    %v1017 = vsub.f32 %v1015, %v1016
    %v1018 = vand.u32 %v1017, 4294901760
    %1019 = vmatmul.f32.gmra.mxu0 %v1018
    %v1020 = vpop.f32.mrf.mxu0
    %v1021 = vadd.f32 %v684, %v1020
    %v1022 = vand.u32 %v703, 4294901760
    %v1023 = vsub.f32 %v703, %v1022
    %v1024 = vand.u32 %v1023, 4294901760
    %v1025 = vsub.f32 %v1023, %v1024
    %v1026 = vand.u32 %v1025, 4294901760
    %1027 = vmatmul.f32.gmra.mxu0 %v1026
    %v1028 = vpop.f32.mrf.mxu0
    %v1029 = vadd.f32 %v689, %v1028
    %v1030 = vand.u32 %v706, 4294901760
    %v1031 = vsub.f32 %v706, %v1030
    %v1032 = vand.u32 %v1031, 4294901760
    %v1033 = vsub.f32 %v1031, %v1032
    %v1034 = vand.u32 %v1033, 4294901760
    %1035 = vmatmul.f32.gmra.mxu0 %v1034
    %v1036 = vpop.f32.mrf.mxu0
    %v1037 = vadd.f32 %v694, %v1036
    %1038 = vdwg.mxu0
    %1039 = vmatpush.msra.mxu0 0.0
    %1040 = vmatpush.msra.mxu0 0.0
    %1041 = vmatpush.msra.mxu0 0.0
    %1042 = vmatpush.msra.mxu0 0.0
    %1043 = vmatpush.msra.mxu0 0.0
    %1044 = vmatpush.msra.mxu0 0.0
    %1045 = vmatpush.msra.mxu0 0.0
    %1046 = vmatpush.msra.mxu0 0.0
    %1047 = vmatpush.msra.mxu0 0.0
    %1048 = vmatpush.msra.mxu0 0.0
    %1049 = vmatpush.msra.mxu0 0.0
    %1050 = vmatpush.msra.mxu0 0.0
    %v1051 = vand.u32 %v675, 4294901760
    %v1052 = vsub.f32 %v675, %v1051
    %v1053 = vand.u32 %v1052, 4294901760
    %v1054 = vsub.f32 %v1052, %v1053
    %v1055 = vand.u32 %v1054, 4294901760
    %1056 = vmatpush.msra.mxu0 %v1055
    %v1057 = vand.u32 %v673, 4294901760
    %v1058 = vsub.f32 %v673, %v1057
    %v1059 = vand.u32 %v1058, 4294901760
    %v1060 = vsub.f32 %v1058, %v1059
    %v1061 = vand.u32 %v1060, 4294901760
    %1062 = vmatpush.msra.mxu0 %v1061
    %v1063 = vand.u32 %v671, 4294901760
    %v1064 = vsub.f32 %v671, %v1063
    %v1065 = vand.u32 %v1064, 4294901760
    %v1066 = vsub.f32 %v1064, %v1065
    %v1067 = vand.u32 %v1066, 4294901760
    %1068 = vmatpush.msra.mxu0 %v1067
    %v1069 = vand.u32 %v669, 4294901760
    %v1070 = vsub.f32 %v669, %v1069
    %v1071 = vand.u32 %v1070, 4294901760
    %v1072 = vsub.f32 %v1070, %v1071
    %v1073 = vand.u32 %v1072, 4294901760
    %1074 = vmatpush.msra.mxu0 %v1073
    %v1075 = vand.u32 %v697, 4294901760
    %1076 = vmatmul.f32.gmra.mxu0 %v1075
    %v1077 = vpop.f32.mrf.mxu0
    %v1078 = vadd.f32 %v1013, %v1077
    %v1079 = vand.u32 %v700, 4294901760
    %1080 = vmatmul.f32.gmra.mxu0 %v1079
    %v1081 = vpop.f32.mrf.mxu0
    %v1082 = vadd.f32 %v1021, %v1081
    %v1083 = vand.u32 %v703, 4294901760
    %1084 = vmatmul.f32.gmra.mxu0 %v1083
    %v1085 = vpop.f32.mrf.mxu0
    %v1086 = vadd.f32 %v1029, %v1085
    %v1087 = vand.u32 %v706, 4294901760
    %1088 = vmatmul.f32.gmra.mxu0 %v1087
    %v1089 = vpop.f32.mrf.mxu0
    %v1090 = vadd.f32 %v1037, %v1089
    %1091 = vdwg.mxu0
    %1092 = vmatpush.msra.mxu0 0.0
    %1093 = vmatpush.msra.mxu0 0.0
    %1094 = vmatpush.msra.mxu0 0.0
    %1095 = vmatpush.msra.mxu0 0.0
    %1096 = vmatpush.msra.mxu0 0.0
    %1097 = vmatpush.msra.mxu0 0.0
    %1098 = vmatpush.msra.mxu0 0.0
    %1099 = vmatpush.msra.mxu0 0.0
    %1100 = vmatpush.msra.mxu0 0.0
    %1101 = vmatpush.msra.mxu0 0.0
    %1102 = vmatpush.msra.mxu0 0.0
    %1103 = vmatpush.msra.mxu0 0.0
    %v1104 = vand.u32 %v675, 4294901760
    %v1105 = vsub.f32 %v675, %v1104
    %1106 = vmatpush.msra.mxu0 %v1105
    %v1107 = vand.u32 %v673, 4294901760
    %v1108 = vsub.f32 %v673, %v1107
    %1109 = vmatpush.msra.mxu0 %v1108
    %v1110 = vand.u32 %v671, 4294901760
    %v1111 = vsub.f32 %v671, %v1110
    %1112 = vmatpush.msra.mxu0 %v1111
    %v1113 = vand.u32 %v669, 4294901760
    %v1114 = vsub.f32 %v669, %v1113
    %1115 = vmatpush.msra.mxu0 %v1114
    %v1116 = vand.u32 %v697, 4294901760
    %v1117 = vsub.f32 %v697, %v1116
    %1118 = vmatmul.f32.gmra.mxu0 %v1117
    %v1119 = vpop.f32.mrf.mxu0
    %v1120 = vadd.f32 %v1078, %v1119
    %v1121 = vand.u32 %v700, 4294901760
    %v1122 = vsub.f32 %v700, %v1121
    %1123 = vmatmul.f32.gmra.mxu0 %v1122
    %v1124 = vpop.f32.mrf.mxu0
    %v1125 = vadd.f32 %v1082, %v1124
    %v1126 = vand.u32 %v703, 4294901760
    %v1127 = vsub.f32 %v703, %v1126
    %1128 = vmatmul.f32.gmra.mxu0 %v1127
    %v1129 = vpop.f32.mrf.mxu0
    %v1130 = vadd.f32 %v1086, %v1129
    %v1131 = vand.u32 %v706, 4294901760
    %v1132 = vsub.f32 %v706, %v1131
    %1133 = vmatmul.f32.gmra.mxu0 %v1132
    %v1134 = vpop.f32.mrf.mxu0
    %v1135 = vadd.f32 %v1090, %v1134
    %1136 = vdwg.mxu0
    %1137 = vmatpush.msra.mxu0 0.0
    %1138 = vmatpush.msra.mxu0 0.0
    %1139 = vmatpush.msra.mxu0 0.0
    %1140 = vmatpush.msra.mxu0 0.0
    %1141 = vmatpush.msra.mxu0 0.0
    %1142 = vmatpush.msra.mxu0 0.0
    %1143 = vmatpush.msra.mxu0 0.0
    %1144 = vmatpush.msra.mxu0 0.0
    %1145 = vmatpush.msra.mxu0 0.0
    %1146 = vmatpush.msra.mxu0 0.0
    %1147 = vmatpush.msra.mxu0 0.0
    %1148 = vmatpush.msra.mxu0 0.0
    %v1149 = vand.u32 %v675, 4294901760
    %1150 = vmatpush.msra.mxu0 %v1149
    %v1151 = vand.u32 %v673, 4294901760
    %1152 = vmatpush.msra.mxu0 %v1151
    %v1153 = vand.u32 %v671, 4294901760
    %1154 = vmatpush.msra.mxu0 %v1153
    %v1155 = vand.u32 %v669, 4294901760
    %1156 = vmatpush.msra.mxu0 %v1155
    %v1157 = vand.u32 %v697, 4294901760
    %v1158 = vsub.f32 %v697, %v1157
    %v1159 = vand.u32 %v1158, 4294901760
    %1160 = vmatmul.f32.gmra.mxu0 %v1159
    %v1161 = vpop.f32.mrf.mxu0
    %v1162 = vadd.f32 %v1120, %v1161
    %v1163 = vand.u32 %v700, 4294901760
    %v1164 = vsub.f32 %v700, %v1163
    %v1165 = vand.u32 %v1164, 4294901760
    %1166 = vmatmul.f32.gmra.mxu0 %v1165
    %v1167 = vpop.f32.mrf.mxu0
    %v1168 = vadd.f32 %v1125, %v1167
    %v1169 = vand.u32 %v703, 4294901760
    %v1170 = vsub.f32 %v703, %v1169
    %v1171 = vand.u32 %v1170, 4294901760
    %1172 = vmatmul.f32.gmra.mxu0 %v1171
    %v1173 = vpop.f32.mrf.mxu0
    %v1174 = vadd.f32 %v1130, %v1173
    %v1175 = vand.u32 %v706, 4294901760
    %v1176 = vsub.f32 %v706, %v1175
    %v1177 = vand.u32 %v1176, 4294901760
    %1178 = vmatmul.f32.gmra.mxu0 %v1177
    %v1179 = vpop.f32.mrf.mxu0
    %v1180 = vadd.f32 %v1135, %v1179
    %1181 = vdwg.mxu0
    %1182 = vmatpush.msra.mxu0 0.0
    %1183 = vmatpush.msra.mxu0 0.0
    %1184 = vmatpush.msra.mxu0 0.0
    %1185 = vmatpush.msra.mxu0 0.0
    %1186 = vmatpush.msra.mxu0 0.0
    %1187 = vmatpush.msra.mxu0 0.0
    %1188 = vmatpush.msra.mxu0 0.0
    %1189 = vmatpush.msra.mxu0 0.0
    %1190 = vmatpush.msra.mxu0 0.0
    %1191 = vmatpush.msra.mxu0 0.0
    %1192 = vmatpush.msra.mxu0 0.0
    %1193 = vmatpush.msra.mxu0 0.0
    %v1194 = vand.u32 %v675, 4294901760
    %v1195 = vsub.f32 %v675, %v1194
    %v1196 = vand.u32 %v1195, 4294901760
    %1197 = vmatpush.msra.mxu0 %v1196
    %v1198 = vand.u32 %v673, 4294901760
    %v1199 = vsub.f32 %v673, %v1198
    %v1200 = vand.u32 %v1199, 4294901760
    %1201 = vmatpush.msra.mxu0 %v1200
    %v1202 = vand.u32 %v671, 4294901760
    %v1203 = vsub.f32 %v671, %v1202
    %v1204 = vand.u32 %v1203, 4294901760
    %1205 = vmatpush.msra.mxu0 %v1204
    %v1206 = vand.u32 %v669, 4294901760
    %v1207 = vsub.f32 %v669, %v1206
    %v1208 = vand.u32 %v1207, 4294901760
    %1209 = vmatpush.msra.mxu0 %v1208
    %v1210 = vand.u32 %v697, 4294901760
    %1211 = vmatmul.f32.gmra.mxu0 %v1210
    %v1212 = vpop.f32.mrf.mxu0
    %v1213 = vadd.f32 %v1162, %v1212
    %v1214 = vand.u32 %v700, 4294901760
    %1215 = vmatmul.f32.gmra.mxu0 %v1214
    %v1216 = vpop.f32.mrf.mxu0
    %v1217 = vadd.f32 %v1168, %v1216
    %v1218 = vand.u32 %v703, 4294901760
    %1219 = vmatmul.f32.gmra.mxu0 %v1218
    %v1220 = vpop.f32.mrf.mxu0
    %v1221 = vadd.f32 %v1174, %v1220
    %v1222 = vand.u32 %v706, 4294901760
    %1223 = vmatmul.f32.gmra.mxu0 %v1222
    %v1224 = vpop.f32.mrf.mxu0
    %v1225 = vadd.f32 %v1180, %v1224
    %1226 = vdwg.mxu0
    %1227 = vmatpush.msra.mxu0 0.0
    %1228 = vmatpush.msra.mxu0 0.0
    %1229 = vmatpush.msra.mxu0 0.0
    %1230 = vmatpush.msra.mxu0 0.0
    %1231 = vmatpush.msra.mxu0 0.0
    %1232 = vmatpush.msra.mxu0 0.0
    %1233 = vmatpush.msra.mxu0 0.0
    %1234 = vmatpush.msra.mxu0 0.0
    %1235 = vmatpush.msra.mxu0 0.0
    %1236 = vmatpush.msra.mxu0 0.0
    %1237 = vmatpush.msra.mxu0 0.0
    %1238 = vmatpush.msra.mxu0 0.0
    %v1239 = vand.u32 %v675, 4294901760
    %1240 = vmatpush.msra.mxu0 %v1239
    %v1241 = vand.u32 %v673, 4294901760
    %1242 = vmatpush.msra.mxu0 %v1241
    %v1243 = vand.u32 %v671, 4294901760
    %1244 = vmatpush.msra.mxu0 %v1243
    %v1245 = vand.u32 %v669, 4294901760
    %1246 = vmatpush.msra.mxu0 %v1245
    %v1247 = vand.u32 %v697, 4294901760
    %1248 = vmatmul.f32.gmra.mxu0 %v1247
    %v1249 = vpop.f32.mrf.mxu0
    %v1250 = vadd.f32 %v1213, %v1249
    %v1251 = vand.u32 %v700, 4294901760
    %1252 = vmatmul.f32.gmra.mxu0 %v1251
    %v1253 = vpop.f32.mrf.mxu0
    %v1254 = vadd.f32 %v1217, %v1253
    %v1255 = vand.u32 %v703, 4294901760
    %1256 = vmatmul.f32.gmra.mxu0 %v1255
    %v1257 = vpop.f32.mrf.mxu0
    %v1258 = vadd.f32 %v1221, %v1257
    %v1259 = vand.u32 %v706, 4294901760
    %1260 = vmatmul.f32.gmra.mxu0 %v1259
    %v1261 = vpop.f32.mrf.mxu0
    %v1262 = vadd.f32 %v1225, %v1261
    %1263 = vdwg.mxu0
    %v1264 = vmul.f32 %v972, 0.01
    %v1265 = vmul.f32 %v1250, 0.01
    %v1266 = vmul.f32 %v976, 0.01
    %v1267 = vmul.f32 %v1254, 0.01
    %v1268 = vmul.f32 %v980, 0.01
    %v1269 = vmul.f32 %v1258, 0.01
    %v1270 = vmul.f32 %v984, 0.01
    %v1271 = vmul.f32 %v1262, 0.01
    %v1272 = vmax.f32 %v972, %v1264
    %v1273 = vmax.f32 %v1250, %v1265
    %v1274 = vmax.f32 %v976, %v1266
    %v1275 = vmax.f32 %v1254, %v1267
    %v1276 = vmax.f32 %v980, %v1268
    %v1277 = vmax.f32 %v1258, %v1269
    %v1278 = vmax.f32 %v984, %v1270
    %v1279 = vmax.f32 %v1262, %v1271
    %1281 = vset.pattern.permute.xlu0 0
    %1282 = vperm.xlu0 %1281, %v61
    %v1283 = vpop.permute.xlu0 %1282
    %1286 = vset.pattern.permute.xlu0 0
    %1287 = vperm.xlu0 %1286, %v62
    %v1288 = vpop.permute.xlu0 %1287
    %v1291 = vsel %vm91, %v59, 0
    %v1294 = vsel %vm91, %v60, 0
    %1296 = vmatpush.msra.mxu0 0.0
    %1297 = vmatpush.msra.mxu0 0.0
    %1298 = vmatpush.msra.mxu0 0.0
    %1299 = vmatpush.msra.mxu0 0.0
    %1300 = vmatpush.msra.mxu0 0.0
    %1301 = vmatpush.msra.mxu0 0.0
    %1302 = vmatpush.msra.mxu0 0.0
    %1303 = vmatpush.msra.mxu0 0.0
    %1304 = vmatpush.msra.mxu0 0.0
    %1305 = vmatpush.msra.mxu0 0.0
    %1306 = vmatpush.msra.mxu0 0.0
    %1307 = vmatpush.msra.mxu0 0.0
    %v1308 = vand.u32 %v1278, 4294901760
    %1309 = vmatpush.msra.mxu0 %v1308
    %v1310 = vand.u32 %v1276, 4294901760
    %1311 = vmatpush.msra.mxu0 %v1310
    %v1312 = vand.u32 %v1274, 4294901760
    %1313 = vmatpush.msra.mxu0 %v1312
    %v1314 = vand.u32 %v1272, 4294901760
    %1315 = vmatpush.msra.mxu0 %v1314
    %v1316 = vand.u32 %v1291, 4294901760
    %v1317 = vsub.f32 %v1291, %v1316
    %v1318 = vand.u32 %v1317, 4294901760
    %v1319 = vsub.f32 %v1317, %v1318
    %v1320 = vand.u32 %v1319, 4294901760
    %1321 = vmatmul.f32.gmra.mxu0 %v1320
    %v1322 = vpop.f32.mrf.mxu0
    %v1323 = vadd.f32 %v1283, %v1322
    %v1324 = vand.u32 %v1294, 4294901760
    %v1325 = vsub.f32 %v1294, %v1324
    %v1326 = vand.u32 %v1325, 4294901760
    %v1327 = vsub.f32 %v1325, %v1326
    %v1328 = vand.u32 %v1327, 4294901760
    %1329 = vmatmul.f32.gmra.mxu0 %v1328
    %v1330 = vpop.f32.mrf.mxu0
    %v1331 = vadd.f32 %v1288, %v1330
    %1332 = vdwg.mxu0
    %1333 = vmatpush.msra.mxu0 0.0
    %1334 = vmatpush.msra.mxu0 0.0
    %1335 = vmatpush.msra.mxu0 0.0
    %1336 = vmatpush.msra.mxu0 0.0
    %1337 = vmatpush.msra.mxu0 0.0
    %1338 = vmatpush.msra.mxu0 0.0
    %1339 = vmatpush.msra.mxu0 0.0
    %1340 = vmatpush.msra.mxu0 0.0
    %1341 = vmatpush.msra.mxu0 0.0
    %1342 = vmatpush.msra.mxu0 0.0
    %1343 = vmatpush.msra.mxu0 0.0
    %1344 = vmatpush.msra.mxu0 0.0
    %v1345 = vand.u32 %v1278, 4294901760
    %v1346 = vsub.f32 %v1278, %v1345
    %v1347 = vand.u32 %v1346, 4294901760
    %v1348 = vsub.f32 %v1346, %v1347
    %v1349 = vand.u32 %v1348, 4294901760
    %1350 = vmatpush.msra.mxu0 %v1349
    %v1351 = vand.u32 %v1276, 4294901760
    %v1352 = vsub.f32 %v1276, %v1351
    %v1353 = vand.u32 %v1352, 4294901760
    %v1354 = vsub.f32 %v1352, %v1353
    %v1355 = vand.u32 %v1354, 4294901760
    %1356 = vmatpush.msra.mxu0 %v1355
    %v1357 = vand.u32 %v1274, 4294901760
    %v1358 = vsub.f32 %v1274, %v1357
    %v1359 = vand.u32 %v1358, 4294901760
    %v1360 = vsub.f32 %v1358, %v1359
    %v1361 = vand.u32 %v1360, 4294901760
    %1362 = vmatpush.msra.mxu0 %v1361
    %v1363 = vand.u32 %v1272, 4294901760
    %v1364 = vsub.f32 %v1272, %v1363
    %v1365 = vand.u32 %v1364, 4294901760
    %v1366 = vsub.f32 %v1364, %v1365
    %v1367 = vand.u32 %v1366, 4294901760
    %1368 = vmatpush.msra.mxu0 %v1367
    %v1369 = vand.u32 %v1291, 4294901760
    %1370 = vmatmul.f32.gmra.mxu0 %v1369
    %v1371 = vpop.f32.mrf.mxu0
    %v1372 = vadd.f32 %v1323, %v1371
    %v1373 = vand.u32 %v1294, 4294901760
    %1374 = vmatmul.f32.gmra.mxu0 %v1373
    %v1375 = vpop.f32.mrf.mxu0
    %v1376 = vadd.f32 %v1331, %v1375
    %1377 = vdwg.mxu0
    %1378 = vmatpush.msra.mxu0 0.0
    %1379 = vmatpush.msra.mxu0 0.0
    %1380 = vmatpush.msra.mxu0 0.0
    %1381 = vmatpush.msra.mxu0 0.0
    %1382 = vmatpush.msra.mxu0 0.0
    %1383 = vmatpush.msra.mxu0 0.0
    %1384 = vmatpush.msra.mxu0 0.0
    %1385 = vmatpush.msra.mxu0 0.0
    %1386 = vmatpush.msra.mxu0 0.0
    %1387 = vmatpush.msra.mxu0 0.0
    %1388 = vmatpush.msra.mxu0 0.0
    %1389 = vmatpush.msra.mxu0 0.0
    %v1390 = vand.u32 %v1278, 4294901760
    %v1391 = vsub.f32 %v1278, %v1390
    %1392 = vmatpush.msra.mxu0 %v1391
    %v1393 = vand.u32 %v1276, 4294901760
    %v1394 = vsub.f32 %v1276, %v1393
    %1395 = vmatpush.msra.mxu0 %v1394
    %v1396 = vand.u32 %v1274, 4294901760
    %v1397 = vsub.f32 %v1274, %v1396
    %1398 = vmatpush.msra.mxu0 %v1397
    %v1399 = vand.u32 %v1272, 4294901760
    %v1400 = vsub.f32 %v1272, %v1399
    %1401 = vmatpush.msra.mxu0 %v1400
    %v1402 = vand.u32 %v1291, 4294901760
    %v1403 = vsub.f32 %v1291, %v1402
    %1404 = vmatmul.f32.gmra.mxu0 %v1403
    %v1405 = vpop.f32.mrf.mxu0
    %v1406 = vadd.f32 %v1372, %v1405
    %v1407 = vand.u32 %v1294, 4294901760
    %v1408 = vsub.f32 %v1294, %v1407
    %1409 = vmatmul.f32.gmra.mxu0 %v1408
    %v1410 = vpop.f32.mrf.mxu0
    %v1411 = vadd.f32 %v1376, %v1410
    %1412 = vdwg.mxu0
    %1413 = vmatpush.msra.mxu0 0.0
    %1414 = vmatpush.msra.mxu0 0.0
    %1415 = vmatpush.msra.mxu0 0.0
    %1416 = vmatpush.msra.mxu0 0.0
    %1417 = vmatpush.msra.mxu0 0.0
    %1418 = vmatpush.msra.mxu0 0.0
    %1419 = vmatpush.msra.mxu0 0.0
    %1420 = vmatpush.msra.mxu0 0.0
    %1421 = vmatpush.msra.mxu0 0.0
    %1422 = vmatpush.msra.mxu0 0.0
    %1423 = vmatpush.msra.mxu0 0.0
    %1424 = vmatpush.msra.mxu0 0.0
    %v1425 = vand.u32 %v1278, 4294901760
    %1426 = vmatpush.msra.mxu0 %v1425
    %v1427 = vand.u32 %v1276, 4294901760
    %1428 = vmatpush.msra.mxu0 %v1427
    %v1429 = vand.u32 %v1274, 4294901760
    %1430 = vmatpush.msra.mxu0 %v1429
    %v1431 = vand.u32 %v1272, 4294901760
    %1432 = vmatpush.msra.mxu0 %v1431
    %v1433 = vand.u32 %v1291, 4294901760
    %v1434 = vsub.f32 %v1291, %v1433
    %v1435 = vand.u32 %v1434, 4294901760
    %1436 = vmatmul.f32.gmra.mxu0 %v1435
    %v1437 = vpop.f32.mrf.mxu0
    %v1438 = vadd.f32 %v1406, %v1437
    %v1439 = vand.u32 %v1294, 4294901760
    %v1440 = vsub.f32 %v1294, %v1439
    %v1441 = vand.u32 %v1440, 4294901760
    %1442 = vmatmul.f32.gmra.mxu0 %v1441
    %v1443 = vpop.f32.mrf.mxu0
    %v1444 = vadd.f32 %v1411, %v1443
    %1445 = vdwg.mxu0
    %1446 = vmatpush.msra.mxu0 0.0
    %1447 = vmatpush.msra.mxu0 0.0
    %1448 = vmatpush.msra.mxu0 0.0
    %1449 = vmatpush.msra.mxu0 0.0
    %1450 = vmatpush.msra.mxu0 0.0
    %1451 = vmatpush.msra.mxu0 0.0
    %1452 = vmatpush.msra.mxu0 0.0
    %1453 = vmatpush.msra.mxu0 0.0
    %1454 = vmatpush.msra.mxu0 0.0
    %1455 = vmatpush.msra.mxu0 0.0
    %1456 = vmatpush.msra.mxu0 0.0
    %1457 = vmatpush.msra.mxu0 0.0
    %v1458 = vand.u32 %v1278, 4294901760
    %v1459 = vsub.f32 %v1278, %v1458
    %v1460 = vand.u32 %v1459, 4294901760
    %1461 = vmatpush.msra.mxu0 %v1460
    %v1462 = vand.u32 %v1276, 4294901760
    %v1463 = vsub.f32 %v1276, %v1462
    %v1464 = vand.u32 %v1463, 4294901760
    %1465 = vmatpush.msra.mxu0 %v1464
    %v1466 = vand.u32 %v1274, 4294901760
    %v1467 = vsub.f32 %v1274, %v1466
    %v1468 = vand.u32 %v1467, 4294901760
    %1469 = vmatpush.msra.mxu0 %v1468
    %v1470 = vand.u32 %v1272, 4294901760
    %v1471 = vsub.f32 %v1272, %v1470
    %v1472 = vand.u32 %v1471, 4294901760
    %1473 = vmatpush.msra.mxu0 %v1472
    %v1474 = vand.u32 %v1291, 4294901760
    %1475 = vmatmul.f32.gmra.mxu0 %v1474
    %v1476 = vpop.f32.mrf.mxu0
    %v1477 = vadd.f32 %v1438, %v1476
    %v1478 = vand.u32 %v1294, 4294901760
    %1479 = vmatmul.f32.gmra.mxu0 %v1478
    %v1480 = vpop.f32.mrf.mxu0
    %v1481 = vadd.f32 %v1444, %v1480
    %1482 = vdwg.mxu0
    %1483 = vmatpush.msra.mxu0 0.0
    %1484 = vmatpush.msra.mxu0 0.0
    %1485 = vmatpush.msra.mxu0 0.0
    %1486 = vmatpush.msra.mxu0 0.0
    %1487 = vmatpush.msra.mxu0 0.0
    %1488 = vmatpush.msra.mxu0 0.0
    %1489 = vmatpush.msra.mxu0 0.0
    %1490 = vmatpush.msra.mxu0 0.0
    %1491 = vmatpush.msra.mxu0 0.0
    %1492 = vmatpush.msra.mxu0 0.0
    %1493 = vmatpush.msra.mxu0 0.0
    %1494 = vmatpush.msra.mxu0 0.0
    %v1495 = vand.u32 %v1278, 4294901760
    %1496 = vmatpush.msra.mxu0 %v1495
    %v1497 = vand.u32 %v1276, 4294901760
    %1498 = vmatpush.msra.mxu0 %v1497
    %v1499 = vand.u32 %v1274, 4294901760
    %1500 = vmatpush.msra.mxu0 %v1499
    %v1501 = vand.u32 %v1272, 4294901760
    %1502 = vmatpush.msra.mxu0 %v1501
    %v1503 = vand.u32 %v1291, 4294901760
    %1504 = vmatmul.f32.gmra.mxu0 %v1503
    %v1505 = vpop.f32.mrf.mxu0
    %v1506 = vadd.f32 %v1477, %v1505
    %v1507 = vand.u32 %v1294, 4294901760
    %1508 = vmatmul.f32.gmra.mxu0 %v1507
    %v1509 = vpop.f32.mrf.mxu0
    %v1510 = vadd.f32 %v1481, %v1509
    %1511 = vdwg.mxu0
    %1512 = vmatpush.msra.mxu0 0.0
    %1513 = vmatpush.msra.mxu0 0.0
    %1514 = vmatpush.msra.mxu0 0.0
    %1515 = vmatpush.msra.mxu0 0.0
    %1516 = vmatpush.msra.mxu0 0.0
    %1517 = vmatpush.msra.mxu0 0.0
    %1518 = vmatpush.msra.mxu0 0.0
    %1519 = vmatpush.msra.mxu0 0.0
    %1520 = vmatpush.msra.mxu0 0.0
    %1521 = vmatpush.msra.mxu0 0.0
    %1522 = vmatpush.msra.mxu0 0.0
    %1523 = vmatpush.msra.mxu0 0.0
    %v1524 = vand.u32 %v1279, 4294901760
    %1525 = vmatpush.msra.mxu0 %v1524
    %v1526 = vand.u32 %v1277, 4294901760
    %1527 = vmatpush.msra.mxu0 %v1526
    %v1528 = vand.u32 %v1275, 4294901760
    %1529 = vmatpush.msra.mxu0 %v1528
    %v1530 = vand.u32 %v1273, 4294901760
    %1531 = vmatpush.msra.mxu0 %v1530
    %v1532 = vand.u32 %v1291, 4294901760
    %v1533 = vsub.f32 %v1291, %v1532
    %v1534 = vand.u32 %v1533, 4294901760
    %v1535 = vsub.f32 %v1533, %v1534
    %v1536 = vand.u32 %v1535, 4294901760
    %1537 = vmatmul.f32.gmra.mxu0 %v1536
    %v1538 = vpop.f32.mrf.mxu0
    %v1539 = vadd.f32 %v1283, %v1538
    %v1540 = vand.u32 %v1294, 4294901760
    %v1541 = vsub.f32 %v1294, %v1540
    %v1542 = vand.u32 %v1541, 4294901760
    %v1543 = vsub.f32 %v1541, %v1542
    %v1544 = vand.u32 %v1543, 4294901760
    %1545 = vmatmul.f32.gmra.mxu0 %v1544
    %v1546 = vpop.f32.mrf.mxu0
    %v1547 = vadd.f32 %v1288, %v1546
    %1548 = vdwg.mxu0
    %1549 = vmatpush.msra.mxu0 0.0
    %1550 = vmatpush.msra.mxu0 0.0
    %1551 = vmatpush.msra.mxu0 0.0
    %1552 = vmatpush.msra.mxu0 0.0
    %1553 = vmatpush.msra.mxu0 0.0
    %1554 = vmatpush.msra.mxu0 0.0
    %1555 = vmatpush.msra.mxu0 0.0
    %1556 = vmatpush.msra.mxu0 0.0
    %1557 = vmatpush.msra.mxu0 0.0
    %1558 = vmatpush.msra.mxu0 0.0
    %1559 = vmatpush.msra.mxu0 0.0
    %1560 = vmatpush.msra.mxu0 0.0
    %v1561 = vand.u32 %v1279, 4294901760
    %v1562 = vsub.f32 %v1279, %v1561
    %v1563 = vand.u32 %v1562, 4294901760
    %v1564 = vsub.f32 %v1562, %v1563
    %v1565 = vand.u32 %v1564, 4294901760
    %1566 = vmatpush.msra.mxu0 %v1565
    %v1567 = vand.u32 %v1277, 4294901760
    %v1568 = vsub.f32 %v1277, %v1567
    %v1569 = vand.u32 %v1568, 4294901760
    %v1570 = vsub.f32 %v1568, %v1569
    %v1571 = vand.u32 %v1570, 4294901760
    %1572 = vmatpush.msra.mxu0 %v1571
    %v1573 = vand.u32 %v1275, 4294901760
    %v1574 = vsub.f32 %v1275, %v1573
    %v1575 = vand.u32 %v1574, 4294901760
    %v1576 = vsub.f32 %v1574, %v1575
    %v1577 = vand.u32 %v1576, 4294901760
    %1578 = vmatpush.msra.mxu0 %v1577
    %v1579 = vand.u32 %v1273, 4294901760
    %v1580 = vsub.f32 %v1273, %v1579
    %v1581 = vand.u32 %v1580, 4294901760
    %v1582 = vsub.f32 %v1580, %v1581
    %v1583 = vand.u32 %v1582, 4294901760
    %1584 = vmatpush.msra.mxu0 %v1583
    %v1585 = vand.u32 %v1291, 4294901760
    %1586 = vmatmul.f32.gmra.mxu0 %v1585
    %v1587 = vpop.f32.mrf.mxu0
    %v1588 = vadd.f32 %v1539, %v1587
    %v1589 = vand.u32 %v1294, 4294901760
    %1590 = vmatmul.f32.gmra.mxu0 %v1589
    %v1591 = vpop.f32.mrf.mxu0
    %v1592 = vadd.f32 %v1547, %v1591
    %1593 = vdwg.mxu0
    %1594 = vmatpush.msra.mxu0 0.0
    %1595 = vmatpush.msra.mxu0 0.0
    %1596 = vmatpush.msra.mxu0 0.0
    %1597 = vmatpush.msra.mxu0 0.0
    %1598 = vmatpush.msra.mxu0 0.0
    %1599 = vmatpush.msra.mxu0 0.0
    %1600 = vmatpush.msra.mxu0 0.0
    %1601 = vmatpush.msra.mxu0 0.0
    %1602 = vmatpush.msra.mxu0 0.0
    %1603 = vmatpush.msra.mxu0 0.0
    %1604 = vmatpush.msra.mxu0 0.0
    %1605 = vmatpush.msra.mxu0 0.0
    %v1606 = vand.u32 %v1279, 4294901760
    %v1607 = vsub.f32 %v1279, %v1606
    %1608 = vmatpush.msra.mxu0 %v1607
    %v1609 = vand.u32 %v1277, 4294901760
    %v1610 = vsub.f32 %v1277, %v1609
    %1611 = vmatpush.msra.mxu0 %v1610
    %v1612 = vand.u32 %v1275, 4294901760
    %v1613 = vsub.f32 %v1275, %v1612
    %1614 = vmatpush.msra.mxu0 %v1613
    %v1615 = vand.u32 %v1273, 4294901760
    %v1616 = vsub.f32 %v1273, %v1615
    %1617 = vmatpush.msra.mxu0 %v1616
    %v1618 = vand.u32 %v1291, 4294901760
    %v1619 = vsub.f32 %v1291, %v1618
    %1620 = vmatmul.f32.gmra.mxu0 %v1619
    %v1621 = vpop.f32.mrf.mxu0
    %v1622 = vadd.f32 %v1588, %v1621
    %v1623 = vand.u32 %v1294, 4294901760
    %v1624 = vsub.f32 %v1294, %v1623
    %1625 = vmatmul.f32.gmra.mxu0 %v1624
    %v1626 = vpop.f32.mrf.mxu0
    %v1627 = vadd.f32 %v1592, %v1626
    %1628 = vdwg.mxu0
    %1629 = vmatpush.msra.mxu0 0.0
    %1630 = vmatpush.msra.mxu0 0.0
    %1631 = vmatpush.msra.mxu0 0.0
    %1632 = vmatpush.msra.mxu0 0.0
    %1633 = vmatpush.msra.mxu0 0.0
    %1634 = vmatpush.msra.mxu0 0.0
    %1635 = vmatpush.msra.mxu0 0.0
    %1636 = vmatpush.msra.mxu0 0.0
    %1637 = vmatpush.msra.mxu0 0.0
    %1638 = vmatpush.msra.mxu0 0.0
    %1639 = vmatpush.msra.mxu0 0.0
    %1640 = vmatpush.msra.mxu0 0.0
    %v1641 = vand.u32 %v1279, 4294901760
    %1642 = vmatpush.msra.mxu0 %v1641
    %v1643 = vand.u32 %v1277, 4294901760
    %1644 = vmatpush.msra.mxu0 %v1643
    %v1645 = vand.u32 %v1275, 4294901760
    %1646 = vmatpush.msra.mxu0 %v1645
    %v1647 = vand.u32 %v1273, 4294901760
    %1648 = vmatpush.msra.mxu0 %v1647
    %v1649 = vand.u32 %v1291, 4294901760
    %v1650 = vsub.f32 %v1291, %v1649
    %v1651 = vand.u32 %v1650, 4294901760
    %1652 = vmatmul.f32.gmra.mxu0 %v1651
    %v1653 = vpop.f32.mrf.mxu0
    %v1654 = vadd.f32 %v1622, %v1653
    %v1655 = vand.u32 %v1294, 4294901760
    %v1656 = vsub.f32 %v1294, %v1655
    %v1657 = vand.u32 %v1656, 4294901760
    %1658 = vmatmul.f32.gmra.mxu0 %v1657
    %v1659 = vpop.f32.mrf.mxu0
    %v1660 = vadd.f32 %v1627, %v1659
    %1661 = vdwg.mxu0
    %1662 = vmatpush.msra.mxu0 0.0
    %1663 = vmatpush.msra.mxu0 0.0
    %1664 = vmatpush.msra.mxu0 0.0
    %1665 = vmatpush.msra.mxu0 0.0
    %1666 = vmatpush.msra.mxu0 0.0
    %1667 = vmatpush.msra.mxu0 0.0
    %1668 = vmatpush.msra.mxu0 0.0
    %1669 = vmatpush.msra.mxu0 0.0
    %1670 = vmatpush.msra.mxu0 0.0
    %1671 = vmatpush.msra.mxu0 0.0
    %1672 = vmatpush.msra.mxu0 0.0
    %1673 = vmatpush.msra.mxu0 0.0
    %v1674 = vand.u32 %v1279, 4294901760
    %v1675 = vsub.f32 %v1279, %v1674
    %v1676 = vand.u32 %v1675, 4294901760
    %1677 = vmatpush.msra.mxu0 %v1676
    %v1678 = vand.u32 %v1277, 4294901760
    %v1679 = vsub.f32 %v1277, %v1678
    %v1680 = vand.u32 %v1679, 4294901760
    %1681 = vmatpush.msra.mxu0 %v1680
    %v1682 = vand.u32 %v1275, 4294901760
    %v1683 = vsub.f32 %v1275, %v1682
    %v1684 = vand.u32 %v1683, 4294901760
    %1685 = vmatpush.msra.mxu0 %v1684
    %v1686 = vand.u32 %v1273, 4294901760
    %v1687 = vsub.f32 %v1273, %v1686
    %v1688 = vand.u32 %v1687, 4294901760
    %1689 = vmatpush.msra.mxu0 %v1688
    %v1690 = vand.u32 %v1291, 4294901760
    %1691 = vmatmul.f32.gmra.mxu0 %v1690
    %v1692 = vpop.f32.mrf.mxu0
    %v1693 = vadd.f32 %v1654, %v1692
    %v1694 = vand.u32 %v1294, 4294901760
    %1695 = vmatmul.f32.gmra.mxu0 %v1694
    %v1696 = vpop.f32.mrf.mxu0
    %v1697 = vadd.f32 %v1660, %v1696
    %1698 = vdwg.mxu0
    %1699 = vmatpush.msra.mxu0 0.0
    %1700 = vmatpush.msra.mxu0 0.0
    %1701 = vmatpush.msra.mxu0 0.0
    %1702 = vmatpush.msra.mxu0 0.0
    %1703 = vmatpush.msra.mxu0 0.0
    %1704 = vmatpush.msra.mxu0 0.0
    %1705 = vmatpush.msra.mxu0 0.0
    %1706 = vmatpush.msra.mxu0 0.0
    %1707 = vmatpush.msra.mxu0 0.0
    %1708 = vmatpush.msra.mxu0 0.0
    %1709 = vmatpush.msra.mxu0 0.0
    %1710 = vmatpush.msra.mxu0 0.0
    %v1711 = vand.u32 %v1279, 4294901760
    %1712 = vmatpush.msra.mxu0 %v1711
    %v1713 = vand.u32 %v1277, 4294901760
    %1714 = vmatpush.msra.mxu0 %v1713
    %v1715 = vand.u32 %v1275, 4294901760
    %1716 = vmatpush.msra.mxu0 %v1715
    %v1717 = vand.u32 %v1273, 4294901760
    %1718 = vmatpush.msra.mxu0 %v1717
    %v1719 = vand.u32 %v1291, 4294901760
    %1720 = vmatmul.f32.gmra.mxu0 %v1719
    %v1721 = vpop.f32.mrf.mxu0
    %v1722 = vadd.f32 %v1693, %v1721
    %v1723 = vand.u32 %v1294, 4294901760
    %1724 = vmatmul.f32.gmra.mxu0 %v1723
    %v1725 = vpop.f32.mrf.mxu0
    %v1726 = vadd.f32 %v1697, %v1725
    %1727 = vdwg.mxu0
    %1728 = vst [vmem:[#allocation5] sm:$0xff] %v1506
    %1729 = vst [vmem:[#allocation5 + $0x8] sm:$0xff] %v1722
    %1730 = vst [vmem:[#allocation5 + $0x10] sm:$0xff] %v1510
    %1731 = vst [vmem:[#allocation5 + $0x18] sm:$0xff] %v1726
    %s1732 = scalar_lea.vmem [#allocation2], 64
    %v1733 = vld [vmem:[%s1732] sm:$0xff]
    %v1734 = vld [vmem:[%s1732 + $0x8] sm:$0xff]
    %v1735 = vld [vmem:[%s1732 + $0x10] sm:$0xff]
    %v1736 = vld [vmem:[%s1732 + $0x18] sm:$0xff]
    %v1737 = vld [vmem:[%s1732 + $0x20] sm:$0xff]
    %v1738 = vld [vmem:[%s1732 + $0x28] sm:$0xff]
    %v1739 = vld [vmem:[%s1732 + $0x30] sm:$0xff]
    %v1740 = vld [vmem:[%s1732 + $0x38] sm:$0xff]
    %1741 = vmatpush.msra.mxu0 0.0
    %1742 = vmatpush.msra.mxu0 0.0
    %1743 = vmatpush.msra.mxu0 0.0
    %1744 = vmatpush.msra.mxu0 0.0
    %1745 = vmatpush.msra.mxu0 0.0
    %1746 = vmatpush.msra.mxu0 0.0
    %1747 = vmatpush.msra.mxu0 0.0
    %1748 = vmatpush.msra.mxu0 0.0
    %1749 = vmatpush.msra.mxu0 0.0
    %1750 = vmatpush.msra.mxu0 0.0
    %1751 = vmatpush.msra.mxu0 0.0
    %1752 = vmatpush.msra.mxu0 0.0
    %v1753 = vand.u32 %v1739, 4294901760
    %1754 = vmatpush.msra.mxu0 %v1753
    %v1755 = vand.u32 %v1737, 4294901760
    %1756 = vmatpush.msra.mxu0 %v1755
    %v1757 = vand.u32 %v1735, 4294901760
    %1758 = vmatpush.msra.mxu0 %v1757
    %v1759 = vand.u32 %v1733, 4294901760
    %1760 = vmatpush.msra.mxu0 %v1759
    %v1761 = vand.u32 %v93, 4294901760
    %v1762 = vsub.f32 %v93, %v1761
    %v1763 = vand.u32 %v1762, 4294901760
    %v1764 = vsub.f32 %v1762, %v1763
    %v1765 = vand.u32 %v1764, 4294901760
    %1766 = vmatmul.f32.gmra.mxu0 %v1765
    %v1767 = vpop.f32.mrf.mxu0
    %v1768 = vadd.f32 %v74, %v1767
    %v1769 = vand.u32 %v96, 4294901760
    %v1770 = vsub.f32 %v96, %v1769
    %v1771 = vand.u32 %v1770, 4294901760
    %v1772 = vsub.f32 %v1770, %v1771
    %v1773 = vand.u32 %v1772, 4294901760
    %1774 = vmatmul.f32.gmra.mxu0 %v1773
    %v1775 = vpop.f32.mrf.mxu0
    %v1776 = vadd.f32 %v79, %v1775
    %v1777 = vand.u32 %v99, 4294901760
    %v1778 = vsub.f32 %v99, %v1777
    %v1779 = vand.u32 %v1778, 4294901760
    %v1780 = vsub.f32 %v1778, %v1779
    %v1781 = vand.u32 %v1780, 4294901760
    %1782 = vmatmul.f32.gmra.mxu0 %v1781
    %v1783 = vpop.f32.mrf.mxu0
    %v1784 = vadd.f32 %v84, %v1783
    %v1785 = vand.u32 %v102, 4294901760
    %v1786 = vsub.f32 %v102, %v1785
    %v1787 = vand.u32 %v1786, 4294901760
    %v1788 = vsub.f32 %v1786, %v1787
    %v1789 = vand.u32 %v1788, 4294901760
    %1790 = vmatmul.f32.gmra.mxu0 %v1789
    %v1791 = vpop.f32.mrf.mxu0
    %v1792 = vadd.f32 %v89, %v1791
    %1793 = vdwg.mxu0
    %1794 = vmatpush.msra.mxu0 0.0
    %1795 = vmatpush.msra.mxu0 0.0
    %1796 = vmatpush.msra.mxu0 0.0
    %1797 = vmatpush.msra.mxu0 0.0
    %1798 = vmatpush.msra.mxu0 0.0
    %1799 = vmatpush.msra.mxu0 0.0
    %1800 = vmatpush.msra.mxu0 0.0
    %1801 = vmatpush.msra.mxu0 0.0
    %1802 = vmatpush.msra.mxu0 0.0
    %1803 = vmatpush.msra.mxu0 0.0
    %1804 = vmatpush.msra.mxu0 0.0
    %1805 = vmatpush.msra.mxu0 0.0
    %v1806 = vand.u32 %v1739, 4294901760
    %v1807 = vsub.f32 %v1739, %v1806
    %v1808 = vand.u32 %v1807, 4294901760
    %v1809 = vsub.f32 %v1807, %v1808
    %v1810 = vand.u32 %v1809, 4294901760
    %1811 = vmatpush.msra.mxu0 %v1810
    %v1812 = vand.u32 %v1737, 4294901760
    %v1813 = vsub.f32 %v1737, %v1812
    %v1814 = vand.u32 %v1813, 4294901760
    %v1815 = vsub.f32 %v1813, %v1814
    %v1816 = vand.u32 %v1815, 4294901760
    %1817 = vmatpush.msra.mxu0 %v1816
    %v1818 = vand.u32 %v1735, 4294901760
    %v1819 = vsub.f32 %v1735, %v1818
    %v1820 = vand.u32 %v1819, 4294901760
    %v1821 = vsub.f32 %v1819, %v1820
    %v1822 = vand.u32 %v1821, 4294901760
    %1823 = vmatpush.msra.mxu0 %v1822
    %v1824 = vand.u32 %v1733, 4294901760
    %v1825 = vsub.f32 %v1733, %v1824
    %v1826 = vand.u32 %v1825, 4294901760
    %v1827 = vsub.f32 %v1825, %v1826
    %v1828 = vand.u32 %v1827, 4294901760
    %1829 = vmatpush.msra.mxu0 %v1828
    %v1830 = vand.u32 %v93, 4294901760
    %1831 = vmatmul.f32.gmra.mxu0 %v1830
    %v1832 = vpop.f32.mrf.mxu0
    %v1833 = vadd.f32 %v1768, %v1832
    %v1834 = vand.u32 %v96, 4294901760
    %1835 = vmatmul.f32.gmra.mxu0 %v1834
    %v1836 = vpop.f32.mrf.mxu0
    %v1837 = vadd.f32 %v1776, %v1836
    %v1838 = vand.u32 %v99, 4294901760
    %1839 = vmatmul.f32.gmra.mxu0 %v1838
    %v1840 = vpop.f32.mrf.mxu0
    %v1841 = vadd.f32 %v1784, %v1840
    %v1842 = vand.u32 %v102, 4294901760
    %1843 = vmatmul.f32.gmra.mxu0 %v1842
    %v1844 = vpop.f32.mrf.mxu0
    %v1845 = vadd.f32 %v1792, %v1844
    %1846 = vdwg.mxu0
    %1847 = vmatpush.msra.mxu0 0.0
    %1848 = vmatpush.msra.mxu0 0.0
    %1849 = vmatpush.msra.mxu0 0.0
    %1850 = vmatpush.msra.mxu0 0.0
    %1851 = vmatpush.msra.mxu0 0.0
    %1852 = vmatpush.msra.mxu0 0.0
    %1853 = vmatpush.msra.mxu0 0.0
    %1854 = vmatpush.msra.mxu0 0.0
    %1855 = vmatpush.msra.mxu0 0.0
    %1856 = vmatpush.msra.mxu0 0.0
    %1857 = vmatpush.msra.mxu0 0.0
    %1858 = vmatpush.msra.mxu0 0.0
    %v1859 = vand.u32 %v1739, 4294901760
    %v1860 = vsub.f32 %v1739, %v1859
    %1861 = vmatpush.msra.mxu0 %v1860
    %v1862 = vand.u32 %v1737, 4294901760
    %v1863 = vsub.f32 %v1737, %v1862
    %1864 = vmatpush.msra.mxu0 %v1863
    %v1865 = vand.u32 %v1735, 4294901760
    %v1866 = vsub.f32 %v1735, %v1865
    %1867 = vmatpush.msra.mxu0 %v1866
    %v1868 = vand.u32 %v1733, 4294901760
    %v1869 = vsub.f32 %v1733, %v1868
    %1870 = vmatpush.msra.mxu0 %v1869
    %v1871 = vand.u32 %v93, 4294901760
    %v1872 = vsub.f32 %v93, %v1871
    %1873 = vmatmul.f32.gmra.mxu0 %v1872
    %v1874 = vpop.f32.mrf.mxu0
    %v1875 = vadd.f32 %v1833, %v1874
    %v1876 = vand.u32 %v96, 4294901760
    %v1877 = vsub.f32 %v96, %v1876
    %1878 = vmatmul.f32.gmra.mxu0 %v1877
    %v1879 = vpop.f32.mrf.mxu0
    %v1880 = vadd.f32 %v1837, %v1879
    %v1881 = vand.u32 %v99, 4294901760
    %v1882 = vsub.f32 %v99, %v1881
    %1883 = vmatmul.f32.gmra.mxu0 %v1882
    %v1884 = vpop.f32.mrf.mxu0
    %v1885 = vadd.f32 %v1841, %v1884
    %v1886 = vand.u32 %v102, 4294901760
    %v1887 = vsub.f32 %v102, %v1886
    %1888 = vmatmul.f32.gmra.mxu0 %v1887
    %v1889 = vpop.f32.mrf.mxu0
    %v1890 = vadd.f32 %v1845, %v1889
    %1891 = vdwg.mxu0
    %1892 = vmatpush.msra.mxu0 0.0
    %1893 = vmatpush.msra.mxu0 0.0
    %1894 = vmatpush.msra.mxu0 0.0
    %1895 = vmatpush.msra.mxu0 0.0
    %1896 = vmatpush.msra.mxu0 0.0
    %1897 = vmatpush.msra.mxu0 0.0
    %1898 = vmatpush.msra.mxu0 0.0
    %1899 = vmatpush.msra.mxu0 0.0
    %1900 = vmatpush.msra.mxu0 0.0
    %1901 = vmatpush.msra.mxu0 0.0
    %1902 = vmatpush.msra.mxu0 0.0
    %1903 = vmatpush.msra.mxu0 0.0
    %v1904 = vand.u32 %v1739, 4294901760
    %1905 = vmatpush.msra.mxu0 %v1904
    %v1906 = vand.u32 %v1737, 4294901760
    %1907 = vmatpush.msra.mxu0 %v1906
    %v1908 = vand.u32 %v1735, 4294901760
    %1909 = vmatpush.msra.mxu0 %v1908
    %v1910 = vand.u32 %v1733, 4294901760
    %1911 = vmatpush.msra.mxu0 %v1910
    %v1912 = vand.u32 %v93, 4294901760
    %v1913 = vsub.f32 %v93, %v1912
    %v1914 = vand.u32 %v1913, 4294901760
    %1915 = vmatmul.f32.gmra.mxu0 %v1914
    %v1916 = vpop.f32.mrf.mxu0
    %v1917 = vadd.f32 %v1875, %v1916
    %v1918 = vand.u32 %v96, 4294901760
    %v1919 = vsub.f32 %v96, %v1918
    %v1920 = vand.u32 %v1919, 4294901760
    %1921 = vmatmul.f32.gmra.mxu0 %v1920
    %v1922 = vpop.f32.mrf.mxu0
    %v1923 = vadd.f32 %v1880, %v1922
    %v1924 = vand.u32 %v99, 4294901760
    %v1925 = vsub.f32 %v99, %v1924
    %v1926 = vand.u32 %v1925, 4294901760
    %1927 = vmatmul.f32.gmra.mxu0 %v1926
    %v1928 = vpop.f32.mrf.mxu0
    %v1929 = vadd.f32 %v1885, %v1928
    %v1930 = vand.u32 %v102, 4294901760
    %v1931 = vsub.f32 %v102, %v1930
    %v1932 = vand.u32 %v1931, 4294901760
    %1933 = vmatmul.f32.gmra.mxu0 %v1932
    %v1934 = vpop.f32.mrf.mxu0
    %v1935 = vadd.f32 %v1890, %v1934
    %1936 = vdwg.mxu0
    %1937 = vmatpush.msra.mxu0 0.0
    %1938 = vmatpush.msra.mxu0 0.0
    %1939 = vmatpush.msra.mxu0 0.0
    %1940 = vmatpush.msra.mxu0 0.0
    %1941 = vmatpush.msra.mxu0 0.0
    %1942 = vmatpush.msra.mxu0 0.0
    %1943 = vmatpush.msra.mxu0 0.0
    %1944 = vmatpush.msra.mxu0 0.0
    %1945 = vmatpush.msra.mxu0 0.0
    %1946 = vmatpush.msra.mxu0 0.0
    %1947 = vmatpush.msra.mxu0 0.0
    %1948 = vmatpush.msra.mxu0 0.0
    %v1949 = vand.u32 %v1739, 4294901760
    %v1950 = vsub.f32 %v1739, %v1949
    %v1951 = vand.u32 %v1950, 4294901760
    %1952 = vmatpush.msra.mxu0 %v1951
    %v1953 = vand.u32 %v1737, 4294901760
    %v1954 = vsub.f32 %v1737, %v1953
    %v1955 = vand.u32 %v1954, 4294901760
    %1956 = vmatpush.msra.mxu0 %v1955
    %v1957 = vand.u32 %v1735, 4294901760
    %v1958 = vsub.f32 %v1735, %v1957
    %v1959 = vand.u32 %v1958, 4294901760
    %1960 = vmatpush.msra.mxu0 %v1959
    %v1961 = vand.u32 %v1733, 4294901760
    %v1962 = vsub.f32 %v1733, %v1961
    %v1963 = vand.u32 %v1962, 4294901760
    %1964 = vmatpush.msra.mxu0 %v1963
    %v1965 = vand.u32 %v93, 4294901760
    %1966 = vmatmul.f32.gmra.mxu0 %v1965
    %v1967 = vpop.f32.mrf.mxu0
    %v1968 = vadd.f32 %v1917, %v1967
    %v1969 = vand.u32 %v96, 4294901760
    %1970 = vmatmul.f32.gmra.mxu0 %v1969
    %v1971 = vpop.f32.mrf.mxu0
    %v1972 = vadd.f32 %v1923, %v1971
    %v1973 = vand.u32 %v99, 4294901760
    %1974 = vmatmul.f32.gmra.mxu0 %v1973
    %v1975 = vpop.f32.mrf.mxu0
    %v1976 = vadd.f32 %v1929, %v1975
    %v1977 = vand.u32 %v102, 4294901760
    %1978 = vmatmul.f32.gmra.mxu0 %v1977
    %v1979 = vpop.f32.mrf.mxu0
    %v1980 = vadd.f32 %v1935, %v1979
    %1981 = vdwg.mxu0
    %1982 = vmatpush.msra.mxu0 0.0
    %1983 = vmatpush.msra.mxu0 0.0
    %1984 = vmatpush.msra.mxu0 0.0
    %1985 = vmatpush.msra.mxu0 0.0
    %1986 = vmatpush.msra.mxu0 0.0
    %1987 = vmatpush.msra.mxu0 0.0
    %1988 = vmatpush.msra.mxu0 0.0
    %1989 = vmatpush.msra.mxu0 0.0
    %1990 = vmatpush.msra.mxu0 0.0
    %1991 = vmatpush.msra.mxu0 0.0
    %1992 = vmatpush.msra.mxu0 0.0
    %1993 = vmatpush.msra.mxu0 0.0
    %v1994 = vand.u32 %v1739, 4294901760
    %1995 = vmatpush.msra.mxu0 %v1994
    %v1996 = vand.u32 %v1737, 4294901760
    %1997 = vmatpush.msra.mxu0 %v1996
    %v1998 = vand.u32 %v1735, 4294901760
    %1999 = vmatpush.msra.mxu0 %v1998
    %v2000 = vand.u32 %v1733, 4294901760
    %2001 = vmatpush.msra.mxu0 %v2000
    %v2002 = vand.u32 %v93, 4294901760
    %2003 = vmatmul.f32.gmra.mxu0 %v2002
    %v2004 = vpop.f32.mrf.mxu0
    %v2005 = vadd.f32 %v1968, %v2004
    %v2006 = vand.u32 %v96, 4294901760
    %2007 = vmatmul.f32.gmra.mxu0 %v2006
    %v2008 = vpop.f32.mrf.mxu0
    %v2009 = vadd.f32 %v1972, %v2008
    %v2010 = vand.u32 %v99, 4294901760
    %2011 = vmatmul.f32.gmra.mxu0 %v2010
    %v2012 = vpop.f32.mrf.mxu0
    %v2013 = vadd.f32 %v1976, %v2012
    %v2014 = vand.u32 %v102, 4294901760
    %2015 = vmatmul.f32.gmra.mxu0 %v2014
    %v2016 = vpop.f32.mrf.mxu0
    %v2017 = vadd.f32 %v1980, %v2016
    %2018 = vdwg.mxu0
    %2019 = vmatpush.msra.mxu0 0.0
    %2020 = vmatpush.msra.mxu0 0.0
    %2021 = vmatpush.msra.mxu0 0.0
    %2022 = vmatpush.msra.mxu0 0.0
    %2023 = vmatpush.msra.mxu0 0.0
    %2024 = vmatpush.msra.mxu0 0.0
    %2025 = vmatpush.msra.mxu0 0.0
    %2026 = vmatpush.msra.mxu0 0.0
    %2027 = vmatpush.msra.mxu0 0.0
    %2028 = vmatpush.msra.mxu0 0.0
    %2029 = vmatpush.msra.mxu0 0.0
    %2030 = vmatpush.msra.mxu0 0.0
    %v2031 = vand.u32 %v1740, 4294901760
    %2032 = vmatpush.msra.mxu0 %v2031
    %v2033 = vand.u32 %v1738, 4294901760
    %2034 = vmatpush.msra.mxu0 %v2033
    %v2035 = vand.u32 %v1736, 4294901760
    %2036 = vmatpush.msra.mxu0 %v2035
    %v2037 = vand.u32 %v1734, 4294901760
    %2038 = vmatpush.msra.mxu0 %v2037
    %v2039 = vand.u32 %v93, 4294901760
    %v2040 = vsub.f32 %v93, %v2039
    %v2041 = vand.u32 %v2040, 4294901760
    %v2042 = vsub.f32 %v2040, %v2041
    %v2043 = vand.u32 %v2042, 4294901760
    %2044 = vmatmul.f32.gmra.mxu0 %v2043
    %v2045 = vpop.f32.mrf.mxu0
    %v2046 = vadd.f32 %v74, %v2045
    %v2047 = vand.u32 %v96, 4294901760
    %v2048 = vsub.f32 %v96, %v2047
    %v2049 = vand.u32 %v2048, 4294901760
    %v2050 = vsub.f32 %v2048, %v2049
    %v2051 = vand.u32 %v2050, 4294901760
    %2052 = vmatmul.f32.gmra.mxu0 %v2051
    %v2053 = vpop.f32.mrf.mxu0
    %v2054 = vadd.f32 %v79, %v2053
    %v2055 = vand.u32 %v99, 4294901760
    %v2056 = vsub.f32 %v99, %v2055
    %v2057 = vand.u32 %v2056, 4294901760
    %v2058 = vsub.f32 %v2056, %v2057
    %v2059 = vand.u32 %v2058, 4294901760
    %2060 = vmatmul.f32.gmra.mxu0 %v2059
    %v2061 = vpop.f32.mrf.mxu0
    %v2062 = vadd.f32 %v84, %v2061
    %v2063 = vand.u32 %v102, 4294901760
    %v2064 = vsub.f32 %v102, %v2063
    %v2065 = vand.u32 %v2064, 4294901760
    %v2066 = vsub.f32 %v2064, %v2065
    %v2067 = vand.u32 %v2066, 4294901760
    %2068 = vmatmul.f32.gmra.mxu0 %v2067
    %v2069 = vpop.f32.mrf.mxu0
    %v2070 = vadd.f32 %v89, %v2069
    %2071 = vdwg.mxu0
    %2072 = vmatpush.msra.mxu0 0.0
    %2073 = vmatpush.msra.mxu0 0.0
    %2074 = vmatpush.msra.mxu0 0.0
    %2075 = vmatpush.msra.mxu0 0.0
    %2076 = vmatpush.msra.mxu0 0.0
    %2077 = vmatpush.msra.mxu0 0.0
    %2078 = vmatpush.msra.mxu0 0.0
    %2079 = vmatpush.msra.mxu0 0.0
    %2080 = vmatpush.msra.mxu0 0.0
    %2081 = vmatpush.msra.mxu0 0.0
    %2082 = vmatpush.msra.mxu0 0.0
    %2083 = vmatpush.msra.mxu0 0.0
    %v2084 = vand.u32 %v1740, 4294901760
    %v2085 = vsub.f32 %v1740, %v2084
    %v2086 = vand.u32 %v2085, 4294901760
    %v2087 = vsub.f32 %v2085, %v2086
    %v2088 = vand.u32 %v2087, 4294901760
    %2089 = vmatpush.msra.mxu0 %v2088
    %v2090 = vand.u32 %v1738, 4294901760
    %v2091 = vsub.f32 %v1738, %v2090
    %v2092 = vand.u32 %v2091, 4294901760
    %v2093 = vsub.f32 %v2091, %v2092
    %v2094 = vand.u32 %v2093, 4294901760
    %2095 = vmatpush.msra.mxu0 %v2094
    %v2096 = vand.u32 %v1736, 4294901760
    %v2097 = vsub.f32 %v1736, %v2096
    %v2098 = vand.u32 %v2097, 4294901760
    %v2099 = vsub.f32 %v2097, %v2098
    %v2100 = vand.u32 %v2099, 4294901760
    %2101 = vmatpush.msra.mxu0 %v2100
    %v2102 = vand.u32 %v1734, 4294901760
    %v2103 = vsub.f32 %v1734, %v2102
    %v2104 = vand.u32 %v2103, 4294901760
    %v2105 = vsub.f32 %v2103, %v2104
    %v2106 = vand.u32 %v2105, 4294901760
    %2107 = vmatpush.msra.mxu0 %v2106
    %v2108 = vand.u32 %v93, 4294901760
    %2109 = vmatmul.f32.gmra.mxu0 %v2108
    %v2110 = vpop.f32.mrf.mxu0
    %v2111 = vadd.f32 %v2046, %v2110
    %v2112 = vand.u32 %v96, 4294901760
    %2113 = vmatmul.f32.gmra.mxu0 %v2112
    %v2114 = vpop.f32.mrf.mxu0
    %v2115 = vadd.f32 %v2054, %v2114
    %v2116 = vand.u32 %v99, 4294901760
    %2117 = vmatmul.f32.gmra.mxu0 %v2116
    %v2118 = vpop.f32.mrf.mxu0
    %v2119 = vadd.f32 %v2062, %v2118
    %v2120 = vand.u32 %v102, 4294901760
    %2121 = vmatmul.f32.gmra.mxu0 %v2120
    %v2122 = vpop.f32.mrf.mxu0
    %v2123 = vadd.f32 %v2070, %v2122
    %2124 = vdwg.mxu0
    %2125 = vmatpush.msra.mxu0 0.0
    %2126 = vmatpush.msra.mxu0 0.0
    %2127 = vmatpush.msra.mxu0 0.0
    %2128 = vmatpush.msra.mxu0 0.0
    %2129 = vmatpush.msra.mxu0 0.0
    %2130 = vmatpush.msra.mxu0 0.0
    %2131 = vmatpush.msra.mxu0 0.0
    %2132 = vmatpush.msra.mxu0 0.0
    %2133 = vmatpush.msra.mxu0 0.0
    %2134 = vmatpush.msra.mxu0 0.0
    %2135 = vmatpush.msra.mxu0 0.0
    %2136 = vmatpush.msra.mxu0 0.0
    %v2137 = vand.u32 %v1740, 4294901760
    %v2138 = vsub.f32 %v1740, %v2137
    %2139 = vmatpush.msra.mxu0 %v2138
    %v2140 = vand.u32 %v1738, 4294901760
    %v2141 = vsub.f32 %v1738, %v2140
    %2142 = vmatpush.msra.mxu0 %v2141
    %v2143 = vand.u32 %v1736, 4294901760
    %v2144 = vsub.f32 %v1736, %v2143
    %2145 = vmatpush.msra.mxu0 %v2144
    %v2146 = vand.u32 %v1734, 4294901760
    %v2147 = vsub.f32 %v1734, %v2146
    %2148 = vmatpush.msra.mxu0 %v2147
    %v2149 = vand.u32 %v93, 4294901760
    %v2150 = vsub.f32 %v93, %v2149
    %2151 = vmatmul.f32.gmra.mxu0 %v2150
    %v2152 = vpop.f32.mrf.mxu0
    %v2153 = vadd.f32 %v2111, %v2152
    %v2154 = vand.u32 %v96, 4294901760
    %v2155 = vsub.f32 %v96, %v2154
    %2156 = vmatmul.f32.gmra.mxu0 %v2155
    %v2157 = vpop.f32.mrf.mxu0
    %v2158 = vadd.f32 %v2115, %v2157
    %v2159 = vand.u32 %v99, 4294901760
    %v2160 = vsub.f32 %v99, %v2159
    %2161 = vmatmul.f32.gmra.mxu0 %v2160
    %v2162 = vpop.f32.mrf.mxu0
    %v2163 = vadd.f32 %v2119, %v2162
    %v2164 = vand.u32 %v102, 4294901760
    %v2165 = vsub.f32 %v102, %v2164
    %2166 = vmatmul.f32.gmra.mxu0 %v2165
    %v2167 = vpop.f32.mrf.mxu0
    %v2168 = vadd.f32 %v2123, %v2167
    %2169 = vdwg.mxu0
    %2170 = vmatpush.msra.mxu0 0.0
    %2171 = vmatpush.msra.mxu0 0.0
    %2172 = vmatpush.msra.mxu0 0.0
    %2173 = vmatpush.msra.mxu0 0.0
    %2174 = vmatpush.msra.mxu0 0.0
    %2175 = vmatpush.msra.mxu0 0.0
    %2176 = vmatpush.msra.mxu0 0.0
    %2177 = vmatpush.msra.mxu0 0.0
    %2178 = vmatpush.msra.mxu0 0.0
    %2179 = vmatpush.msra.mxu0 0.0
    %2180 = vmatpush.msra.mxu0 0.0
    %2181 = vmatpush.msra.mxu0 0.0
    %v2182 = vand.u32 %v1740, 4294901760
    %2183 = vmatpush.msra.mxu0 %v2182
    %v2184 = vand.u32 %v1738, 4294901760
    %2185 = vmatpush.msra.mxu0 %v2184
    %v2186 = vand.u32 %v1736, 4294901760
    %2187 = vmatpush.msra.mxu0 %v2186
    %v2188 = vand.u32 %v1734, 4294901760
    %2189 = vmatpush.msra.mxu0 %v2188
    %v2190 = vand.u32 %v93, 4294901760
    %v2191 = vsub.f32 %v93, %v2190
    %v2192 = vand.u32 %v2191, 4294901760
    %2193 = vmatmul.f32.gmra.mxu0 %v2192
    %v2194 = vpop.f32.mrf.mxu0
    %v2195 = vadd.f32 %v2153, %v2194
    %v2196 = vand.u32 %v96, 4294901760
    %v2197 = vsub.f32 %v96, %v2196
    %v2198 = vand.u32 %v2197, 4294901760
    %2199 = vmatmul.f32.gmra.mxu0 %v2198
    %v2200 = vpop.f32.mrf.mxu0
    %v2201 = vadd.f32 %v2158, %v2200
    %v2202 = vand.u32 %v99, 4294901760
    %v2203 = vsub.f32 %v99, %v2202
    %v2204 = vand.u32 %v2203, 4294901760
    %2205 = vmatmul.f32.gmra.mxu0 %v2204
    %v2206 = vpop.f32.mrf.mxu0
    %v2207 = vadd.f32 %v2163, %v2206
    %v2208 = vand.u32 %v102, 4294901760
    %v2209 = vsub.f32 %v102, %v2208
    %v2210 = vand.u32 %v2209, 4294901760
    %2211 = vmatmul.f32.gmra.mxu0 %v2210
    %v2212 = vpop.f32.mrf.mxu0
    %v2213 = vadd.f32 %v2168, %v2212
    %2214 = vdwg.mxu0
    %2215 = vmatpush.msra.mxu0 0.0
    %2216 = vmatpush.msra.mxu0 0.0
    %2217 = vmatpush.msra.mxu0 0.0
    %2218 = vmatpush.msra.mxu0 0.0
    %2219 = vmatpush.msra.mxu0 0.0
    %2220 = vmatpush.msra.mxu0 0.0
    %2221 = vmatpush.msra.mxu0 0.0
    %2222 = vmatpush.msra.mxu0 0.0
    %2223 = vmatpush.msra.mxu0 0.0
    %2224 = vmatpush.msra.mxu0 0.0
    %2225 = vmatpush.msra.mxu0 0.0
    %2226 = vmatpush.msra.mxu0 0.0
    %v2227 = vand.u32 %v1740, 4294901760
    %v2228 = vsub.f32 %v1740, %v2227
    %v2229 = vand.u32 %v2228, 4294901760
    %2230 = vmatpush.msra.mxu0 %v2229
    %v2231 = vand.u32 %v1738, 4294901760
    %v2232 = vsub.f32 %v1738, %v2231
    %v2233 = vand.u32 %v2232, 4294901760
    %2234 = vmatpush.msra.mxu0 %v2233
    %v2235 = vand.u32 %v1736, 4294901760
    %v2236 = vsub.f32 %v1736, %v2235
    %v2237 = vand.u32 %v2236, 4294901760
    %2238 = vmatpush.msra.mxu0 %v2237
    %v2239 = vand.u32 %v1734, 4294901760
    %v2240 = vsub.f32 %v1734, %v2239
    %v2241 = vand.u32 %v2240, 4294901760
    %2242 = vmatpush.msra.mxu0 %v2241
    %v2243 = vand.u32 %v93, 4294901760
    %2244 = vmatmul.f32.gmra.mxu0 %v2243
    %v2245 = vpop.f32.mrf.mxu0
    %v2246 = vadd.f32 %v2195, %v2245
    %v2247 = vand.u32 %v96, 4294901760
    %2248 = vmatmul.f32.gmra.mxu0 %v2247
    %v2249 = vpop.f32.mrf.mxu0
    %v2250 = vadd.f32 %v2201, %v2249
    %v2251 = vand.u32 %v99, 4294901760
    %2252 = vmatmul.f32.gmra.mxu0 %v2251
    %v2253 = vpop.f32.mrf.mxu0
    %v2254 = vadd.f32 %v2207, %v2253
    %v2255 = vand.u32 %v102, 4294901760
    %2256 = vmatmul.f32.gmra.mxu0 %v2255
    %v2257 = vpop.f32.mrf.mxu0
    %v2258 = vadd.f32 %v2213, %v2257
    %2259 = vdwg.mxu0
    %2260 = vmatpush.msra.mxu0 0.0
    %2261 = vmatpush.msra.mxu0 0.0
    %2262 = vmatpush.msra.mxu0 0.0
    %2263 = vmatpush.msra.mxu0 0.0
    %2264 = vmatpush.msra.mxu0 0.0
    %2265 = vmatpush.msra.mxu0 0.0
    %2266 = vmatpush.msra.mxu0 0.0
    %2267 = vmatpush.msra.mxu0 0.0
    %2268 = vmatpush.msra.mxu0 0.0
    %2269 = vmatpush.msra.mxu0 0.0
    %2270 = vmatpush.msra.mxu0 0.0
    %2271 = vmatpush.msra.mxu0 0.0
    %v2272 = vand.u32 %v1740, 4294901760
    %2273 = vmatpush.msra.mxu0 %v2272
    %v2274 = vand.u32 %v1738, 4294901760
    %2275 = vmatpush.msra.mxu0 %v2274
    %v2276 = vand.u32 %v1736, 4294901760
    %2277 = vmatpush.msra.mxu0 %v2276
    %v2278 = vand.u32 %v1734, 4294901760
    %2279 = vmatpush.msra.mxu0 %v2278
    %v2280 = vand.u32 %v93, 4294901760
    %2281 = vmatmul.f32.gmra.mxu0 %v2280
    %v2282 = vpop.f32.mrf.mxu0
    %v2283 = vadd.f32 %v2246, %v2282
    %v2284 = vand.u32 %v96, 4294901760
    %2285 = vmatmul.f32.gmra.mxu0 %v2284
    %v2286 = vpop.f32.mrf.mxu0
    %v2287 = vadd.f32 %v2250, %v2286
    %v2288 = vand.u32 %v99, 4294901760
    %2289 = vmatmul.f32.gmra.mxu0 %v2288
    %v2290 = vpop.f32.mrf.mxu0
    %v2291 = vadd.f32 %v2254, %v2290
    %v2292 = vand.u32 %v102, 4294901760
    %2293 = vmatmul.f32.gmra.mxu0 %v2292
    %v2294 = vpop.f32.mrf.mxu0
    %v2295 = vadd.f32 %v2258, %v2294
    %2296 = vdwg.mxu0
    %v2297 = vmul.f32 %v2005, 0.01
    %v2298 = vmul.f32 %v2283, 0.01
    %v2299 = vmul.f32 %v2009, 0.01
    %v2300 = vmul.f32 %v2287, 0.01
    %v2301 = vmul.f32 %v2013, 0.01
    %v2302 = vmul.f32 %v2291, 0.01
    %v2303 = vmul.f32 %v2017, 0.01
    %v2304 = vmul.f32 %v2295, 0.01
    %v2305 = vmax.f32 %v2005, %v2297
    %v2306 = vmax.f32 %v2283, %v2298
    %v2307 = vmax.f32 %v2009, %v2299
    %v2308 = vmax.f32 %v2287, %v2300
    %v2309 = vmax.f32 %v2013, %v2301
    %v2310 = vmax.f32 %v2291, %v2302
    %v2311 = vmax.f32 %v2017, %v2303
    %v2312 = vmax.f32 %v2295, %v2304
    %2313 = vmatpush.msra.mxu0 0.0
    %2314 = vmatpush.msra.mxu0 0.0
    %2315 = vmatpush.msra.mxu0 0.0
    %2316 = vmatpush.msra.mxu0 0.0
    %2317 = vmatpush.msra.mxu0 0.0
    %2318 = vmatpush.msra.mxu0 0.0
    %2319 = vmatpush.msra.mxu0 0.0
    %2320 = vmatpush.msra.mxu0 0.0
    %2321 = vmatpush.msra.mxu0 0.0
    %2322 = vmatpush.msra.mxu0 0.0
    %2323 = vmatpush.msra.mxu0 0.0
    %2324 = vmatpush.msra.mxu0 0.0
    %v2325 = vand.u32 %v2311, 4294901760
    %2326 = vmatpush.msra.mxu0 %v2325
    %v2327 = vand.u32 %v2309, 4294901760
    %2328 = vmatpush.msra.mxu0 %v2327
    %v2329 = vand.u32 %v2307, 4294901760
    %2330 = vmatpush.msra.mxu0 %v2329
    %v2331 = vand.u32 %v2305, 4294901760
    %2332 = vmatpush.msra.mxu0 %v2331
    %v2333 = vand.u32 %v697, 4294901760
    %v2334 = vsub.f32 %v697, %v2333
    %v2335 = vand.u32 %v2334, 4294901760
    %v2336 = vsub.f32 %v2334, %v2335
    %v2337 = vand.u32 %v2336, 4294901760
    %2338 = vmatmul.f32.gmra.mxu0 %v2337
    %v2339 = vpop.f32.mrf.mxu0
    %v2340 = vadd.f32 %v679, %v2339
    %v2341 = vand.u32 %v700, 4294901760
    %v2342 = vsub.f32 %v700, %v2341
    %v2343 = vand.u32 %v2342, 4294901760
    %v2344 = vsub.f32 %v2342, %v2343
    %v2345 = vand.u32 %v2344, 4294901760
    %2346 = vmatmul.f32.gmra.mxu0 %v2345
    %v2347 = vpop.f32.mrf.mxu0
    %v2348 = vadd.f32 %v684, %v2347
    %v2349 = vand.u32 %v703, 4294901760
    %v2350 = vsub.f32 %v703, %v2349
    %v2351 = vand.u32 %v2350, 4294901760
    %v2352 = vsub.f32 %v2350, %v2351
    %v2353 = vand.u32 %v2352, 4294901760
    %2354 = vmatmul.f32.gmra.mxu0 %v2353
    %v2355 = vpop.f32.mrf.mxu0
    %v2356 = vadd.f32 %v689, %v2355
    %v2357 = vand.u32 %v706, 4294901760
    %v2358 = vsub.f32 %v706, %v2357
    %v2359 = vand.u32 %v2358, 4294901760
    %v2360 = vsub.f32 %v2358, %v2359
    %v2361 = vand.u32 %v2360, 4294901760
    %2362 = vmatmul.f32.gmra.mxu0 %v2361
    %v2363 = vpop.f32.mrf.mxu0
    %v2364 = vadd.f32 %v694, %v2363
    %2365 = vdwg.mxu0
    %2366 = vmatpush.msra.mxu0 0.0
    %2367 = vmatpush.msra.mxu0 0.0
    %2368 = vmatpush.msra.mxu0 0.0
    %2369 = vmatpush.msra.mxu0 0.0
    %2370 = vmatpush.msra.mxu0 0.0
    %2371 = vmatpush.msra.mxu0 0.0
    %2372 = vmatpush.msra.mxu0 0.0
    %2373 = vmatpush.msra.mxu0 0.0
    %2374 = vmatpush.msra.mxu0 0.0
    %2375 = vmatpush.msra.mxu0 0.0
    %2376 = vmatpush.msra.mxu0 0.0
    %2377 = vmatpush.msra.mxu0 0.0
    %v2378 = vand.u32 %v2311, 4294901760
    %v2379 = vsub.f32 %v2311, %v2378
    %v2380 = vand.u32 %v2379, 4294901760
    %v2381 = vsub.f32 %v2379, %v2380
    %v2382 = vand.u32 %v2381, 4294901760
    %2383 = vmatpush.msra.mxu0 %v2382
    %v2384 = vand.u32 %v2309, 4294901760
    %v2385 = vsub.f32 %v2309, %v2384
    %v2386 = vand.u32 %v2385, 4294901760
    %v2387 = vsub.f32 %v2385, %v2386
    %v2388 = vand.u32 %v2387, 4294901760
    %2389 = vmatpush.msra.mxu0 %v2388
    %v2390 = vand.u32 %v2307, 4294901760
    %v2391 = vsub.f32 %v2307, %v2390
    %v2392 = vand.u32 %v2391, 4294901760
    %v2393 = vsub.f32 %v2391, %v2392
    %v2394 = vand.u32 %v2393, 4294901760
    %2395 = vmatpush.msra.mxu0 %v2394
    %v2396 = vand.u32 %v2305, 4294901760
    %v2397 = vsub.f32 %v2305, %v2396
    %v2398 = vand.u32 %v2397, 4294901760
    %v2399 = vsub.f32 %v2397, %v2398
    %v2400 = vand.u32 %v2399, 4294901760
    %2401 = vmatpush.msra.mxu0 %v2400
    %v2402 = vand.u32 %v697, 4294901760
    %2403 = vmatmul.f32.gmra.mxu0 %v2402
    %v2404 = vpop.f32.mrf.mxu0
    %v2405 = vadd.f32 %v2340, %v2404
    %v2406 = vand.u32 %v700, 4294901760
    %2407 = vmatmul.f32.gmra.mxu0 %v2406
    %v2408 = vpop.f32.mrf.mxu0
    %v2409 = vadd.f32 %v2348, %v2408
    %v2410 = vand.u32 %v703, 4294901760
    %2411 = vmatmul.f32.gmra.mxu0 %v2410
    %v2412 = vpop.f32.mrf.mxu0
    %v2413 = vadd.f32 %v2356, %v2412
    %v2414 = vand.u32 %v706, 4294901760
    %2415 = vmatmul.f32.gmra.mxu0 %v2414
    %v2416 = vpop.f32.mrf.mxu0
    %v2417 = vadd.f32 %v2364, %v2416
    %2418 = vdwg.mxu0
    %2419 = vmatpush.msra.mxu0 0.0
    %2420 = vmatpush.msra.mxu0 0.0
    %2421 = vmatpush.msra.mxu0 0.0
    %2422 = vmatpush.msra.mxu0 0.0
    %2423 = vmatpush.msra.mxu0 0.0
    %2424 = vmatpush.msra.mxu0 0.0
    %2425 = vmatpush.msra.mxu0 0.0
    %2426 = vmatpush.msra.mxu0 0.0
    %2427 = vmatpush.msra.mxu0 0.0
    %2428 = vmatpush.msra.mxu0 0.0
    %2429 = vmatpush.msra.mxu0 0.0
    %2430 = vmatpush.msra.mxu0 0.0
    %v2431 = vand.u32 %v2311, 4294901760
    %v2432 = vsub.f32 %v2311, %v2431
    %2433 = vmatpush.msra.mxu0 %v2432
    %v2434 = vand.u32 %v2309, 4294901760
    %v2435 = vsub.f32 %v2309, %v2434
    %2436 = vmatpush.msra.mxu0 %v2435
    %v2437 = vand.u32 %v2307, 4294901760
    %v2438 = vsub.f32 %v2307, %v2437
    %2439 = vmatpush.msra.mxu0 %v2438
    %v2440 = vand.u32 %v2305, 4294901760
    %v2441 = vsub.f32 %v2305, %v2440
    %2442 = vmatpush.msra.mxu0 %v2441
    %v2443 = vand.u32 %v697, 4294901760
    %v2444 = vsub.f32 %v697, %v2443
    %2445 = vmatmul.f32.gmra.mxu0 %v2444
    %v2446 = vpop.f32.mrf.mxu0
    %v2447 = vadd.f32 %v2405, %v2446
    %v2448 = vand.u32 %v700, 4294901760
    %v2449 = vsub.f32 %v700, %v2448
    %2450 = vmatmul.f32.gmra.mxu0 %v2449
    %v2451 = vpop.f32.mrf.mxu0
    %v2452 = vadd.f32 %v2409, %v2451
    %v2453 = vand.u32 %v703, 4294901760
    %v2454 = vsub.f32 %v703, %v2453
    %2455 = vmatmul.f32.gmra.mxu0 %v2454
    %v2456 = vpop.f32.mrf.mxu0
    %v2457 = vadd.f32 %v2413, %v2456
    %v2458 = vand.u32 %v706, 4294901760
    %v2459 = vsub.f32 %v706, %v2458
    %2460 = vmatmul.f32.gmra.mxu0 %v2459
    %v2461 = vpop.f32.mrf.mxu0
    %v2462 = vadd.f32 %v2417, %v2461
    %2463 = vdwg.mxu0
    %2464 = vmatpush.msra.mxu0 0.0
    %2465 = vmatpush.msra.mxu0 0.0
    %2466 = vmatpush.msra.mxu0 0.0
    %2467 = vmatpush.msra.mxu0 0.0
    %2468 = vmatpush.msra.mxu0 0.0
    %2469 = vmatpush.msra.mxu0 0.0
    %2470 = vmatpush.msra.mxu0 0.0
    %2471 = vmatpush.msra.mxu0 0.0
    %2472 = vmatpush.msra.mxu0 0.0
    %2473 = vmatpush.msra.mxu0 0.0
    %2474 = vmatpush.msra.mxu0 0.0
    %2475 = vmatpush.msra.mxu0 0.0
    %v2476 = vand.u32 %v2311, 4294901760
    %2477 = vmatpush.msra.mxu0 %v2476
    %v2478 = vand.u32 %v2309, 4294901760
    %2479 = vmatpush.msra.mxu0 %v2478
    %v2480 = vand.u32 %v2307, 4294901760
    %2481 = vmatpush.msra.mxu0 %v2480
    %v2482 = vand.u32 %v2305, 4294901760
    %2483 = vmatpush.msra.mxu0 %v2482
    %v2484 = vand.u32 %v697, 4294901760
    %v2485 = vsub.f32 %v697, %v2484
    %v2486 = vand.u32 %v2485, 4294901760
    %2487 = vmatmul.f32.gmra.mxu0 %v2486
    %v2488 = vpop.f32.mrf.mxu0
    %v2489 = vadd.f32 %v2447, %v2488
    %v2490 = vand.u32 %v700, 4294901760
    %v2491 = vsub.f32 %v700, %v2490
    %v2492 = vand.u32 %v2491, 4294901760
    %2493 = vmatmul.f32.gmra.mxu0 %v2492
    %v2494 = vpop.f32.mrf.mxu0
    %v2495 = vadd.f32 %v2452, %v2494
    %v2496 = vand.u32 %v703, 4294901760
    %v2497 = vsub.f32 %v703, %v2496
    %v2498 = vand.u32 %v2497, 4294901760
    %2499 = vmatmul.f32.gmra.mxu0 %v2498
    %v2500 = vpop.f32.mrf.mxu0
    %v2501 = vadd.f32 %v2457, %v2500
    %v2502 = vand.u32 %v706, 4294901760
    %v2503 = vsub.f32 %v706, %v2502
    %v2504 = vand.u32 %v2503, 4294901760
    %2505 = vmatmul.f32.gmra.mxu0 %v2504
    %v2506 = vpop.f32.mrf.mxu0
    %v2507 = vadd.f32 %v2462, %v2506
    %2508 = vdwg.mxu0
    %2509 = vmatpush.msra.mxu0 0.0
    %2510 = vmatpush.msra.mxu0 0.0
    %2511 = vmatpush.msra.mxu0 0.0
    %2512 = vmatpush.msra.mxu0 0.0
    %2513 = vmatpush.msra.mxu0 0.0
    %2514 = vmatpush.msra.mxu0 0.0
    %2515 = vmatpush.msra.mxu0 0.0
    %2516 = vmatpush.msra.mxu0 0.0
    %2517 = vmatpush.msra.mxu0 0.0
    %2518 = vmatpush.msra.mxu0 0.0
    %2519 = vmatpush.msra.mxu0 0.0
    %2520 = vmatpush.msra.mxu0 0.0
    %v2521 = vand.u32 %v2311, 4294901760
    %v2522 = vsub.f32 %v2311, %v2521
    %v2523 = vand.u32 %v2522, 4294901760
    %2524 = vmatpush.msra.mxu0 %v2523
    %v2525 = vand.u32 %v2309, 4294901760
    %v2526 = vsub.f32 %v2309, %v2525
    %v2527 = vand.u32 %v2526, 4294901760
    %2528 = vmatpush.msra.mxu0 %v2527
    %v2529 = vand.u32 %v2307, 4294901760
    %v2530 = vsub.f32 %v2307, %v2529
    %v2531 = vand.u32 %v2530, 4294901760
    %2532 = vmatpush.msra.mxu0 %v2531
    %v2533 = vand.u32 %v2305, 4294901760
    %v2534 = vsub.f32 %v2305, %v2533
    %v2535 = vand.u32 %v2534, 4294901760
    %2536 = vmatpush.msra.mxu0 %v2535
    %v2537 = vand.u32 %v697, 4294901760
    %2538 = vmatmul.f32.gmra.mxu0 %v2537
    %v2539 = vpop.f32.mrf.mxu0
    %v2540 = vadd.f32 %v2489, %v2539
    %v2541 = vand.u32 %v700, 4294901760
    %2542 = vmatmul.f32.gmra.mxu0 %v2541
    %v2543 = vpop.f32.mrf.mxu0
    %v2544 = vadd.f32 %v2495, %v2543
    %v2545 = vand.u32 %v703, 4294901760
    %2546 = vmatmul.f32.gmra.mxu0 %v2545
    %v2547 = vpop.f32.mrf.mxu0
    %v2548 = vadd.f32 %v2501, %v2547
    %v2549 = vand.u32 %v706, 4294901760
    %2550 = vmatmul.f32.gmra.mxu0 %v2549
    %v2551 = vpop.f32.mrf.mxu0
    %v2552 = vadd.f32 %v2507, %v2551
    %2553 = vdwg.mxu0
    %2554 = vmatpush.msra.mxu0 0.0
    %2555 = vmatpush.msra.mxu0 0.0
    %2556 = vmatpush.msra.mxu0 0.0
    %2557 = vmatpush.msra.mxu0 0.0
    %2558 = vmatpush.msra.mxu0 0.0
    %2559 = vmatpush.msra.mxu0 0.0
    %2560 = vmatpush.msra.mxu0 0.0
    %2561 = vmatpush.msra.mxu0 0.0
    %2562 = vmatpush.msra.mxu0 0.0
    %2563 = vmatpush.msra.mxu0 0.0
    %2564 = vmatpush.msra.mxu0 0.0
    %2565 = vmatpush.msra.mxu0 0.0
    %v2566 = vand.u32 %v2311, 4294901760
    %2567 = vmatpush.msra.mxu0 %v2566
    %v2568 = vand.u32 %v2309, 4294901760
    %2569 = vmatpush.msra.mxu0 %v2568
    %v2570 = vand.u32 %v2307, 4294901760
    %2571 = vmatpush.msra.mxu0 %v2570
    %v2572 = vand.u32 %v2305, 4294901760
    %2573 = vmatpush.msra.mxu0 %v2572
    %v2574 = vand.u32 %v697, 4294901760
    %2575 = vmatmul.f32.gmra.mxu0 %v2574
    %v2576 = vpop.f32.mrf.mxu0
    %v2577 = vadd.f32 %v2540, %v2576
    %v2578 = vand.u32 %v700, 4294901760
    %2579 = vmatmul.f32.gmra.mxu0 %v2578
    %v2580 = vpop.f32.mrf.mxu0
    %v2581 = vadd.f32 %v2544, %v2580
    %v2582 = vand.u32 %v703, 4294901760
    %2583 = vmatmul.f32.gmra.mxu0 %v2582
    %v2584 = vpop.f32.mrf.mxu0
    %v2585 = vadd.f32 %v2548, %v2584
    %v2586 = vand.u32 %v706, 4294901760
    %2587 = vmatmul.f32.gmra.mxu0 %v2586
    %v2588 = vpop.f32.mrf.mxu0
    %v2589 = vadd.f32 %v2552, %v2588
    %2590 = vdwg.mxu0
    %2591 = vmatpush.msra.mxu0 0.0
    %2592 = vmatpush.msra.mxu0 0.0
    %2593 = vmatpush.msra.mxu0 0.0
    %2594 = vmatpush.msra.mxu0 0.0
    %2595 = vmatpush.msra.mxu0 0.0
    %2596 = vmatpush.msra.mxu0 0.0
    %2597 = vmatpush.msra.mxu0 0.0
    %2598 = vmatpush.msra.mxu0 0.0
    %2599 = vmatpush.msra.mxu0 0.0
    %2600 = vmatpush.msra.mxu0 0.0
    %2601 = vmatpush.msra.mxu0 0.0
    %2602 = vmatpush.msra.mxu0 0.0
    %v2603 = vand.u32 %v2312, 4294901760
    %2604 = vmatpush.msra.mxu0 %v2603
    %v2605 = vand.u32 %v2310, 4294901760
    %2606 = vmatpush.msra.mxu0 %v2605
    %v2607 = vand.u32 %v2308, 4294901760
    %2608 = vmatpush.msra.mxu0 %v2607
    %v2609 = vand.u32 %v2306, 4294901760
    %2610 = vmatpush.msra.mxu0 %v2609
    %v2611 = vand.u32 %v697, 4294901760
    %v2612 = vsub.f32 %v697, %v2611
    %v2613 = vand.u32 %v2612, 4294901760
    %v2614 = vsub.f32 %v2612, %v2613
    %v2615 = vand.u32 %v2614, 4294901760
    %2616 = vmatmul.f32.gmra.mxu0 %v2615
    %v2617 = vpop.f32.mrf.mxu0
    %v2618 = vadd.f32 %v679, %v2617
    %v2619 = vand.u32 %v700, 4294901760
    %v2620 = vsub.f32 %v700, %v2619
    %v2621 = vand.u32 %v2620, 4294901760
    %v2622 = vsub.f32 %v2620, %v2621
    %v2623 = vand.u32 %v2622, 4294901760
    %2624 = vmatmul.f32.gmra.mxu0 %v2623
    %v2625 = vpop.f32.mrf.mxu0
    %v2626 = vadd.f32 %v684, %v2625
    %v2627 = vand.u32 %v703, 4294901760
    %v2628 = vsub.f32 %v703, %v2627
    %v2629 = vand.u32 %v2628, 4294901760
    %v2630 = vsub.f32 %v2628, %v2629
    %v2631 = vand.u32 %v2630, 4294901760
    %2632 = vmatmul.f32.gmra.mxu0 %v2631
    %v2633 = vpop.f32.mrf.mxu0
    %v2634 = vadd.f32 %v689, %v2633
    %v2635 = vand.u32 %v706, 4294901760
    %v2636 = vsub.f32 %v706, %v2635
    %v2637 = vand.u32 %v2636, 4294901760
    %v2638 = vsub.f32 %v2636, %v2637
    %v2639 = vand.u32 %v2638, 4294901760
    %2640 = vmatmul.f32.gmra.mxu0 %v2639
    %v2641 = vpop.f32.mrf.mxu0
    %v2642 = vadd.f32 %v694, %v2641
    %2643 = vdwg.mxu0
    %2644 = vmatpush.msra.mxu0 0.0
    %2645 = vmatpush.msra.mxu0 0.0
    %2646 = vmatpush.msra.mxu0 0.0
    %2647 = vmatpush.msra.mxu0 0.0
    %2648 = vmatpush.msra.mxu0 0.0
    %2649 = vmatpush.msra.mxu0 0.0
    %2650 = vmatpush.msra.mxu0 0.0
    %2651 = vmatpush.msra.mxu0 0.0
    %2652 = vmatpush.msra.mxu0 0.0
    %2653 = vmatpush.msra.mxu0 0.0
    %2654 = vmatpush.msra.mxu0 0.0
    %2655 = vmatpush.msra.mxu0 0.0
    %v2656 = vand.u32 %v2312, 4294901760
    %v2657 = vsub.f32 %v2312, %v2656
    %v2658 = vand.u32 %v2657, 4294901760
    %v2659 = vsub.f32 %v2657, %v2658
    %v2660 = vand.u32 %v2659, 4294901760
    %2661 = vmatpush.msra.mxu0 %v2660
    %v2662 = vand.u32 %v2310, 4294901760
    %v2663 = vsub.f32 %v2310, %v2662
    %v2664 = vand.u32 %v2663, 4294901760
    %v2665 = vsub.f32 %v2663, %v2664
    %v2666 = vand.u32 %v2665, 4294901760
    %2667 = vmatpush.msra.mxu0 %v2666
    %v2668 = vand.u32 %v2308, 4294901760
    %v2669 = vsub.f32 %v2308, %v2668
    %v2670 = vand.u32 %v2669, 4294901760
    %v2671 = vsub.f32 %v2669, %v2670
    %v2672 = vand.u32 %v2671, 4294901760
    %2673 = vmatpush.msra.mxu0 %v2672
    %v2674 = vand.u32 %v2306, 4294901760
    %v2675 = vsub.f32 %v2306, %v2674
    %v2676 = vand.u32 %v2675, 4294901760
    %v2677 = vsub.f32 %v2675, %v2676
    %v2678 = vand.u32 %v2677, 4294901760
    %2679 = vmatpush.msra.mxu0 %v2678
    %v2680 = vand.u32 %v697, 4294901760
    %2681 = vmatmul.f32.gmra.mxu0 %v2680
    %v2682 = vpop.f32.mrf.mxu0
    %v2683 = vadd.f32 %v2618, %v2682
    %v2684 = vand.u32 %v700, 4294901760
    %2685 = vmatmul.f32.gmra.mxu0 %v2684
    %v2686 = vpop.f32.mrf.mxu0
    %v2687 = vadd.f32 %v2626, %v2686
    %v2688 = vand.u32 %v703, 4294901760
    %2689 = vmatmul.f32.gmra.mxu0 %v2688
    %v2690 = vpop.f32.mrf.mxu0
    %v2691 = vadd.f32 %v2634, %v2690
    %v2692 = vand.u32 %v706, 4294901760
    %2693 = vmatmul.f32.gmra.mxu0 %v2692
    %v2694 = vpop.f32.mrf.mxu0
    %v2695 = vadd.f32 %v2642, %v2694
    %2696 = vdwg.mxu0
    %2697 = vmatpush.msra.mxu0 0.0
    %2698 = vmatpush.msra.mxu0 0.0
    %2699 = vmatpush.msra.mxu0 0.0
    %2700 = vmatpush.msra.mxu0 0.0
    %2701 = vmatpush.msra.mxu0 0.0
    %2702 = vmatpush.msra.mxu0 0.0
    %2703 = vmatpush.msra.mxu0 0.0
    %2704 = vmatpush.msra.mxu0 0.0
    %2705 = vmatpush.msra.mxu0 0.0
    %2706 = vmatpush.msra.mxu0 0.0
    %2707 = vmatpush.msra.mxu0 0.0
    %2708 = vmatpush.msra.mxu0 0.0
    %v2709 = vand.u32 %v2312, 4294901760
    %v2710 = vsub.f32 %v2312, %v2709
    %2711 = vmatpush.msra.mxu0 %v2710
    %v2712 = vand.u32 %v2310, 4294901760
    %v2713 = vsub.f32 %v2310, %v2712
    %2714 = vmatpush.msra.mxu0 %v2713
    %v2715 = vand.u32 %v2308, 4294901760
    %v2716 = vsub.f32 %v2308, %v2715
    %2717 = vmatpush.msra.mxu0 %v2716
    %v2718 = vand.u32 %v2306, 4294901760
    %v2719 = vsub.f32 %v2306, %v2718
    %2720 = vmatpush.msra.mxu0 %v2719
    %v2721 = vand.u32 %v697, 4294901760
    %v2722 = vsub.f32 %v697, %v2721
    %2723 = vmatmul.f32.gmra.mxu0 %v2722
    %v2724 = vpop.f32.mrf.mxu0
    %v2725 = vadd.f32 %v2683, %v2724
    %v2726 = vand.u32 %v700, 4294901760
    %v2727 = vsub.f32 %v700, %v2726
    %2728 = vmatmul.f32.gmra.mxu0 %v2727
    %v2729 = vpop.f32.mrf.mxu0
    %v2730 = vadd.f32 %v2687, %v2729
    %v2731 = vand.u32 %v703, 4294901760
    %v2732 = vsub.f32 %v703, %v2731
    %2733 = vmatmul.f32.gmra.mxu0 %v2732
    %v2734 = vpop.f32.mrf.mxu0
    %v2735 = vadd.f32 %v2691, %v2734
    %v2736 = vand.u32 %v706, 4294901760
    %v2737 = vsub.f32 %v706, %v2736
    %2738 = vmatmul.f32.gmra.mxu0 %v2737
    %v2739 = vpop.f32.mrf.mxu0
    %v2740 = vadd.f32 %v2695, %v2739
    %2741 = vdwg.mxu0
    %2742 = vmatpush.msra.mxu0 0.0
    %2743 = vmatpush.msra.mxu0 0.0
    %2744 = vmatpush.msra.mxu0 0.0
    %2745 = vmatpush.msra.mxu0 0.0
    %2746 = vmatpush.msra.mxu0 0.0
    %2747 = vmatpush.msra.mxu0 0.0
    %2748 = vmatpush.msra.mxu0 0.0
    %2749 = vmatpush.msra.mxu0 0.0
    %2750 = vmatpush.msra.mxu0 0.0
    %2751 = vmatpush.msra.mxu0 0.0
    %2752 = vmatpush.msra.mxu0 0.0
    %2753 = vmatpush.msra.mxu0 0.0
    %v2754 = vand.u32 %v2312, 4294901760
    %2755 = vmatpush.msra.mxu0 %v2754
    %v2756 = vand.u32 %v2310, 4294901760
    %2757 = vmatpush.msra.mxu0 %v2756
    %v2758 = vand.u32 %v2308, 4294901760
    %2759 = vmatpush.msra.mxu0 %v2758
    %v2760 = vand.u32 %v2306, 4294901760
    %2761 = vmatpush.msra.mxu0 %v2760
    %v2762 = vand.u32 %v697, 4294901760
    %v2763 = vsub.f32 %v697, %v2762
    %v2764 = vand.u32 %v2763, 4294901760
    %2765 = vmatmul.f32.gmra.mxu0 %v2764
    %v2766 = vpop.f32.mrf.mxu0
    %v2767 = vadd.f32 %v2725, %v2766
    %v2768 = vand.u32 %v700, 4294901760
    %v2769 = vsub.f32 %v700, %v2768
    %v2770 = vand.u32 %v2769, 4294901760
    %2771 = vmatmul.f32.gmra.mxu0 %v2770
    %v2772 = vpop.f32.mrf.mxu0
    %v2773 = vadd.f32 %v2730, %v2772
    %v2774 = vand.u32 %v703, 4294901760
    %v2775 = vsub.f32 %v703, %v2774
    %v2776 = vand.u32 %v2775, 4294901760
    %2777 = vmatmul.f32.gmra.mxu0 %v2776
    %v2778 = vpop.f32.mrf.mxu0
    %v2779 = vadd.f32 %v2735, %v2778
    %v2780 = vand.u32 %v706, 4294901760
    %v2781 = vsub.f32 %v706, %v2780
    %v2782 = vand.u32 %v2781, 4294901760
    %2783 = vmatmul.f32.gmra.mxu0 %v2782
    %v2784 = vpop.f32.mrf.mxu0
    %v2785 = vadd.f32 %v2740, %v2784
    %2786 = vdwg.mxu0
    %2787 = vmatpush.msra.mxu0 0.0
    %2788 = vmatpush.msra.mxu0 0.0
    %2789 = vmatpush.msra.mxu0 0.0
    %2790 = vmatpush.msra.mxu0 0.0
    %2791 = vmatpush.msra.mxu0 0.0
    %2792 = vmatpush.msra.mxu0 0.0
    %2793 = vmatpush.msra.mxu0 0.0
    %2794 = vmatpush.msra.mxu0 0.0
    %2795 = vmatpush.msra.mxu0 0.0
    %2796 = vmatpush.msra.mxu0 0.0
    %2797 = vmatpush.msra.mxu0 0.0
    %2798 = vmatpush.msra.mxu0 0.0
    %v2799 = vand.u32 %v2312, 4294901760
    %v2800 = vsub.f32 %v2312, %v2799
    %v2801 = vand.u32 %v2800, 4294901760
    %2802 = vmatpush.msra.mxu0 %v2801
    %v2803 = vand.u32 %v2310, 4294901760
    %v2804 = vsub.f32 %v2310, %v2803
    %v2805 = vand.u32 %v2804, 4294901760
    %2806 = vmatpush.msra.mxu0 %v2805
    %v2807 = vand.u32 %v2308, 4294901760
    %v2808 = vsub.f32 %v2308, %v2807
    %v2809 = vand.u32 %v2808, 4294901760
    %2810 = vmatpush.msra.mxu0 %v2809
    %v2811 = vand.u32 %v2306, 4294901760
    %v2812 = vsub.f32 %v2306, %v2811
    %v2813 = vand.u32 %v2812, 4294901760
    %2814 = vmatpush.msra.mxu0 %v2813
    %v2815 = vand.u32 %v697, 4294901760
    %2816 = vmatmul.f32.gmra.mxu0 %v2815
    %v2817 = vpop.f32.mrf.mxu0
    %v2818 = vadd.f32 %v2767, %v2817
    %v2819 = vand.u32 %v700, 4294901760
    %2820 = vmatmul.f32.gmra.mxu0 %v2819
    %v2821 = vpop.f32.mrf.mxu0
    %v2822 = vadd.f32 %v2773, %v2821
    %v2823 = vand.u32 %v703, 4294901760
    %2824 = vmatmul.f32.gmra.mxu0 %v2823
    %v2825 = vpop.f32.mrf.mxu0
    %v2826 = vadd.f32 %v2779, %v2825
    %v2827 = vand.u32 %v706, 4294901760
    %2828 = vmatmul.f32.gmra.mxu0 %v2827
    %v2829 = vpop.f32.mrf.mxu0
    %v2830 = vadd.f32 %v2785, %v2829
    %2831 = vdwg.mxu0
    %2832 = vmatpush.msra.mxu0 0.0
    %2833 = vmatpush.msra.mxu0 0.0
    %2834 = vmatpush.msra.mxu0 0.0
    %2835 = vmatpush.msra.mxu0 0.0
    %2836 = vmatpush.msra.mxu0 0.0
    %2837 = vmatpush.msra.mxu0 0.0
    %2838 = vmatpush.msra.mxu0 0.0
    %2839 = vmatpush.msra.mxu0 0.0
    %2840 = vmatpush.msra.mxu0 0.0
    %2841 = vmatpush.msra.mxu0 0.0
    %2842 = vmatpush.msra.mxu0 0.0
    %2843 = vmatpush.msra.mxu0 0.0
    %v2844 = vand.u32 %v2312, 4294901760
    %2845 = vmatpush.msra.mxu0 %v2844
    %v2846 = vand.u32 %v2310, 4294901760
    %2847 = vmatpush.msra.mxu0 %v2846
    %v2848 = vand.u32 %v2308, 4294901760
    %2849 = vmatpush.msra.mxu0 %v2848
    %v2850 = vand.u32 %v2306, 4294901760
    %2851 = vmatpush.msra.mxu0 %v2850
    %v2852 = vand.u32 %v697, 4294901760
    %2853 = vmatmul.f32.gmra.mxu0 %v2852
    %v2854 = vpop.f32.mrf.mxu0
    %v2855 = vadd.f32 %v2818, %v2854
    %v2856 = vand.u32 %v700, 4294901760
    %2857 = vmatmul.f32.gmra.mxu0 %v2856
    %v2858 = vpop.f32.mrf.mxu0
    %v2859 = vadd.f32 %v2822, %v2858
    %v2860 = vand.u32 %v703, 4294901760
    %2861 = vmatmul.f32.gmra.mxu0 %v2860
    %v2862 = vpop.f32.mrf.mxu0
    %v2863 = vadd.f32 %v2826, %v2862
    %v2864 = vand.u32 %v706, 4294901760
    %2865 = vmatmul.f32.gmra.mxu0 %v2864
    %v2866 = vpop.f32.mrf.mxu0
    %v2867 = vadd.f32 %v2830, %v2866
    %2868 = vdwg.mxu0
    %v2869 = vmul.f32 %v2577, 0.01
    %v2870 = vmul.f32 %v2855, 0.01
    %v2871 = vmul.f32 %v2581, 0.01
    %v2872 = vmul.f32 %v2859, 0.01
    %v2873 = vmul.f32 %v2585, 0.01
    %v2874 = vmul.f32 %v2863, 0.01
    %v2875 = vmul.f32 %v2589, 0.01
    %v2876 = vmul.f32 %v2867, 0.01
    %v2877 = vmax.f32 %v2577, %v2869
    %v2878 = vmax.f32 %v2855, %v2870
    %v2879 = vmax.f32 %v2581, %v2871
    %v2880 = vmax.f32 %v2859, %v2872
    %v2881 = vmax.f32 %v2585, %v2873
    %v2882 = vmax.f32 %v2863, %v2874
    %v2883 = vmax.f32 %v2589, %v2875
    %v2884 = vmax.f32 %v2867, %v2876
    %2885 = vmatpush.msra.mxu0 0.0
    %2886 = vmatpush.msra.mxu0 0.0
    %2887 = vmatpush.msra.mxu0 0.0
    %2888 = vmatpush.msra.mxu0 0.0
    %2889 = vmatpush.msra.mxu0 0.0
    %2890 = vmatpush.msra.mxu0 0.0
    %2891 = vmatpush.msra.mxu0 0.0
    %2892 = vmatpush.msra.mxu0 0.0
    %2893 = vmatpush.msra.mxu0 0.0
    %2894 = vmatpush.msra.mxu0 0.0
    %2895 = vmatpush.msra.mxu0 0.0
    %2896 = vmatpush.msra.mxu0 0.0
    %v2897 = vand.u32 %v2883, 4294901760
    %2898 = vmatpush.msra.mxu0 %v2897
    %v2899 = vand.u32 %v2881, 4294901760
    %2900 = vmatpush.msra.mxu0 %v2899
    %v2901 = vand.u32 %v2879, 4294901760
    %2902 = vmatpush.msra.mxu0 %v2901
    %v2903 = vand.u32 %v2877, 4294901760
    %2904 = vmatpush.msra.mxu0 %v2903
    %v2905 = vand.u32 %v1291, 4294901760
    %v2906 = vsub.f32 %v1291, %v2905
    %v2907 = vand.u32 %v2906, 4294901760
    %v2908 = vsub.f32 %v2906, %v2907
    %v2909 = vand.u32 %v2908, 4294901760
    %2910 = vmatmul.f32.gmra.mxu0 %v2909
    %v2911 = vpop.f32.mrf.mxu0
    %v2912 = vadd.f32 %v1283, %v2911
    %v2913 = vand.u32 %v1294, 4294901760
    %v2914 = vsub.f32 %v1294, %v2913
    %v2915 = vand.u32 %v2914, 4294901760
    %v2916 = vsub.f32 %v2914, %v2915
    %v2917 = vand.u32 %v2916, 4294901760
    %2918 = vmatmul.f32.gmra.mxu0 %v2917
    %v2919 = vpop.f32.mrf.mxu0
    %v2920 = vadd.f32 %v1288, %v2919
    %2921 = vdwg.mxu0
    %2922 = vmatpush.msra.mxu0 0.0
    %2923 = vmatpush.msra.mxu0 0.0
    %2924 = vmatpush.msra.mxu0 0.0
    %2925 = vmatpush.msra.mxu0 0.0
    %2926 = vmatpush.msra.mxu0 0.0
    %2927 = vmatpush.msra.mxu0 0.0
    %2928 = vmatpush.msra.mxu0 0.0
    %2929 = vmatpush.msra.mxu0 0.0
    %2930 = vmatpush.msra.mxu0 0.0
    %2931 = vmatpush.msra.mxu0 0.0
    %2932 = vmatpush.msra.mxu0 0.0
    %2933 = vmatpush.msra.mxu0 0.0
    %v2934 = vand.u32 %v2883, 4294901760
    %v2935 = vsub.f32 %v2883, %v2934
    %v2936 = vand.u32 %v2935, 4294901760
    %v2937 = vsub.f32 %v2935, %v2936
    %v2938 = vand.u32 %v2937, 4294901760
    %2939 = vmatpush.msra.mxu0 %v2938
    %v2940 = vand.u32 %v2881, 4294901760
    %v2941 = vsub.f32 %v2881, %v2940
    %v2942 = vand.u32 %v2941, 4294901760
    %v2943 = vsub.f32 %v2941, %v2942
    %v2944 = vand.u32 %v2943, 4294901760
    %2945 = vmatpush.msra.mxu0 %v2944
    %v2946 = vand.u32 %v2879, 4294901760
    %v2947 = vsub.f32 %v2879, %v2946
    %v2948 = vand.u32 %v2947, 4294901760
    %v2949 = vsub.f32 %v2947, %v2948
    %v2950 = vand.u32 %v2949, 4294901760
    %2951 = vmatpush.msra.mxu0 %v2950
    %v2952 = vand.u32 %v2877, 4294901760
    %v2953 = vsub.f32 %v2877, %v2952
    %v2954 = vand.u32 %v2953, 4294901760
    %v2955 = vsub.f32 %v2953, %v2954
    %v2956 = vand.u32 %v2955, 4294901760
    %2957 = vmatpush.msra.mxu0 %v2956
    %v2958 = vand.u32 %v1291, 4294901760
    %2959 = vmatmul.f32.gmra.mxu0 %v2958
    %v2960 = vpop.f32.mrf.mxu0
    %v2961 = vadd.f32 %v2912, %v2960
    %v2962 = vand.u32 %v1294, 4294901760
    %2963 = vmatmul.f32.gmra.mxu0 %v2962
    %v2964 = vpop.f32.mrf.mxu0
    %v2965 = vadd.f32 %v2920, %v2964
    %2966 = vdwg.mxu0
    %2967 = vmatpush.msra.mxu0 0.0
    %2968 = vmatpush.msra.mxu0 0.0
    %2969 = vmatpush.msra.mxu0 0.0
    %2970 = vmatpush.msra.mxu0 0.0
    %2971 = vmatpush.msra.mxu0 0.0
    %2972 = vmatpush.msra.mxu0 0.0
    %2973 = vmatpush.msra.mxu0 0.0
    %2974 = vmatpush.msra.mxu0 0.0
    %2975 = vmatpush.msra.mxu0 0.0
    %2976 = vmatpush.msra.mxu0 0.0
    %2977 = vmatpush.msra.mxu0 0.0
    %2978 = vmatpush.msra.mxu0 0.0
    %v2979 = vand.u32 %v2883, 4294901760
    %v2980 = vsub.f32 %v2883, %v2979
    %2981 = vmatpush.msra.mxu0 %v2980
    %v2982 = vand.u32 %v2881, 4294901760
    %v2983 = vsub.f32 %v2881, %v2982
    %2984 = vmatpush.msra.mxu0 %v2983
    %v2985 = vand.u32 %v2879, 4294901760
    %v2986 = vsub.f32 %v2879, %v2985
    %2987 = vmatpush.msra.mxu0 %v2986
    %v2988 = vand.u32 %v2877, 4294901760
    %v2989 = vsub.f32 %v2877, %v2988
    %2990 = vmatpush.msra.mxu0 %v2989
    %v2991 = vand.u32 %v1291, 4294901760
    %v2992 = vsub.f32 %v1291, %v2991
    %2993 = vmatmul.f32.gmra.mxu0 %v2992
    %v2994 = vpop.f32.mrf.mxu0
    %v2995 = vadd.f32 %v2961, %v2994
    %v2996 = vand.u32 %v1294, 4294901760
    %v2997 = vsub.f32 %v1294, %v2996
    %2998 = vmatmul.f32.gmra.mxu0 %v2997
    %v2999 = vpop.f32.mrf.mxu0
    %v3000 = vadd.f32 %v2965, %v2999
    %3001 = vdwg.mxu0
    %3002 = vmatpush.msra.mxu0 0.0
    %3003 = vmatpush.msra.mxu0 0.0
    %3004 = vmatpush.msra.mxu0 0.0
    %3005 = vmatpush.msra.mxu0 0.0
    %3006 = vmatpush.msra.mxu0 0.0
    %3007 = vmatpush.msra.mxu0 0.0
    %3008 = vmatpush.msra.mxu0 0.0
    %3009 = vmatpush.msra.mxu0 0.0
    %3010 = vmatpush.msra.mxu0 0.0
    %3011 = vmatpush.msra.mxu0 0.0
    %3012 = vmatpush.msra.mxu0 0.0
    %3013 = vmatpush.msra.mxu0 0.0
    %v3014 = vand.u32 %v2883, 4294901760
    %3015 = vmatpush.msra.mxu0 %v3014
    %v3016 = vand.u32 %v2881, 4294901760
    %3017 = vmatpush.msra.mxu0 %v3016
    %v3018 = vand.u32 %v2879, 4294901760
    %3019 = vmatpush.msra.mxu0 %v3018
    %v3020 = vand.u32 %v2877, 4294901760
    %3021 = vmatpush.msra.mxu0 %v3020
    %v3022 = vand.u32 %v1291, 4294901760
    %v3023 = vsub.f32 %v1291, %v3022
    %v3024 = vand.u32 %v3023, 4294901760
    %3025 = vmatmul.f32.gmra.mxu0 %v3024
    %v3026 = vpop.f32.mrf.mxu0
    %v3027 = vadd.f32 %v2995, %v3026
    %v3028 = vand.u32 %v1294, 4294901760
    %v3029 = vsub.f32 %v1294, %v3028
    %v3030 = vand.u32 %v3029, 4294901760
    %3031 = vmatmul.f32.gmra.mxu0 %v3030
    %v3032 = vpop.f32.mrf.mxu0
    %v3033 = vadd.f32 %v3000, %v3032
    %3034 = vdwg.mxu0
    %3035 = vmatpush.msra.mxu0 0.0
    %3036 = vmatpush.msra.mxu0 0.0
    %3037 = vmatpush.msra.mxu0 0.0
    %3038 = vmatpush.msra.mxu0 0.0
    %3039 = vmatpush.msra.mxu0 0.0
    %3040 = vmatpush.msra.mxu0 0.0
    %3041 = vmatpush.msra.mxu0 0.0
    %3042 = vmatpush.msra.mxu0 0.0
    %3043 = vmatpush.msra.mxu0 0.0
    %3044 = vmatpush.msra.mxu0 0.0
    %3045 = vmatpush.msra.mxu0 0.0
    %3046 = vmatpush.msra.mxu0 0.0
    %v3047 = vand.u32 %v2883, 4294901760
    %v3048 = vsub.f32 %v2883, %v3047
    %v3049 = vand.u32 %v3048, 4294901760
    %3050 = vmatpush.msra.mxu0 %v3049
    %v3051 = vand.u32 %v2881, 4294901760
    %v3052 = vsub.f32 %v2881, %v3051
    %v3053 = vand.u32 %v3052, 4294901760
    %3054 = vmatpush.msra.mxu0 %v3053
    %v3055 = vand.u32 %v2879, 4294901760
    %v3056 = vsub.f32 %v2879, %v3055
    %v3057 = vand.u32 %v3056, 4294901760
    %3058 = vmatpush.msra.mxu0 %v3057
    %v3059 = vand.u32 %v2877, 4294901760
    %v3060 = vsub.f32 %v2877, %v3059
    %v3061 = vand.u32 %v3060, 4294901760
    %3062 = vmatpush.msra.mxu0 %v3061
    %v3063 = vand.u32 %v1291, 4294901760
    %3064 = vmatmul.f32.gmra.mxu0 %v3063
    %v3065 = vpop.f32.mrf.mxu0
    %v3066 = vadd.f32 %v3027, %v3065
    %v3067 = vand.u32 %v1294, 4294901760
    %3068 = vmatmul.f32.gmra.mxu0 %v3067
    %v3069 = vpop.f32.mrf.mxu0
    %v3070 = vadd.f32 %v3033, %v3069
    %3071 = vdwg.mxu0
    %3072 = vmatpush.msra.mxu0 0.0
    %3073 = vmatpush.msra.mxu0 0.0
    %3074 = vmatpush.msra.mxu0 0.0
    %3075 = vmatpush.msra.mxu0 0.0
    %3076 = vmatpush.msra.mxu0 0.0
    %3077 = vmatpush.msra.mxu0 0.0
    %3078 = vmatpush.msra.mxu0 0.0
    %3079 = vmatpush.msra.mxu0 0.0
    %3080 = vmatpush.msra.mxu0 0.0
    %3081 = vmatpush.msra.mxu0 0.0
    %3082 = vmatpush.msra.mxu0 0.0
    %3083 = vmatpush.msra.mxu0 0.0
    %v3084 = vand.u32 %v2883, 4294901760
    %3085 = vmatpush.msra.mxu0 %v3084
    %v3086 = vand.u32 %v2881, 4294901760
    %3087 = vmatpush.msra.mxu0 %v3086
    %v3088 = vand.u32 %v2879, 4294901760
    %3089 = vmatpush.msra.mxu0 %v3088
    %v3090 = vand.u32 %v2877, 4294901760
    %3091 = vmatpush.msra.mxu0 %v3090
    %v3092 = vand.u32 %v1291, 4294901760
    %3093 = vmatmul.f32.gmra.mxu0 %v3092
    %v3094 = vpop.f32.mrf.mxu0
    %v3095 = vadd.f32 %v3066, %v3094
    %v3096 = vand.u32 %v1294, 4294901760
    %3097 = vmatmul.f32.gmra.mxu0 %v3096
    %v3098 = vpop.f32.mrf.mxu0
    %v3099 = vadd.f32 %v3070, %v3098
    %3100 = vdwg.mxu0
    %3101 = vmatpush.msra.mxu0 0.0
    %3102 = vmatpush.msra.mxu0 0.0
    %3103 = vmatpush.msra.mxu0 0.0
    %3104 = vmatpush.msra.mxu0 0.0
    %3105 = vmatpush.msra.mxu0 0.0
    %3106 = vmatpush.msra.mxu0 0.0
    %3107 = vmatpush.msra.mxu0 0.0
    %3108 = vmatpush.msra.mxu0 0.0
    %3109 = vmatpush.msra.mxu0 0.0
    %3110 = vmatpush.msra.mxu0 0.0
    %3111 = vmatpush.msra.mxu0 0.0
    %3112 = vmatpush.msra.mxu0 0.0
    %v3113 = vand.u32 %v2884, 4294901760
    %3114 = vmatpush.msra.mxu0 %v3113
    %v3115 = vand.u32 %v2882, 4294901760
    %3116 = vmatpush.msra.mxu0 %v3115
    %v3117 = vand.u32 %v2880, 4294901760
    %3118 = vmatpush.msra.mxu0 %v3117
    %v3119 = vand.u32 %v2878, 4294901760
    %3120 = vmatpush.msra.mxu0 %v3119
    %v3121 = vand.u32 %v1291, 4294901760
    %v3122 = vsub.f32 %v1291, %v3121
    %v3123 = vand.u32 %v3122, 4294901760
    %v3124 = vsub.f32 %v3122, %v3123
    %v3125 = vand.u32 %v3124, 4294901760
    %3126 = vmatmul.f32.gmra.mxu0 %v3125
    %v3127 = vpop.f32.mrf.mxu0
    %v3128 = vadd.f32 %v1283, %v3127
    %v3129 = vand.u32 %v1294, 4294901760
    %v3130 = vsub.f32 %v1294, %v3129
    %v3131 = vand.u32 %v3130, 4294901760
    %v3132 = vsub.f32 %v3130, %v3131
    %v3133 = vand.u32 %v3132, 4294901760
    %3134 = vmatmul.f32.gmra.mxu0 %v3133
    %v3135 = vpop.f32.mrf.mxu0
    %v3136 = vadd.f32 %v1288, %v3135
    %3137 = vdwg.mxu0
    %3138 = vmatpush.msra.mxu0 0.0
    %3139 = vmatpush.msra.mxu0 0.0
    %3140 = vmatpush.msra.mxu0 0.0
    %3141 = vmatpush.msra.mxu0 0.0
    %3142 = vmatpush.msra.mxu0 0.0
    %3143 = vmatpush.msra.mxu0 0.0
    %3144 = vmatpush.msra.mxu0 0.0
    %3145 = vmatpush.msra.mxu0 0.0
    %3146 = vmatpush.msra.mxu0 0.0
    %3147 = vmatpush.msra.mxu0 0.0
    %3148 = vmatpush.msra.mxu0 0.0
    %3149 = vmatpush.msra.mxu0 0.0
    %v3150 = vand.u32 %v2884, 4294901760
    %v3151 = vsub.f32 %v2884, %v3150
    %v3152 = vand.u32 %v3151, 4294901760
    %v3153 = vsub.f32 %v3151, %v3152
    %v3154 = vand.u32 %v3153, 4294901760
    %3155 = vmatpush.msra.mxu0 %v3154
    %v3156 = vand.u32 %v2882, 4294901760
    %v3157 = vsub.f32 %v2882, %v3156
    %v3158 = vand.u32 %v3157, 4294901760
    %v3159 = vsub.f32 %v3157, %v3158
    %v3160 = vand.u32 %v3159, 4294901760
    %3161 = vmatpush.msra.mxu0 %v3160
    %v3162 = vand.u32 %v2880, 4294901760
    %v3163 = vsub.f32 %v2880, %v3162
    %v3164 = vand.u32 %v3163, 4294901760
    %v3165 = vsub.f32 %v3163, %v3164
    %v3166 = vand.u32 %v3165, 4294901760
    %3167 = vmatpush.msra.mxu0 %v3166
    %v3168 = vand.u32 %v2878, 4294901760
    %v3169 = vsub.f32 %v2878, %v3168
    %v3170 = vand.u32 %v3169, 4294901760
    %v3171 = vsub.f32 %v3169, %v3170
    %v3172 = vand.u32 %v3171, 4294901760
    %3173 = vmatpush.msra.mxu0 %v3172
    %v3174 = vand.u32 %v1291, 4294901760
    %3175 = vmatmul.f32.gmra.mxu0 %v3174
    %v3176 = vpop.f32.mrf.mxu0
    %v3177 = vadd.f32 %v3128, %v3176
    %v3178 = vand.u32 %v1294, 4294901760
    %3179 = vmatmul.f32.gmra.mxu0 %v3178
    %v3180 = vpop.f32.mrf.mxu0
    %v3181 = vadd.f32 %v3136, %v3180
    %3182 = vdwg.mxu0
    %3183 = vmatpush.msra.mxu0 0.0
    %3184 = vmatpush.msra.mxu0 0.0
    %3185 = vmatpush.msra.mxu0 0.0
    %3186 = vmatpush.msra.mxu0 0.0
    %3187 = vmatpush.msra.mxu0 0.0
    %3188 = vmatpush.msra.mxu0 0.0
    %3189 = vmatpush.msra.mxu0 0.0
    %3190 = vmatpush.msra.mxu0 0.0
    %3191 = vmatpush.msra.mxu0 0.0
    %3192 = vmatpush.msra.mxu0 0.0
    %3193 = vmatpush.msra.mxu0 0.0
    %3194 = vmatpush.msra.mxu0 0.0
    %v3195 = vand.u32 %v2884, 4294901760
    %v3196 = vsub.f32 %v2884, %v3195
    %3197 = vmatpush.msra.mxu0 %v3196
    %v3198 = vand.u32 %v2882, 4294901760
    %v3199 = vsub.f32 %v2882, %v3198
    %3200 = vmatpush.msra.mxu0 %v3199
    %v3201 = vand.u32 %v2880, 4294901760
    %v3202 = vsub.f32 %v2880, %v3201
    %3203 = vmatpush.msra.mxu0 %v3202
    %v3204 = vand.u32 %v2878, 4294901760
    %v3205 = vsub.f32 %v2878, %v3204
    %3206 = vmatpush.msra.mxu0 %v3205
    %v3207 = vand.u32 %v1291, 4294901760
    %v3208 = vsub.f32 %v1291, %v3207
    %3209 = vmatmul.f32.gmra.mxu0 %v3208
    %v3210 = vpop.f32.mrf.mxu0
    %v3211 = vadd.f32 %v3177, %v3210
    %v3212 = vand.u32 %v1294, 4294901760
    %v3213 = vsub.f32 %v1294, %v3212
    %3214 = vmatmul.f32.gmra.mxu0 %v3213
    %v3215 = vpop.f32.mrf.mxu0
    %v3216 = vadd.f32 %v3181, %v3215
    %3217 = vdwg.mxu0
    %3218 = vmatpush.msra.mxu0 0.0
    %3219 = vmatpush.msra.mxu0 0.0
    %3220 = vmatpush.msra.mxu0 0.0
    %3221 = vmatpush.msra.mxu0 0.0
    %3222 = vmatpush.msra.mxu0 0.0
    %3223 = vmatpush.msra.mxu0 0.0
    %3224 = vmatpush.msra.mxu0 0.0
    %3225 = vmatpush.msra.mxu0 0.0
    %3226 = vmatpush.msra.mxu0 0.0
    %3227 = vmatpush.msra.mxu0 0.0
    %3228 = vmatpush.msra.mxu0 0.0
    %3229 = vmatpush.msra.mxu0 0.0
    %v3230 = vand.u32 %v2884, 4294901760
    %3231 = vmatpush.msra.mxu0 %v3230
    %v3232 = vand.u32 %v2882, 4294901760
    %3233 = vmatpush.msra.mxu0 %v3232
    %v3234 = vand.u32 %v2880, 4294901760
    %3235 = vmatpush.msra.mxu0 %v3234
    %v3236 = vand.u32 %v2878, 4294901760
    %3237 = vmatpush.msra.mxu0 %v3236
    %v3238 = vand.u32 %v1291, 4294901760
    %v3239 = vsub.f32 %v1291, %v3238
    %v3240 = vand.u32 %v3239, 4294901760
    %3241 = vmatmul.f32.gmra.mxu0 %v3240
    %v3242 = vpop.f32.mrf.mxu0
    %v3243 = vadd.f32 %v3211, %v3242
    %v3244 = vand.u32 %v1294, 4294901760
    %v3245 = vsub.f32 %v1294, %v3244
    %v3246 = vand.u32 %v3245, 4294901760
    %3247 = vmatmul.f32.gmra.mxu0 %v3246
    %v3248 = vpop.f32.mrf.mxu0
    %v3249 = vadd.f32 %v3216, %v3248
    %3250 = vdwg.mxu0
    %3251 = vmatpush.msra.mxu0 0.0
    %3252 = vmatpush.msra.mxu0 0.0
    %3253 = vmatpush.msra.mxu0 0.0
    %3254 = vmatpush.msra.mxu0 0.0
    %3255 = vmatpush.msra.mxu0 0.0
    %3256 = vmatpush.msra.mxu0 0.0
    %3257 = vmatpush.msra.mxu0 0.0
    %3258 = vmatpush.msra.mxu0 0.0
    %3259 = vmatpush.msra.mxu0 0.0
    %3260 = vmatpush.msra.mxu0 0.0
    %3261 = vmatpush.msra.mxu0 0.0
    %3262 = vmatpush.msra.mxu0 0.0
    %v3263 = vand.u32 %v2884, 4294901760
    %v3264 = vsub.f32 %v2884, %v3263
    %v3265 = vand.u32 %v3264, 4294901760
    %3266 = vmatpush.msra.mxu0 %v3265
    %v3267 = vand.u32 %v2882, 4294901760
    %v3268 = vsub.f32 %v2882, %v3267
    %v3269 = vand.u32 %v3268, 4294901760
    %3270 = vmatpush.msra.mxu0 %v3269
    %v3271 = vand.u32 %v2880, 4294901760
    %v3272 = vsub.f32 %v2880, %v3271
    %v3273 = vand.u32 %v3272, 4294901760
    %3274 = vmatpush.msra.mxu0 %v3273
    %v3275 = vand.u32 %v2878, 4294901760
    %v3276 = vsub.f32 %v2878, %v3275
    %v3277 = vand.u32 %v3276, 4294901760
    %3278 = vmatpush.msra.mxu0 %v3277
    %v3279 = vand.u32 %v1291, 4294901760
    %3280 = vmatmul.f32.gmra.mxu0 %v3279
    %v3281 = vpop.f32.mrf.mxu0
    %v3282 = vadd.f32 %v3243, %v3281
    %v3283 = vand.u32 %v1294, 4294901760
    %3284 = vmatmul.f32.gmra.mxu0 %v3283
    %v3285 = vpop.f32.mrf.mxu0
    %v3286 = vadd.f32 %v3249, %v3285
    %3287 = vdwg.mxu0
    %3288 = vmatpush.msra.mxu0 0.0
    %3289 = vmatpush.msra.mxu0 0.0
    %3290 = vmatpush.msra.mxu0 0.0
    %3291 = vmatpush.msra.mxu0 0.0
    %3292 = vmatpush.msra.mxu0 0.0
    %3293 = vmatpush.msra.mxu0 0.0
    %3294 = vmatpush.msra.mxu0 0.0
    %3295 = vmatpush.msra.mxu0 0.0
    %3296 = vmatpush.msra.mxu0 0.0
    %3297 = vmatpush.msra.mxu0 0.0
    %3298 = vmatpush.msra.mxu0 0.0
    %3299 = vmatpush.msra.mxu0 0.0
    %v3300 = vand.u32 %v2884, 4294901760
    %3301 = vmatpush.msra.mxu0 %v3300
    %v3302 = vand.u32 %v2882, 4294901760
    %3303 = vmatpush.msra.mxu0 %v3302
    %v3304 = vand.u32 %v2880, 4294901760
    %3305 = vmatpush.msra.mxu0 %v3304
    %v3306 = vand.u32 %v2878, 4294901760
    %3307 = vmatpush.msra.mxu0 %v3306
    %v3308 = vand.u32 %v1291, 4294901760
    %3309 = vmatmul.f32.gmra.mxu0 %v3308
    %v3310 = vpop.f32.mrf.mxu0
    %v3311 = vadd.f32 %v3282, %v3310
    %v3312 = vand.u32 %v1294, 4294901760
    %3313 = vmatmul.f32.gmra.mxu0 %v3312
    %v3314 = vpop.f32.mrf.mxu0
    %v3315 = vadd.f32 %v3286, %v3314
    %3316 = vdwg.mxu0
    %s3317 = scalar_lea.vmem [#allocation5], 32
    %3318 = vst [vmem:[%s3317] sm:$0xff] %v3095
    %3319 = vst [vmem:[%s3317 + $0x8] sm:$0xff] %v3311
    %3320 = vst [vmem:[%s3317 + $0x10] sm:$0xff] %v3099
    %3321 = vst [vmem:[%s3317 + $0x18] sm:$0xff] %v3315
    // Predicated region
    $region34: #{tpu_custom_call.1} parent=1 // pred_check
      _
    $region35: #{tpu_custom_call.1} parent=1 // pred_check_branch
      %3323 = sbr.rel (0) target = $region37
    $region36: #{tpu_custom_call.1} parent=1 // pred_region
      %3325 = vsyncadd [#allocation4], 0
      %s3326 = sshll.u32 [#allocation5], 4
      %s3327 = int_to_ptr.vmem [resolvable:$true] %s3326
      %s3328 = sshll.u32 %s7, 4
      %s3329 = int_to_ptr.hbm [resolvable:$true] %s3328
      %3334 = dma.vmem_to_hbm [thread:$0]  %s3327, 1024, %s3329, [#allocation4], 256, 256, 16
    $region37: #{tpu_custom_call.1} parent=1 // pred_fallthru
      _
    // Predicated region
    $region38: #{tpu_custom_call.1} parent=1 // pred_check
      _
    $region39: #{tpu_custom_call.1} parent=1 // pred_check_branch
      %3336 = sbr.rel (0) target = $region41
    $region40: #{tpu_custom_call.1} parent=1 // pred_region
      %3338 = dma.done [#allocation4], 1024
    $region41: #{tpu_custom_call.1} parent=1 // pred_fallthru
      _
    %3339 = vsyncpa [#allocation3], 1
    %3340 = vsyncpa [#allocation4], 1

</llo_original>
